<compile_context>
chip_gen: v6e
topology: v6e:2x2x1
jax: 0.10.0
libtpu: 0.0.40
codegen_flags: <defaults>
</compile_context>

<pallas_src>
import functools

import jax
import jax.numpy as jnp
from jax.experimental import pallas as pl
from jax.experimental.pallas import tpu as pltpu


_LOGITS_PAD = 128  # lane-dense classifier output width (sliced outside)


# ----------------------------------------------------------------------------
# Fused whole-forward Pallas kernel (one grid step per batch *block*)
# ----------------------------------------------------------------------------
def _bert_fwd_kernel(
    emb_ref, bias_ref,
    emb_ln_g_ref, emb_ln_b_ref,
    qkv_w_ref, qkv_b_ref,
    ow_ref, ob_ref,
    ln1_g_ref, ln1_b_ref,
    ff1_w_ref, ff1_b_ref, ff2_w_ref, ff2_b_ref,
    ln2_g_ref, ln2_b_ref,
    pool_w_ref, pool_b_ref, fc_w_ref, fc_b_ref,
    out_ref,
    *, num_layers, num_heads, head_dim, seq_len, batch_block, hidden, eps):
    f32 = jnp.float32
    H = hidden

    def mm(a, b):
        return jnp.dot(a, b, preferred_element_type=f32)

    def layernorm(x, g, b):
        mu = jnp.mean(x, axis=-1, keepdims=True)
        var = jnp.mean(jnp.square(x - mu), axis=-1, keepdims=True)
        return (x - mu) * jax.lax.rsqrt(var + eps) * g + b

    # ---- embeddings -> LayerNorm on the whole (batch_block*S, H) row slab ----
    h = layernorm(emb_ref[0], emb_ln_g_ref[...], emb_ln_b_ref[...])

    # ---- HF-style extended attention-mask bias, one row per batch element ----
    bias_blk = bias_ref[0]                                       # (Bb, S)

    def layer_body(l, h):
        # Fused Q/K/V projection: one (rows, H) @ (H, 3H) matmul.
        # The 1/sqrt(Dh) scale is already folded into the Q columns.
        qkv = mm(h, qkv_w_ref[l]) + qkv_b_ref[l]                 # (rows, 3H)

        ctx_rows = []
        for b in range(batch_block):
            r0 = b * seq_len
            bias_b = bias_blk[b:b + 1, :]                        # (1, S)
            heads = []
            for hd in range(num_heads):
                c0 = hd * head_dim
                q = qkv[r0:r0 + seq_len, c0:c0 + head_dim]                   # (S, Dh)
                k = qkv[r0:r0 + seq_len, H + c0:H + c0 + head_dim]           # (S, Dh)
                v = qkv[r0:r0 + seq_len, 2 * H + c0:2 * H + c0 + head_dim]   # (S, Dh)
                # TODO(synk): at large S pre-transpose K to (Dh, S) to avoid
                # the implicit XLU transpose in the contraction.
                s = jax.lax.dot_general(q, k, (((1,), (1,)), ((), ())),
                                        preferred_element_type=f32)          # (S, S)
                s = s + bias_b
                m = jnp.max(s, axis=-1, keepdims=True)
                p = jnp.exp(s - m)
                p = p / jnp.sum(p, axis=-1, keepdims=True)
                heads.append(mm(p, v))                                       # (S, Dh)
            ctx_rows.append(jnp.concatenate(heads, axis=-1))                 # (S, H)
        ctx = jnp.concatenate(ctx_rows, axis=0)                              # (rows, H)

        # Single full-width output projection over the whole row slab.
        attn = mm(ctx, ow_ref[l]) + ob_ref[l]                    # (rows, H)
        h = layernorm(attn + h, ln1_g_ref[l], ln1_b_ref[l])

        # Feed-forward (tanh-approx GELU), full row slab.
        ff = mm(h, ff1_w_ref[l]) + ff1_b_ref[l]                  # (rows, I)
        ff = 0.5 * ff * (1.0 + jnp.tanh(
            0.7978845608028654 * (ff + 0.044715 * ff * ff * ff)))
        ff = mm(ff, ff2_w_ref[l]) + ff2_b_ref[l]                 # (rows, H)
        h = layernorm(ff + h, ln2_g_ref[l], ln2_b_ref[l])
        return h

    h = jax.lax.fori_loop(0, num_layers, layer_body, h, unroll=True)

    # ---- pooler (tanh on each [CLS] row) + classifier, lane-padded output ----
    cls = jnp.concatenate(
        [h[b * seq_len:b * seq_len + 1, :] for b in range(batch_block)],
        axis=0)                                                  # (Bb, H)
    pooled = jnp.tanh(mm(cls, pool_w_ref[...]) + pool_b_ref[...])
    logits = mm(pooled, fc_w_ref[...]) + fc_b_ref[...]           # (Bb, 128)
    out_ref[0] = logits.astype(out_ref.dtype)


# ----------------------------------------------------------------------------
# Parameter repacking (one-time, plain-JAX glue)
# ----------------------------------------------------------------------------
def _stack_params(params, cfg):
    L, H, I = cfg["num_layers"], cfg["hidden"], cfg["intermediate"]
    Dh = cfg["head_dim"]
    C = cfg["num_classes"]
    layers = params["layers"]

    def stack(name):
        return jnp.stack([lyr[name] for lyr in layers], axis=0)

    # Fused QKV slab; fold the 1/sqrt(Dh) attention scale into Q columns.
    scale = 1.0 / (Dh ** 0.5)
    qkv_w = jnp.concatenate(
        [stack("q_w") * scale, stack("k_w"), stack("v_w")], axis=-1)      # (L,H,3H)
    qkv_b = jnp.concatenate(
        [stack("q_b") * scale, stack("k_b"), stack("v_b")], axis=-1)      # (L,3H)
    qkv_b = qkv_b.reshape(L, 1, 3 * H)

    fc_w_pad = jnp.zeros((H, _LOGITS_PAD), jnp.float32).at[:, :C].set(params["fc_w"])
    fc_b_pad = jnp.zeros((1, _LOGITS_PAD), jnp.float32).at[0, :C].set(params["fc_b"])

    return (
        params["emb_ln_g"].reshape(1, H), params["emb_ln_b"].reshape(1, H),
        qkv_w, qkv_b,
        stack("o_w"), stack("o_b").reshape(L, 1, H),
        stack("ln1_g").reshape(L, 1, H), stack("ln1_b").reshape(L, 1, H),
        stack("ff1_w"), stack("ff1_b").reshape(L, 1, I),
        stack("ff2_w"), stack("ff2_b").reshape(L, 1, H),
        stack("ln2_g").reshape(L, 1, H), stack("ln2_b").reshape(L, 1, H),
        params["pool_w"], params["pool_b"].reshape(1, H),
        fc_w_pad, fc_b_pad,
    )


# ----------------------------------------------------------------------------
# Forward pass (BERTClassifier.forward, eval mode: dropout = identity)
# ----------------------------------------------------------------------------
def bert_classifier_forward(params, input_ids, attention_mask, cfg,
                            batch_block=None):
    B, S = input_ids.shape
    H = cfg["hidden"]
    nH, Dh = cfg["num_heads"], cfg["head_dim"]
    L = cfg["num_layers"]
    C = cfg["num_classes"]

    # Fold as many batch elements as give ~128 rows per block (full MXU M tile);
    # the resulting grid axis is "parallel" so blocks shard across v7x's 2 TCs.
    if batch_block is None:
        batch_block = min(B, max(1, 128 // S))
        while B % batch_block:
            batch_block -= 1
    num_blocks = B // batch_block

    # embedding gather + sum (plain-JAX glue; LayerNorm runs in-kernel)
    word = jnp.take(params["word_emb"], input_ids, axis=0)               # (B,S,H)
    pos = params["pos_emb"][:S][None, :, :]
    typ = params["type_emb"][0][None, None, :]
    emb = (word + pos + typ).astype(jnp.float32)                         # (B,S,H)
    emb = emb.reshape(num_blocks, batch_block * S, H)

    # additive attention-mask bias, one row per batch element
    bias = (1.0 - attention_mask.astype(jnp.float32)) * (-10000.0)       # (B,S)
    bias = bias.reshape(num_blocks, batch_block, S)

    weights = _stack_params(params, cfg)

    kernel = functools.partial(
        _bert_fwd_kernel,
        num_layers=L, num_heads=nH, head_dim=Dh, seq_len=S,
        batch_block=batch_block, hidden=H, eps=1e-12)

    def _const_spec(shape):
        nd = len(shape)
        return pl.BlockSpec(tuple(shape), lambda i, _nd=nd: (0,) * _nd)

    in_specs = [
        pl.BlockSpec((1, batch_block * S, H), lambda i: (i, 0, 0)),      # emb slab
        pl.BlockSpec((1, batch_block, S), lambda i: (i, 0, 0)),          # mask bias
    ] + [_const_spec(w.shape) for w in weights]

    logits_pad = pl.pallas_call(
        kernel,
        out_shape=jax.ShapeDtypeStruct((num_blocks, batch_block, _LOGITS_PAD),
                                       jnp.float32),
        grid=(num_blocks,),
        in_specs=in_specs,
        out_specs=pl.BlockSpec((1, batch_block, _LOGITS_PAD),
                               lambda i: (i, 0, 0)),
        compiler_params=pltpu.CompilerParams(
            dimension_semantics=("parallel",),
            vmem_limit_bytes=32 * 1024 * 1024),
    )(emb, bias, *weights)

    return logits_pad.reshape(B, _LOGITS_PAD)[:, :C]                     # (B, C)


# ----------------------------------------------------------------------------
# Mini-BERT config + deterministic parameter init
# ----------------------------------------------------------------------------
CFG = dict(
    vocab_size=100,
    max_pos=16,
    type_vocab=2,
    hidden=32,
    num_heads=2,
    head_dim=16,
    intermediate=64,
    num_layers=2,
    num_classes=2,
)


def init_params(key, cfg):
    H, I = cfg["hidden"], cfg["intermediate"]
    std = 0.02

    def nrm(k, shape):
        return std * jax.random.normal(k, shape, dtype=jnp.float32)

    keys = iter(jax.random.split(key, 200))
    p = {
        "word_emb": nrm(next(keys), (cfg["vocab_size"], H)),
        "pos_emb": nrm(next(keys), (cfg["max_pos"], H)),
        "type_emb": nrm(next(keys), (cfg["type_vocab"], H)),
        "emb_ln_g": jnp.ones((H,), jnp.float32),
        "emb_ln_b": jnp.zeros((H,), jnp.float32),
        "layers": [],
        "pool_w": nrm(next(keys), (H, H)),
        "pool_b": jnp.zeros((H,), jnp.float32),
        "fc_w": nrm(next(keys), (H, cfg["num_classes"])),
        "fc_b": jnp.zeros((cfg["num_classes"],), jnp.float32),
    }
    for _ in range(cfg["num_layers"]):
        lyr = {
            "q_w": nrm(next(keys), (H, H)), "q_b": jnp.zeros((H,), jnp.float32),
            "k_w": nrm(next(keys), (H, H)), "k_b": jnp.zeros((H,), jnp.float32),
            "v_w": nrm(next(keys), (H, H)), "v_b": jnp.zeros((H,), jnp.float32),
            "o_w": nrm(next(keys), (H, H)), "o_b": jnp.zeros((H,), jnp.float32),
            "ln1_g": jnp.ones((H,), jnp.float32), "ln1_b": jnp.zeros((H,), jnp.float32),
            "ff1_w": nrm(next(keys), (H, I)), "ff1_b": jnp.zeros((I,), jnp.float32),
            "ff2_w": nrm(next(keys), (I, H)), "ff2_b": jnp.zeros((H,), jnp.float32),
            "ln2_g": jnp.ones((H,), jnp.float32), "ln2_b": jnp.zeros((H,), jnp.float32),
        }
        p["layers"].append(lyr)
    return p


# ----------------------------------------------------------------------------
# Pure-JAX reference (sanity check)
# ----------------------------------------------------------------------------
def _ref_forward(params, input_ids, attention_mask, cfg):
    B, S = input_ids.shape
    H, nH, Dh = cfg["hidden"], cfg["num_heads"], cfg["head_dim"]
    hp = jax.lax.Precision.HIGHEST

    def ln(x, g, b):
        m = jnp.mean(x, -1, keepdims=True)
        v = jnp.mean((x - m) ** 2, -1, keepdims=True)
        return (x - m) * jax.lax.rsqrt(v + 1e-12) * g + b

    word = jnp.take(params["word_emb"], input_ids, axis=0)
    emb = word + params["pos_emb"][:S][None] + params["type_emb"][0][None, None]
    h = ln(emb, params["emb_ln_g"], params["emb_ln_b"])
    bias = ((1.0 - attention_mask.astype(jnp.float32)) * -10000.0)[:, None, None, :]

    for lyr in params["layers"]:
        def proj(x, w, b):
            return jnp.einsum("bsh,hk->bsk", x, w, precision=hp) + b
        q = proj(h, lyr["q_w"], lyr["q_b"]).reshape(B, S, nH, Dh).transpose(0, 2, 1, 3)
        k = proj(h, lyr["k_w"], lyr["k_b"]).reshape(B, S, nH, Dh).transpose(0, 2, 1, 3)
        v = proj(h, lyr["v_w"], lyr["v_b"]).reshape(B, S, nH, Dh).transpose(0, 2, 1, 3)
        s = jnp.einsum("bhqd,bhkd->bhqk", q, k, precision=hp) / (Dh ** 0.5) + bias
        p = jax.nn.softmax(s, axis=-1)
        ctx = jnp.einsum("bhqk,bhkd->bhqd", p, v, precision=hp)
        ctx = ctx.transpose(0, 2, 1, 3).reshape(B, S, H)
        attn = proj(ctx, lyr["o_w"], lyr["o_b"])
        h = ln(attn + h, lyr["ln1_g"], lyr["ln1_b"])
        ff = proj(h, lyr["ff1_w"], lyr["ff1_b"])
        ff = 0.5 * ff * (1.0 + jnp.tanh(0.7978845608028654 * (ff + 0.044715 * ff ** 3)))
        ff = proj(ff, lyr["ff2_w"], lyr["ff2_b"])
        h = ln(ff + h, lyr["ln2_g"], lyr["ln2_b"])

    pooled = jnp.tanh(h[:, 0, :] @ params["pool_w"] + params["pool_b"])
    return pooled @ params["fc_w"] + params["fc_b"]


# ----------------------------------------------------------------------------
if __name__ == "__main__":
    key = jax.random.PRNGKey(0)
    kp, kid = jax.random.split(key)
    params = init_params(kp, CFG)

    B, S = 2, 8
    input_ids = jax.random.randint(kid, (B, S), 0, CFG["vocab_size"], dtype=jnp.int32)
    attention_mask = jnp.array([[1] * S, [1] * (S - 3) + [0] * 3], dtype=jnp.int32)

    logits = bert_classifier_forward(params, input_ids, attention_mask, CFG)
    logits = jax.block_until_ready(logits)

    ref = _ref_forward(params, input_ids, attention_mask, CFG)
    assert logits.shape == (B, CFG["num_classes"])
    assert jnp.allclose(logits, ref, atol=2e-2, rtol=2e-2), (logits, ref)

    print("KERNEL_OK")
</pallas_src>

<mosaic_0001>
module attributes {stable_mosaic.version = 11 : i64} {
  func.func @_bert_fwd_kernel(%arg0: i32, %arg1: memref<1x16x32xf32, #tpu.memory_space<vmem>>, %arg2: memref<1x2x8xf32, #tpu.memory_space<vmem>>, %arg3: memref<1x32xf32, #tpu.memory_space<vmem>>, %arg4: memref<1x32xf32, #tpu.memory_space<vmem>>, %arg5: memref<2x32x96xf32, #tpu.memory_space<vmem>>, %arg6: memref<2x1x96xf32, #tpu.memory_space<vmem>>, %arg7: memref<2x32x32xf32, #tpu.memory_space<vmem>>, %arg8: memref<2x1x32xf32, #tpu.memory_space<vmem>>, %arg9: memref<2x1x32xf32, #tpu.memory_space<vmem>>, %arg10: memref<2x1x32xf32, #tpu.memory_space<vmem>>, %arg11: memref<2x32x64xf32, #tpu.memory_space<vmem>>, %arg12: memref<2x1x64xf32, #tpu.memory_space<vmem>>, %arg13: memref<2x64x32xf32, #tpu.memory_space<vmem>>, %arg14: memref<2x1x32xf32, #tpu.memory_space<vmem>>, %arg15: memref<2x1x32xf32, #tpu.memory_space<vmem>>, %arg16: memref<2x1x32xf32, #tpu.memory_space<vmem>>, %arg17: memref<32x32xf32, #tpu.memory_space<vmem>>, %arg18: memref<1x32xf32, #tpu.memory_space<vmem>>, %arg19: memref<32x128xf32, #tpu.memory_space<vmem>>, %arg20: memref<1x128xf32, #tpu.memory_space<vmem>>, %arg21: memref<1x2x128xf32, #tpu.memory_space<vmem>>) attributes {dimension_semantics = [#tpu.dimension_semantics<parallel>], iteration_bounds = array<i64: 1>, scalar_prefetch = 0 : i64, scratch_operands = 0 : i64, tpu.core_type = #tpu.core_type<tc>, window_params = [{transform_indices = @transform_0, window_bounds = array<i64: 1, 16, 32>}, {transform_indices = @transform_1, window_bounds = array<i64: 1, 2, 8>}, {pipeline_mode = #tpu.pipeline_mode<synchronous>, transform_indices = @transform_2, window_bounds = array<i64: 1, 32>}, {pipeline_mode = #tpu.pipeline_mode<synchronous>, transform_indices = @transform_3, window_bounds = array<i64: 1, 32>}, {pipeline_mode = #tpu.pipeline_mode<synchronous>, transform_indices = @transform_4, window_bounds = array<i64: 2, 32, 96>}, {pipeline_mode = #tpu.pipeline_mode<synchronous>, transform_indices = @transform_5, window_bounds = array<i64: 2, 1, 96>}, {pipeline_mode = #tpu.pipeline_mode<synchronous>, transform_indices = @transform_6, window_bounds = array<i64: 2, 32, 32>}, {pipeline_mode = #tpu.pipeline_mode<synchronous>, transform_indices = @transform_7, window_bounds = array<i64: 2, 1, 32>}, {pipeline_mode = #tpu.pipeline_mode<synchronous>, transform_indices = @transform_8, window_bounds = array<i64: 2, 1, 32>}, {pipeline_mode = #tpu.pipeline_mode<synchronous>, transform_indices = @transform_9, window_bounds = array<i64: 2, 1, 32>}, {pipeline_mode = #tpu.pipeline_mode<synchronous>, transform_indices = @transform_10, window_bounds = array<i64: 2, 32, 64>}, {pipeline_mode = #tpu.pipeline_mode<synchronous>, transform_indices = @transform_11, window_bounds = array<i64: 2, 1, 64>}, {pipeline_mode = #tpu.pipeline_mode<synchronous>, transform_indices = @transform_12, window_bounds = array<i64: 2, 64, 32>}, {pipeline_mode = #tpu.pipeline_mode<synchronous>, transform_indices = @transform_13, window_bounds = array<i64: 2, 1, 32>}, {pipeline_mode = #tpu.pipeline_mode<synchronous>, transform_indices = @transform_14, window_bounds = array<i64: 2, 1, 32>}, {pipeline_mode = #tpu.pipeline_mode<synchronous>, transform_indices = @transform_15, window_bounds = array<i64: 2, 1, 32>}, {pipeline_mode = #tpu.pipeline_mode<synchronous>, transform_indices = @transform_16, window_bounds = array<i64: 32, 32>}, {pipeline_mode = #tpu.pipeline_mode<synchronous>, transform_indices = @transform_17, window_bounds = array<i64: 1, 32>}, {pipeline_mode = #tpu.pipeline_mode<synchronous>, transform_indices = @transform_18, window_bounds = array<i64: 32, 128>}, {pipeline_mode = #tpu.pipeline_mode<synchronous>, transform_indices = @transform_19, window_bounds = array<i64: 1, 128>}, {transform_indices = @transform_20, window_bounds = array<i64: 1, 2, 128>}]} {
    %c0 = arith.constant 0 : index
    %c0_0 = arith.constant 0 : index
    %c0_1 = arith.constant 0 : index
    %0 = vector.load %arg1[%c0, %c0_0, %c0_1] : memref<1x16x32xf32, #tpu.memory_space<vmem>>, vector<1x16x32xf32>
    %1 = vector.shape_cast %0 : vector<1x16x32xf32> to vector<16x32xf32>
    %c0_2 = arith.constant 0 : index
    %c0_3 = arith.constant 0 : index
    %2 = vector.load %arg3[%c0_2, %c0_3] : memref<1x32xf32, #tpu.memory_space<vmem>>, vector<1x32xf32>
    %c0_4 = arith.constant 0 : index
    %c0_5 = arith.constant 0 : index
    %3 = vector.load %arg4[%c0_4, %c0_5] : memref<1x32xf32, #tpu.memory_space<vmem>>, vector<1x32xf32>
    %cst = arith.constant dense<0.000000e+00> : vector<16xf32>
    %4 = vector.multi_reduction <add>, %1, %cst [1] : vector<16x32xf32> to vector<16xf32>
    %5 = vector.shape_cast %4 : vector<16xf32> to vector<16x1xf32>
    %cst_6 = arith.constant 3.200000e+01 : f32
    %6 = vector.broadcast %cst_6 : f32 to vector<16x1xf32>
    %7 = arith.divf %5, %6 : vector<16x1xf32>
    %8 = vector.broadcast %7 : vector<16x1xf32> to vector<16x32xf32>
    %9 = arith.subf %1, %8 : vector<16x32xf32>
    %10 = arith.mulf %9, %9 : vector<16x32xf32>
    %cst_7 = arith.constant dense<0.000000e+00> : vector<16xf32>
    %11 = vector.multi_reduction <add>, %10, %cst_7 [1] : vector<16x32xf32> to vector<16xf32>
    %12 = vector.shape_cast %11 : vector<16xf32> to vector<16x1xf32>
    %cst_8 = arith.constant 3.200000e+01 : f32
    %13 = vector.broadcast %cst_8 : f32 to vector<16x1xf32>
    %14 = arith.divf %12, %13 : vector<16x1xf32>
    %15 = vector.broadcast %7 : vector<16x1xf32> to vector<16x32xf32>
    %16 = arith.subf %1, %15 : vector<16x32xf32>
    %cst_9 = arith.constant 9.99999996E-13 : f32
    %17 = vector.broadcast %cst_9 : f32 to vector<16x1xf32>
    %18 = arith.addf %14, %17 : vector<16x1xf32>
    %19 = math.rsqrt %18 : vector<16x1xf32>
    %20 = vector.broadcast %19 : vector<16x1xf32> to vector<16x32xf32>
    %21 = arith.mulf %16, %20 : vector<16x32xf32>
    %22 = vector.broadcast %2 : vector<1x32xf32> to vector<16x32xf32>
    %23 = arith.mulf %21, %22 : vector<16x32xf32>
    %24 = vector.broadcast %3 : vector<1x32xf32> to vector<16x32xf32>
    %25 = arith.addf %23, %24 : vector<16x32xf32>
    %c0_10 = arith.constant 0 : index
    %c0_11 = arith.constant 0 : index
    %c0_12 = arith.constant 0 : index
    %26 = vector.load %arg2[%c0_10, %c0_11, %c0_12] : memref<1x2x8xf32, #tpu.memory_space<vmem>>, vector<1x2x8xf32>
    %27 = vector.shape_cast %26 : vector<1x2x8xf32> to vector<2x8xf32>
    %c0_i32 = arith.constant 0 : i32
    %28 = arith.index_cast %c0_i32 : i32 to index
    %c0_13 = arith.constant 0 : index
    %c0_14 = arith.constant 0 : index
    %29 = vector.load %arg5[%28, %c0_13, %c0_14] : memref<2x32x96xf32, #tpu.memory_space<vmem>>, vector<1x32x96xf32>
    %30 = vector.shape_cast %29 : vector<1x32x96xf32> to vector<32x96xf32>
    %cst_15 = arith.constant dense<0.000000e+00> : vector<16x96xf32>
    %31 = tpu.matmul %25, %30, %cst_15 {dimension_numbers = #tpu.dot_dimension_numbers<[1], [0], [0], [1], [0, 0, 1, 1], [], []>} : vector<16x32xf32>, vector<32x96xf32>, vector<16x96xf32> -> vector<16x96xf32>
    %32 = arith.index_cast %c0_i32 : i32 to index
    %c0_16 = arith.constant 0 : index
    %c0_17 = arith.constant 0 : index
    %33 = vector.load %arg6[%32, %c0_16, %c0_17] : memref<2x1x96xf32, #tpu.memory_space<vmem>>, vector<1x1x96xf32>
    %34 = vector.shape_cast %33 : vector<1x1x96xf32> to vector<1x96xf32>
    %35 = vector.broadcast %34 : vector<1x96xf32> to vector<16x96xf32>
    %36 = arith.addf %31, %35 : vector<16x96xf32>
    %37 = vector.extract_strided_slice %27 {offsets = [0, 0], sizes = [1, 8], strides = [1, 1]} : vector<2x8xf32> to vector<1x8xf32>
    %38 = vector.extract_strided_slice %36 {offsets = [0, 0], sizes = [8, 16], strides = [1, 1]} : vector<16x96xf32> to vector<8x16xf32>
    %39 = vector.extract_strided_slice %36 {offsets = [0, 32], sizes = [8, 16], strides = [1, 1]} : vector<16x96xf32> to vector<8x16xf32>
    %40 = vector.extract_strided_slice %36 {offsets = [0, 64], sizes = [8, 16], strides = [1, 1]} : vector<16x96xf32> to vector<8x16xf32>
    %cst_18 = arith.constant dense<0.000000e+00> : vector<8x8xf32>
    %41 = tpu.matmul %38, %39, %cst_18 {dimension_numbers = #tpu.dot_dimension_numbers<[1], [1], [0], [0], [0, 0, 1, 0], [], []>} : vector<8x16xf32>, vector<8x16xf32>, vector<8x8xf32> -> vector<8x8xf32>
    %42 = vector.broadcast %37 : vector<1x8xf32> to vector<8x8xf32>
    %43 = arith.addf %41, %42 : vector<8x8xf32>
    %cst_19 = arith.constant dense<0xFF800000> : vector<8xf32>
    %44 = vector.multi_reduction <maximumf>, %43, %cst_19 [1] : vector<8x8xf32> to vector<8xf32>
    %45 = vector.shape_cast %44 : vector<8xf32> to vector<8x1xf32>
    %46 = vector.broadcast %45 : vector<8x1xf32> to vector<8x8xf32>
    %47 = arith.subf %43, %46 : vector<8x8xf32>
    %48 = math.exp %47 : vector<8x8xf32>
    %cst_20 = arith.constant dense<0.000000e+00> : vector<8xf32>
    %49 = vector.multi_reduction <add>, %48, %cst_20 [1] : vector<8x8xf32> to vector<8xf32>
    %50 = vector.shape_cast %49 : vector<8xf32> to vector<8x1xf32>
    %51 = vector.broadcast %50 : vector<8x1xf32> to vector<8x8xf32>
    %52 = arith.divf %48, %51 : vector<8x8xf32>
    %cst_21 = arith.constant dense<0.000000e+00> : vector<8x16xf32>
    %53 = tpu.matmul %52, %40, %cst_21 {dimension_numbers = #tpu.dot_dimension_numbers<[1], [0], [0], [1], [0, 0, 1, 1], [], []>} : vector<8x8xf32>, vector<8x16xf32>, vector<8x16xf32> -> vector<8x16xf32>
    %54 = vector.extract_strided_slice %36 {offsets = [0, 16], sizes = [8, 16], strides = [1, 1]} : vector<16x96xf32> to vector<8x16xf32>
    %55 = vector.extract_strided_slice %36 {offsets = [0, 48], sizes = [8, 16], strides = [1, 1]} : vector<16x96xf32> to vector<8x16xf32>
    %56 = vector.extract_strided_slice %36 {offsets = [0, 80], sizes = [8, 16], strides = [1, 1]} : vector<16x96xf32> to vector<8x16xf32>
    %cst_22 = arith.constant dense<0.000000e+00> : vector<8x8xf32>
    %57 = tpu.matmul %54, %55, %cst_22 {dimension_numbers = #tpu.dot_dimension_numbers<[1], [1], [0], [0], [0, 0, 1, 0], [], []>} : vector<8x16xf32>, vector<8x16xf32>, vector<8x8xf32> -> vector<8x8xf32>
    %58 = vector.broadcast %37 : vector<1x8xf32> to vector<8x8xf32>
    %59 = arith.addf %57, %58 : vector<8x8xf32>
    %cst_23 = arith.constant dense<0xFF800000> : vector<8xf32>
    %60 = vector.multi_reduction <maximumf>, %59, %cst_23 [1] : vector<8x8xf32> to vector<8xf32>
    %61 = vector.shape_cast %60 : vector<8xf32> to vector<8x1xf32>
    %62 = vector.broadcast %61 : vector<8x1xf32> to vector<8x8xf32>
    %63 = arith.subf %59, %62 : vector<8x8xf32>
    %64 = math.exp %63 : vector<8x8xf32>
    %cst_24 = arith.constant dense<0.000000e+00> : vector<8xf32>
    %65 = vector.multi_reduction <add>, %64, %cst_24 [1] : vector<8x8xf32> to vector<8xf32>
    %66 = vector.shape_cast %65 : vector<8xf32> to vector<8x1xf32>
    %67 = vector.broadcast %66 : vector<8x1xf32> to vector<8x8xf32>
    %68 = arith.divf %64, %67 : vector<8x8xf32>
    %cst_25 = arith.constant dense<0.000000e+00> : vector<8x16xf32>
    %69 = tpu.matmul %68, %56, %cst_25 {dimension_numbers = #tpu.dot_dimension_numbers<[1], [0], [0], [1], [0, 0, 1, 1], [], []>} : vector<8x8xf32>, vector<8x16xf32>, vector<8x16xf32> -> vector<8x16xf32>
    %70 = tpu.concatenate %53, %69 in 1 : vector<8x16xf32>, vector<8x16xf32> -> vector<8x32xf32>
    %71 = vector.extract_strided_slice %27 {offsets = [1, 0], sizes = [1, 8], strides = [1, 1]} : vector<2x8xf32> to vector<1x8xf32>
    %72 = vector.extract_strided_slice %36 {offsets = [8, 0], sizes = [8, 16], strides = [1, 1]} : vector<16x96xf32> to vector<8x16xf32>
    %73 = vector.extract_strided_slice %36 {offsets = [8, 32], sizes = [8, 16], strides = [1, 1]} : vector<16x96xf32> to vector<8x16xf32>
    %74 = vector.extract_strided_slice %36 {offsets = [8, 64], sizes = [8, 16], strides = [1, 1]} : vector<16x96xf32> to vector<8x16xf32>
    %cst_26 = arith.constant dense<0.000000e+00> : vector<8x8xf32>
    %75 = tpu.matmul %72, %73, %cst_26 {dimension_numbers = #tpu.dot_dimension_numbers<[1], [1], [0], [0], [0, 0, 1, 0], [], []>} : vector<8x16xf32>, vector<8x16xf32>, vector<8x8xf32> -> vector<8x8xf32>
    %76 = vector.broadcast %71 : vector<1x8xf32> to vector<8x8xf32>
    %77 = arith.addf %75, %76 : vector<8x8xf32>
    %cst_27 = arith.constant dense<0xFF800000> : vector<8xf32>
    %78 = vector.multi_reduction <maximumf>, %77, %cst_27 [1] : vector<8x8xf32> to vector<8xf32>
    %79 = vector.shape_cast %78 : vector<8xf32> to vector<8x1xf32>
    %80 = vector.broadcast %79 : vector<8x1xf32> to vector<8x8xf32>
    %81 = arith.subf %77, %80 : vector<8x8xf32>
    %82 = math.exp %81 : vector<8x8xf32>
    %cst_28 = arith.constant dense<0.000000e+00> : vector<8xf32>
    %83 = vector.multi_reduction <add>, %82, %cst_28 [1] : vector<8x8xf32> to vector<8xf32>
    %84 = vector.shape_cast %83 : vector<8xf32> to vector<8x1xf32>
    %85 = vector.broadcast %84 : vector<8x1xf32> to vector<8x8xf32>
    %86 = arith.divf %82, %85 : vector<8x8xf32>
    %cst_29 = arith.constant dense<0.000000e+00> : vector<8x16xf32>
    %87 = tpu.matmul %86, %74, %cst_29 {dimension_numbers = #tpu.dot_dimension_numbers<[1], [0], [0], [1], [0, 0, 1, 1], [], []>} : vector<8x8xf32>, vector<8x16xf32>, vector<8x16xf32> -> vector<8x16xf32>
    %88 = vector.extract_strided_slice %36 {offsets = [8, 16], sizes = [8, 16], strides = [1, 1]} : vector<16x96xf32> to vector<8x16xf32>
    %89 = vector.extract_strided_slice %36 {offsets = [8, 48], sizes = [8, 16], strides = [1, 1]} : vector<16x96xf32> to vector<8x16xf32>
    %90 = vector.extract_strided_slice %36 {offsets = [8, 80], sizes = [8, 16], strides = [1, 1]} : vector<16x96xf32> to vector<8x16xf32>
    %cst_30 = arith.constant dense<0.000000e+00> : vector<8x8xf32>
    %91 = tpu.matmul %88, %89, %cst_30 {dimension_numbers = #tpu.dot_dimension_numbers<[1], [1], [0], [0], [0, 0, 1, 0], [], []>} : vector<8x16xf32>, vector<8x16xf32>, vector<8x8xf32> -> vector<8x8xf32>
    %92 = vector.broadcast %71 : vector<1x8xf32> to vector<8x8xf32>
    %93 = arith.addf %91, %92 : vector<8x8xf32>
    %cst_31 = arith.constant dense<0xFF800000> : vector<8xf32>
    %94 = vector.multi_reduction <maximumf>, %93, %cst_31 [1] : vector<8x8xf32> to vector<8xf32>
    %95 = vector.shape_cast %94 : vector<8xf32> to vector<8x1xf32>
    %96 = vector.broadcast %95 : vector<8x1xf32> to vector<8x8xf32>
    %97 = arith.subf %93, %96 : vector<8x8xf32>
    %98 = math.exp %97 : vector<8x8xf32>
    %cst_32 = arith.constant dense<0.000000e+00> : vector<8xf32>
    %99 = vector.multi_reduction <add>, %98, %cst_32 [1] : vector<8x8xf32> to vector<8xf32>
    %100 = vector.shape_cast %99 : vector<8xf32> to vector<8x1xf32>
    %101 = vector.broadcast %100 : vector<8x1xf32> to vector<8x8xf32>
    %102 = arith.divf %98, %101 : vector<8x8xf32>
    %cst_33 = arith.constant dense<0.000000e+00> : vector<8x16xf32>
    %103 = tpu.matmul %102, %90, %cst_33 {dimension_numbers = #tpu.dot_dimension_numbers<[1], [0], [0], [1], [0, 0, 1, 1], [], []>} : vector<8x8xf32>, vector<8x16xf32>, vector<8x16xf32> -> vector<8x16xf32>
    %104 = tpu.concatenate %87, %103 in 1 : vector<8x16xf32>, vector<8x16xf32> -> vector<8x32xf32>
    %105 = tpu.concatenate %70, %104 in 0 : vector<8x32xf32>, vector<8x32xf32> -> vector<16x32xf32>
    %106 = arith.index_cast %c0_i32 : i32 to index
    %c0_34 = arith.constant 0 : index
    %c0_35 = arith.constant 0 : index
    %107 = vector.load %arg7[%106, %c0_34, %c0_35] : memref<2x32x32xf32, #tpu.memory_space<vmem>>, vector<1x32x32xf32>
    %108 = vector.shape_cast %107 : vector<1x32x32xf32> to vector<32x32xf32>
    %cst_36 = arith.constant dense<0.000000e+00> : vector<16x32xf32>
    %109 = tpu.matmul %105, %108, %cst_36 {dimension_numbers = #tpu.dot_dimension_numbers<[1], [0], [0], [1], [0, 0, 1, 1], [], []>} : vector<16x32xf32>, vector<32x32xf32>, vector<16x32xf32> -> vector<16x32xf32>
    %110 = arith.index_cast %c0_i32 : i32 to index
    %c0_37 = arith.constant 0 : index
    %c0_38 = arith.constant 0 : index
    %111 = vector.load %arg8[%110, %c0_37, %c0_38] : memref<2x1x32xf32, #tpu.memory_space<vmem>>, vector<1x1x32xf32>
    %112 = vector.shape_cast %111 : vector<1x1x32xf32> to vector<1x32xf32>
    %113 = vector.broadcast %112 : vector<1x32xf32> to vector<16x32xf32>
    %114 = arith.addf %109, %113 : vector<16x32xf32>
    %115 = arith.addf %114, %25 : vector<16x32xf32>
    %116 = arith.index_cast %c0_i32 : i32 to index
    %c0_39 = arith.constant 0 : index
    %c0_40 = arith.constant 0 : index
    %117 = vector.load %arg9[%116, %c0_39, %c0_40] : memref<2x1x32xf32, #tpu.memory_space<vmem>>, vector<1x1x32xf32>
    %118 = vector.shape_cast %117 : vector<1x1x32xf32> to vector<1x32xf32>
    %119 = arith.index_cast %c0_i32 : i32 to index
    %c0_41 = arith.constant 0 : index
    %c0_42 = arith.constant 0 : index
    %120 = vector.load %arg10[%119, %c0_41, %c0_42] : memref<2x1x32xf32, #tpu.memory_space<vmem>>, vector<1x1x32xf32>
    %121 = vector.shape_cast %120 : vector<1x1x32xf32> to vector<1x32xf32>
    %cst_43 = arith.constant dense<0.000000e+00> : vector<16xf32>
    %122 = vector.multi_reduction <add>, %115, %cst_43 [1] : vector<16x32xf32> to vector<16xf32>
    %123 = vector.shape_cast %122 : vector<16xf32> to vector<16x1xf32>
    %cst_44 = arith.constant 3.200000e+01 : f32
    %124 = vector.broadcast %cst_44 : f32 to vector<16x1xf32>
    %125 = arith.divf %123, %124 : vector<16x1xf32>
    %126 = vector.broadcast %125 : vector<16x1xf32> to vector<16x32xf32>
    %127 = arith.subf %115, %126 : vector<16x32xf32>
    %128 = arith.mulf %127, %127 : vector<16x32xf32>
    %cst_45 = arith.constant dense<0.000000e+00> : vector<16xf32>
    %129 = vector.multi_reduction <add>, %128, %cst_45 [1] : vector<16x32xf32> to vector<16xf32>
    %130 = vector.shape_cast %129 : vector<16xf32> to vector<16x1xf32>
    %cst_46 = arith.constant 3.200000e+01 : f32
    %131 = vector.broadcast %cst_46 : f32 to vector<16x1xf32>
    %132 = arith.divf %130, %131 : vector<16x1xf32>
    %133 = vector.broadcast %125 : vector<16x1xf32> to vector<16x32xf32>
    %134 = arith.subf %115, %133 : vector<16x32xf32>
    %cst_47 = arith.constant 9.99999996E-13 : f32
    %135 = vector.broadcast %cst_47 : f32 to vector<16x1xf32>
    %136 = arith.addf %132, %135 : vector<16x1xf32>
    %137 = math.rsqrt %136 : vector<16x1xf32>
    %138 = vector.broadcast %137 : vector<16x1xf32> to vector<16x32xf32>
    %139 = arith.mulf %134, %138 : vector<16x32xf32>
    %140 = vector.broadcast %118 : vector<1x32xf32> to vector<16x32xf32>
    %141 = arith.mulf %139, %140 : vector<16x32xf32>
    %142 = vector.broadcast %121 : vector<1x32xf32> to vector<16x32xf32>
    %143 = arith.addf %141, %142 : vector<16x32xf32>
    %144 = arith.index_cast %c0_i32 : i32 to index
    %c0_48 = arith.constant 0 : index
    %c0_49 = arith.constant 0 : index
    %145 = vector.load %arg11[%144, %c0_48, %c0_49] : memref<2x32x64xf32, #tpu.memory_space<vmem>>, vector<1x32x64xf32>
    %146 = vector.shape_cast %145 : vector<1x32x64xf32> to vector<32x64xf32>
    %cst_50 = arith.constant dense<0.000000e+00> : vector<16x64xf32>
    %147 = tpu.matmul %143, %146, %cst_50 {dimension_numbers = #tpu.dot_dimension_numbers<[1], [0], [0], [1], [0, 0, 1, 1], [], []>} : vector<16x32xf32>, vector<32x64xf32>, vector<16x64xf32> -> vector<16x64xf32>
    %148 = arith.index_cast %c0_i32 : i32 to index
    %c0_51 = arith.constant 0 : index
    %c0_52 = arith.constant 0 : index
    %149 = vector.load %arg12[%148, %c0_51, %c0_52] : memref<2x1x64xf32, #tpu.memory_space<vmem>>, vector<1x1x64xf32>
    %150 = vector.shape_cast %149 : vector<1x1x64xf32> to vector<1x64xf32>
    %151 = vector.broadcast %150 : vector<1x64xf32> to vector<16x64xf32>
    %152 = arith.addf %147, %151 : vector<16x64xf32>
    %cst_53 = arith.constant 5.000000e-01 : f32
    %153 = vector.broadcast %cst_53 : f32 to vector<16x64xf32>
    %154 = arith.mulf %153, %152 : vector<16x64xf32>
    %cst_54 = arith.constant 4.471500e-02 : f32
    %155 = vector.broadcast %cst_54 : f32 to vector<16x64xf32>
    %156 = arith.mulf %155, %152 : vector<16x64xf32>
    %157 = arith.mulf %156, %152 : vector<16x64xf32>
    %158 = arith.mulf %157, %152 : vector<16x64xf32>
    %159 = arith.addf %152, %158 : vector<16x64xf32>
    %cst_55 = arith.constant 0.797884583 : f32
    %160 = vector.broadcast %cst_55 : f32 to vector<16x64xf32>
    %161 = arith.mulf %160, %159 : vector<16x64xf32>
    %162 = math.tanh %161 : vector<16x64xf32>
    %cst_56 = arith.constant 1.000000e+00 : f32
    %163 = vector.broadcast %cst_56 : f32 to vector<16x64xf32>
    %164 = arith.addf %163, %162 : vector<16x64xf32>
    %165 = arith.mulf %154, %164 : vector<16x64xf32>
    %166 = arith.index_cast %c0_i32 : i32 to index
    %c0_57 = arith.constant 0 : index
    %c0_58 = arith.constant 0 : index
    %167 = vector.load %arg13[%166, %c0_57, %c0_58] : memref<2x64x32xf32, #tpu.memory_space<vmem>>, vector<1x64x32xf32>
    %168 = vector.shape_cast %167 : vector<1x64x32xf32> to vector<64x32xf32>
    %cst_59 = arith.constant dense<0.000000e+00> : vector<16x32xf32>
    %169 = tpu.matmul %165, %168, %cst_59 {dimension_numbers = #tpu.dot_dimension_numbers<[1], [0], [0], [1], [0, 0, 1, 1], [], []>} : vector<16x64xf32>, vector<64x32xf32>, vector<16x32xf32> -> vector<16x32xf32>
    %170 = arith.index_cast %c0_i32 : i32 to index
    %c0_60 = arith.constant 0 : index
    %c0_61 = arith.constant 0 : index
    %171 = vector.load %arg14[%170, %c0_60, %c0_61] : memref<2x1x32xf32, #tpu.memory_space<vmem>>, vector<1x1x32xf32>
    %172 = vector.shape_cast %171 : vector<1x1x32xf32> to vector<1x32xf32>
    %173 = vector.broadcast %172 : vector<1x32xf32> to vector<16x32xf32>
    %174 = arith.addf %169, %173 : vector<16x32xf32>
    %175 = arith.addf %174, %143 : vector<16x32xf32>
    %176 = arith.index_cast %c0_i32 : i32 to index
    %c0_62 = arith.constant 0 : index
    %c0_63 = arith.constant 0 : index
    %177 = vector.load %arg15[%176, %c0_62, %c0_63] : memref<2x1x32xf32, #tpu.memory_space<vmem>>, vector<1x1x32xf32>
    %178 = vector.shape_cast %177 : vector<1x1x32xf32> to vector<1x32xf32>
    %179 = arith.index_cast %c0_i32 : i32 to index
    %c0_64 = arith.constant 0 : index
    %c0_65 = arith.constant 0 : index
    %180 = vector.load %arg16[%179, %c0_64, %c0_65] : memref<2x1x32xf32, #tpu.memory_space<vmem>>, vector<1x1x32xf32>
    %181 = vector.shape_cast %180 : vector<1x1x32xf32> to vector<1x32xf32>
    %cst_66 = arith.constant dense<0.000000e+00> : vector<16xf32>
    %182 = vector.multi_reduction <add>, %175, %cst_66 [1] : vector<16x32xf32> to vector<16xf32>
    %183 = vector.shape_cast %182 : vector<16xf32> to vector<16x1xf32>
    %cst_67 = arith.constant 3.200000e+01 : f32
    %184 = vector.broadcast %cst_67 : f32 to vector<16x1xf32>
    %185 = arith.divf %183, %184 : vector<16x1xf32>
    %186 = vector.broadcast %185 : vector<16x1xf32> to vector<16x32xf32>
    %187 = arith.subf %175, %186 : vector<16x32xf32>
    %188 = arith.mulf %187, %187 : vector<16x32xf32>
    %cst_68 = arith.constant dense<0.000000e+00> : vector<16xf32>
    %189 = vector.multi_reduction <add>, %188, %cst_68 [1] : vector<16x32xf32> to vector<16xf32>
    %190 = vector.shape_cast %189 : vector<16xf32> to vector<16x1xf32>
    %cst_69 = arith.constant 3.200000e+01 : f32
    %191 = vector.broadcast %cst_69 : f32 to vector<16x1xf32>
    %192 = arith.divf %190, %191 : vector<16x1xf32>
    %193 = vector.broadcast %185 : vector<16x1xf32> to vector<16x32xf32>
    %194 = arith.subf %175, %193 : vector<16x32xf32>
    %cst_70 = arith.constant 9.99999996E-13 : f32
    %195 = vector.broadcast %cst_70 : f32 to vector<16x1xf32>
    %196 = arith.addf %192, %195 : vector<16x1xf32>
    %197 = math.rsqrt %196 : vector<16x1xf32>
    %198 = vector.broadcast %197 : vector<16x1xf32> to vector<16x32xf32>
    %199 = arith.mulf %194, %198 : vector<16x32xf32>
    %200 = vector.broadcast %178 : vector<1x32xf32> to vector<16x32xf32>
    %201 = arith.mulf %199, %200 : vector<16x32xf32>
    %202 = vector.broadcast %181 : vector<1x32xf32> to vector<16x32xf32>
    %203 = arith.addf %201, %202 : vector<16x32xf32>
    %c1_i32 = arith.constant 1 : i32
    %204 = arith.index_cast %c1_i32 : i32 to index
    %c0_71 = arith.constant 0 : index
    %c0_72 = arith.constant 0 : index
    %205 = vector.load %arg5[%204, %c0_71, %c0_72] : memref<2x32x96xf32, #tpu.memory_space<vmem>>, vector<1x32x96xf32>
    %206 = vector.shape_cast %205 : vector<1x32x96xf32> to vector<32x96xf32>
    %cst_73 = arith.constant dense<0.000000e+00> : vector<16x96xf32>
    %207 = tpu.matmul %203, %206, %cst_73 {dimension_numbers = #tpu.dot_dimension_numbers<[1], [0], [0], [1], [0, 0, 1, 1], [], []>} : vector<16x32xf32>, vector<32x96xf32>, vector<16x96xf32> -> vector<16x96xf32>
    %208 = arith.index_cast %c1_i32 : i32 to index
    %c0_74 = arith.constant 0 : index
    %c0_75 = arith.constant 0 : index
    %209 = vector.load %arg6[%208, %c0_74, %c0_75] : memref<2x1x96xf32, #tpu.memory_space<vmem>>, vector<1x1x96xf32>
    %210 = vector.shape_cast %209 : vector<1x1x96xf32> to vector<1x96xf32>
    %211 = vector.broadcast %210 : vector<1x96xf32> to vector<16x96xf32>
    %212 = arith.addf %207, %211 : vector<16x96xf32>
    %213 = vector.extract_strided_slice %27 {offsets = [0, 0], sizes = [1, 8], strides = [1, 1]} : vector<2x8xf32> to vector<1x8xf32>
    %214 = vector.extract_strided_slice %212 {offsets = [0, 0], sizes = [8, 16], strides = [1, 1]} : vector<16x96xf32> to vector<8x16xf32>
    %215 = vector.extract_strided_slice %212 {offsets = [0, 32], sizes = [8, 16], strides = [1, 1]} : vector<16x96xf32> to vector<8x16xf32>
    %216 = vector.extract_strided_slice %212 {offsets = [0, 64], sizes = [8, 16], strides = [1, 1]} : vector<16x96xf32> to vector<8x16xf32>
    %cst_76 = arith.constant dense<0.000000e+00> : vector<8x8xf32>
    %217 = tpu.matmul %214, %215, %cst_76 {dimension_numbers = #tpu.dot_dimension_numbers<[1], [1], [0], [0], [0, 0, 1, 0], [], []>} : vector<8x16xf32>, vector<8x16xf32>, vector<8x8xf32> -> vector<8x8xf32>
    %218 = vector.broadcast %213 : vector<1x8xf32> to vector<8x8xf32>
    %219 = arith.addf %217, %218 : vector<8x8xf32>
    %cst_77 = arith.constant dense<0xFF800000> : vector<8xf32>
    %220 = vector.multi_reduction <maximumf>, %219, %cst_77 [1] : vector<8x8xf32> to vector<8xf32>
    %221 = vector.shape_cast %220 : vector<8xf32> to vector<8x1xf32>
    %222 = vector.broadcast %221 : vector<8x1xf32> to vector<8x8xf32>
    %223 = arith.subf %219, %222 : vector<8x8xf32>
    %224 = math.exp %223 : vector<8x8xf32>
    %cst_78 = arith.constant dense<0.000000e+00> : vector<8xf32>
    %225 = vector.multi_reduction <add>, %224, %cst_78 [1] : vector<8x8xf32> to vector<8xf32>
    %226 = vector.shape_cast %225 : vector<8xf32> to vector<8x1xf32>
    %227 = vector.broadcast %226 : vector<8x1xf32> to vector<8x8xf32>
    %228 = arith.divf %224, %227 : vector<8x8xf32>
    %cst_79 = arith.constant dense<0.000000e+00> : vector<8x16xf32>
    %229 = tpu.matmul %228, %216, %cst_79 {dimension_numbers = #tpu.dot_dimension_numbers<[1], [0], [0], [1], [0, 0, 1, 1], [], []>} : vector<8x8xf32>, vector<8x16xf32>, vector<8x16xf32> -> vector<8x16xf32>
    %230 = vector.extract_strided_slice %212 {offsets = [0, 16], sizes = [8, 16], strides = [1, 1]} : vector<16x96xf32> to vector<8x16xf32>
    %231 = vector.extract_strided_slice %212 {offsets = [0, 48], sizes = [8, 16], strides = [1, 1]} : vector<16x96xf32> to vector<8x16xf32>
    %232 = vector.extract_strided_slice %212 {offsets = [0, 80], sizes = [8, 16], strides = [1, 1]} : vector<16x96xf32> to vector<8x16xf32>
    %cst_80 = arith.constant dense<0.000000e+00> : vector<8x8xf32>
    %233 = tpu.matmul %230, %231, %cst_80 {dimension_numbers = #tpu.dot_dimension_numbers<[1], [1], [0], [0], [0, 0, 1, 0], [], []>} : vector<8x16xf32>, vector<8x16xf32>, vector<8x8xf32> -> vector<8x8xf32>
    %234 = vector.broadcast %213 : vector<1x8xf32> to vector<8x8xf32>
    %235 = arith.addf %233, %234 : vector<8x8xf32>
    %cst_81 = arith.constant dense<0xFF800000> : vector<8xf32>
    %236 = vector.multi_reduction <maximumf>, %235, %cst_81 [1] : vector<8x8xf32> to vector<8xf32>
    %237 = vector.shape_cast %236 : vector<8xf32> to vector<8x1xf32>
    %238 = vector.broadcast %237 : vector<8x1xf32> to vector<8x8xf32>
    %239 = arith.subf %235, %238 : vector<8x8xf32>
    %240 = math.exp %239 : vector<8x8xf32>
    %cst_82 = arith.constant dense<0.000000e+00> : vector<8xf32>
    %241 = vector.multi_reduction <add>, %240, %cst_82 [1] : vector<8x8xf32> to vector<8xf32>
    %242 = vector.shape_cast %241 : vector<8xf32> to vector<8x1xf32>
    %243 = vector.broadcast %242 : vector<8x1xf32> to vector<8x8xf32>
    %244 = arith.divf %240, %243 : vector<8x8xf32>
    %cst_83 = arith.constant dense<0.000000e+00> : vector<8x16xf32>
    %245 = tpu.matmul %244, %232, %cst_83 {dimension_numbers = #tpu.dot_dimension_numbers<[1], [0], [0], [1], [0, 0, 1, 1], [], []>} : vector<8x8xf32>, vector<8x16xf32>, vector<8x16xf32> -> vector<8x16xf32>
    %246 = tpu.concatenate %229, %245 in 1 : vector<8x16xf32>, vector<8x16xf32> -> vector<8x32xf32>
    %247 = vector.extract_strided_slice %27 {offsets = [1, 0], sizes = [1, 8], strides = [1, 1]} : vector<2x8xf32> to vector<1x8xf32>
    %248 = vector.extract_strided_slice %212 {offsets = [8, 0], sizes = [8, 16], strides = [1, 1]} : vector<16x96xf32> to vector<8x16xf32>
    %249 = vector.extract_strided_slice %212 {offsets = [8, 32], sizes = [8, 16], strides = [1, 1]} : vector<16x96xf32> to vector<8x16xf32>
    %250 = vector.extract_strided_slice %212 {offsets = [8, 64], sizes = [8, 16], strides = [1, 1]} : vector<16x96xf32> to vector<8x16xf32>
    %cst_84 = arith.constant dense<0.000000e+00> : vector<8x8xf32>
    %251 = tpu.matmul %248, %249, %cst_84 {dimension_numbers = #tpu.dot_dimension_numbers<[1], [1], [0], [0], [0, 0, 1, 0], [], []>} : vector<8x16xf32>, vector<8x16xf32>, vector<8x8xf32> -> vector<8x8xf32>
    %252 = vector.broadcast %247 : vector<1x8xf32> to vector<8x8xf32>
    %253 = arith.addf %251, %252 : vector<8x8xf32>
    %cst_85 = arith.constant dense<0xFF800000> : vector<8xf32>
    %254 = vector.multi_reduction <maximumf>, %253, %cst_85 [1] : vector<8x8xf32> to vector<8xf32>
    %255 = vector.shape_cast %254 : vector<8xf32> to vector<8x1xf32>
    %256 = vector.broadcast %255 : vector<8x1xf32> to vector<8x8xf32>
    %257 = arith.subf %253, %256 : vector<8x8xf32>
    %258 = math.exp %257 : vector<8x8xf32>
    %cst_86 = arith.constant dense<0.000000e+00> : vector<8xf32>
    %259 = vector.multi_reduction <add>, %258, %cst_86 [1] : vector<8x8xf32> to vector<8xf32>
    %260 = vector.shape_cast %259 : vector<8xf32> to vector<8x1xf32>
    %261 = vector.broadcast %260 : vector<8x1xf32> to vector<8x8xf32>
    %262 = arith.divf %258, %261 : vector<8x8xf32>
    %cst_87 = arith.constant dense<0.000000e+00> : vector<8x16xf32>
    %263 = tpu.matmul %262, %250, %cst_87 {dimension_numbers = #tpu.dot_dimension_numbers<[1], [0], [0], [1], [0, 0, 1, 1], [], []>} : vector<8x8xf32>, vector<8x16xf32>, vector<8x16xf32> -> vector<8x16xf32>
    %264 = vector.extract_strided_slice %212 {offsets = [8, 16], sizes = [8, 16], strides = [1, 1]} : vector<16x96xf32> to vector<8x16xf32>
    %265 = vector.extract_strided_slice %212 {offsets = [8, 48], sizes = [8, 16], strides = [1, 1]} : vector<16x96xf32> to vector<8x16xf32>
    %266 = vector.extract_strided_slice %212 {offsets = [8, 80], sizes = [8, 16], strides = [1, 1]} : vector<16x96xf32> to vector<8x16xf32>
    %cst_88 = arith.constant dense<0.000000e+00> : vector<8x8xf32>
    %267 = tpu.matmul %264, %265, %cst_88 {dimension_numbers = #tpu.dot_dimension_numbers<[1], [1], [0], [0], [0, 0, 1, 0], [], []>} : vector<8x16xf32>, vector<8x16xf32>, vector<8x8xf32> -> vector<8x8xf32>
    %268 = vector.broadcast %247 : vector<1x8xf32> to vector<8x8xf32>
    %269 = arith.addf %267, %268 : vector<8x8xf32>
    %cst_89 = arith.constant dense<0xFF800000> : vector<8xf32>
    %270 = vector.multi_reduction <maximumf>, %269, %cst_89 [1] : vector<8x8xf32> to vector<8xf32>
    %271 = vector.shape_cast %270 : vector<8xf32> to vector<8x1xf32>
    %272 = vector.broadcast %271 : vector<8x1xf32> to vector<8x8xf32>
    %273 = arith.subf %269, %272 : vector<8x8xf32>
    %274 = math.exp %273 : vector<8x8xf32>
    %cst_90 = arith.constant dense<0.000000e+00> : vector<8xf32>
    %275 = vector.multi_reduction <add>, %274, %cst_90 [1] : vector<8x8xf32> to vector<8xf32>
    %276 = vector.shape_cast %275 : vector<8xf32> to vector<8x1xf32>
    %277 = vector.broadcast %276 : vector<8x1xf32> to vector<8x8xf32>
    %278 = arith.divf %274, %277 : vector<8x8xf32>
    %cst_91 = arith.constant dense<0.000000e+00> : vector<8x16xf32>
    %279 = tpu.matmul %278, %266, %cst_91 {dimension_numbers = #tpu.dot_dimension_numbers<[1], [0], [0], [1], [0, 0, 1, 1], [], []>} : vector<8x8xf32>, vector<8x16xf32>, vector<8x16xf32> -> vector<8x16xf32>
    %280 = tpu.concatenate %263, %279 in 1 : vector<8x16xf32>, vector<8x16xf32> -> vector<8x32xf32>
    %281 = tpu.concatenate %246, %280 in 0 : vector<8x32xf32>, vector<8x32xf32> -> vector<16x32xf32>
    %282 = arith.index_cast %c1_i32 : i32 to index
    %c0_92 = arith.constant 0 : index
    %c0_93 = arith.constant 0 : index
    %283 = vector.load %arg7[%282, %c0_92, %c0_93] : memref<2x32x32xf32, #tpu.memory_space<vmem>>, vector<1x32x32xf32>
    %284 = vector.shape_cast %283 : vector<1x32x32xf32> to vector<32x32xf32>
    %cst_94 = arith.constant dense<0.000000e+00> : vector<16x32xf32>
    %285 = tpu.matmul %281, %284, %cst_94 {dimension_numbers = #tpu.dot_dimension_numbers<[1], [0], [0], [1], [0, 0, 1, 1], [], []>} : vector<16x32xf32>, vector<32x32xf32>, vector<16x32xf32> -> vector<16x32xf32>
    %286 = arith.index_cast %c1_i32 : i32 to index
    %c0_95 = arith.constant 0 : index
    %c0_96 = arith.constant 0 : index
    %287 = vector.load %arg8[%286, %c0_95, %c0_96] : memref<2x1x32xf32, #tpu.memory_space<vmem>>, vector<1x1x32xf32>
    %288 = vector.shape_cast %287 : vector<1x1x32xf32> to vector<1x32xf32>
    %289 = vector.broadcast %288 : vector<1x32xf32> to vector<16x32xf32>
    %290 = arith.addf %285, %289 : vector<16x32xf32>
    %291 = arith.addf %290, %203 : vector<16x32xf32>
    %292 = arith.index_cast %c1_i32 : i32 to index
    %c0_97 = arith.constant 0 : index
    %c0_98 = arith.constant 0 : index
    %293 = vector.load %arg9[%292, %c0_97, %c0_98] : memref<2x1x32xf32, #tpu.memory_space<vmem>>, vector<1x1x32xf32>
    %294 = vector.shape_cast %293 : vector<1x1x32xf32> to vector<1x32xf32>
    %295 = arith.index_cast %c1_i32 : i32 to index
    %c0_99 = arith.constant 0 : index
    %c0_100 = arith.constant 0 : index
    %296 = vector.load %arg10[%295, %c0_99, %c0_100] : memref<2x1x32xf32, #tpu.memory_space<vmem>>, vector<1x1x32xf32>
    %297 = vector.shape_cast %296 : vector<1x1x32xf32> to vector<1x32xf32>
    %cst_101 = arith.constant dense<0.000000e+00> : vector<16xf32>
    %298 = vector.multi_reduction <add>, %291, %cst_101 [1] : vector<16x32xf32> to vector<16xf32>
    %299 = vector.shape_cast %298 : vector<16xf32> to vector<16x1xf32>
    %cst_102 = arith.constant 3.200000e+01 : f32
    %300 = vector.broadcast %cst_102 : f32 to vector<16x1xf32>
    %301 = arith.divf %299, %300 : vector<16x1xf32>
    %302 = vector.broadcast %301 : vector<16x1xf32> to vector<16x32xf32>
    %303 = arith.subf %291, %302 : vector<16x32xf32>
    %304 = arith.mulf %303, %303 : vector<16x32xf32>
    %cst_103 = arith.constant dense<0.000000e+00> : vector<16xf32>
    %305 = vector.multi_reduction <add>, %304, %cst_103 [1] : vector<16x32xf32> to vector<16xf32>
    %306 = vector.shape_cast %305 : vector<16xf32> to vector<16x1xf32>
    %cst_104 = arith.constant 3.200000e+01 : f32
    %307 = vector.broadcast %cst_104 : f32 to vector<16x1xf32>
    %308 = arith.divf %306, %307 : vector<16x1xf32>
    %309 = vector.broadcast %301 : vector<16x1xf32> to vector<16x32xf32>
    %310 = arith.subf %291, %309 : vector<16x32xf32>
    %cst_105 = arith.constant 9.99999996E-13 : f32
    %311 = vector.broadcast %cst_105 : f32 to vector<16x1xf32>
    %312 = arith.addf %308, %311 : vector<16x1xf32>
    %313 = math.rsqrt %312 : vector<16x1xf32>
    %314 = vector.broadcast %313 : vector<16x1xf32> to vector<16x32xf32>
    %315 = arith.mulf %310, %314 : vector<16x32xf32>
    %316 = vector.broadcast %294 : vector<1x32xf32> to vector<16x32xf32>
    %317 = arith.mulf %315, %316 : vector<16x32xf32>
    %318 = vector.broadcast %297 : vector<1x32xf32> to vector<16x32xf32>
    %319 = arith.addf %317, %318 : vector<16x32xf32>
    %320 = arith.index_cast %c1_i32 : i32 to index
    %c0_106 = arith.constant 0 : index
    %c0_107 = arith.constant 0 : index
    %321 = vector.load %arg11[%320, %c0_106, %c0_107] : memref<2x32x64xf32, #tpu.memory_space<vmem>>, vector<1x32x64xf32>
    %322 = vector.shape_cast %321 : vector<1x32x64xf32> to vector<32x64xf32>
    %cst_108 = arith.constant dense<0.000000e+00> : vector<16x64xf32>
    %323 = tpu.matmul %319, %322, %cst_108 {dimension_numbers = #tpu.dot_dimension_numbers<[1], [0], [0], [1], [0, 0, 1, 1], [], []>} : vector<16x32xf32>, vector<32x64xf32>, vector<16x64xf32> -> vector<16x64xf32>
    %324 = arith.index_cast %c1_i32 : i32 to index
    %c0_109 = arith.constant 0 : index
    %c0_110 = arith.constant 0 : index
    %325 = vector.load %arg12[%324, %c0_109, %c0_110] : memref<2x1x64xf32, #tpu.memory_space<vmem>>, vector<1x1x64xf32>
    %326 = vector.shape_cast %325 : vector<1x1x64xf32> to vector<1x64xf32>
    %327 = vector.broadcast %326 : vector<1x64xf32> to vector<16x64xf32>
    %328 = arith.addf %323, %327 : vector<16x64xf32>
    %cst_111 = arith.constant 5.000000e-01 : f32
    %329 = vector.broadcast %cst_111 : f32 to vector<16x64xf32>
    %330 = arith.mulf %329, %328 : vector<16x64xf32>
    %cst_112 = arith.constant 4.471500e-02 : f32
    %331 = vector.broadcast %cst_112 : f32 to vector<16x64xf32>
    %332 = arith.mulf %331, %328 : vector<16x64xf32>
    %333 = arith.mulf %332, %328 : vector<16x64xf32>
    %334 = arith.mulf %333, %328 : vector<16x64xf32>
    %335 = arith.addf %328, %334 : vector<16x64xf32>
    %cst_113 = arith.constant 0.797884583 : f32
    %336 = vector.broadcast %cst_113 : f32 to vector<16x64xf32>
    %337 = arith.mulf %336, %335 : vector<16x64xf32>
    %338 = math.tanh %337 : vector<16x64xf32>
    %cst_114 = arith.constant 1.000000e+00 : f32
    %339 = vector.broadcast %cst_114 : f32 to vector<16x64xf32>
    %340 = arith.addf %339, %338 : vector<16x64xf32>
    %341 = arith.mulf %330, %340 : vector<16x64xf32>
    %342 = arith.index_cast %c1_i32 : i32 to index
    %c0_115 = arith.constant 0 : index
    %c0_116 = arith.constant 0 : index
    %343 = vector.load %arg13[%342, %c0_115, %c0_116] : memref<2x64x32xf32, #tpu.memory_space<vmem>>, vector<1x64x32xf32>
    %344 = vector.shape_cast %343 : vector<1x64x32xf32> to vector<64x32xf32>
    %cst_117 = arith.constant dense<0.000000e+00> : vector<16x32xf32>
    %345 = tpu.matmul %341, %344, %cst_117 {dimension_numbers = #tpu.dot_dimension_numbers<[1], [0], [0], [1], [0, 0, 1, 1], [], []>} : vector<16x64xf32>, vector<64x32xf32>, vector<16x32xf32> -> vector<16x32xf32>
    %346 = arith.index_cast %c1_i32 : i32 to index
    %c0_118 = arith.constant 0 : index
    %c0_119 = arith.constant 0 : index
    %347 = vector.load %arg14[%346, %c0_118, %c0_119] : memref<2x1x32xf32, #tpu.memory_space<vmem>>, vector<1x1x32xf32>
    %348 = vector.shape_cast %347 : vector<1x1x32xf32> to vector<1x32xf32>
    %349 = vector.broadcast %348 : vector<1x32xf32> to vector<16x32xf32>
    %350 = arith.addf %345, %349 : vector<16x32xf32>
    %351 = arith.addf %350, %319 : vector<16x32xf32>
    %352 = arith.index_cast %c1_i32 : i32 to index
    %c0_120 = arith.constant 0 : index
    %c0_121 = arith.constant 0 : index
    %353 = vector.load %arg15[%352, %c0_120, %c0_121] : memref<2x1x32xf32, #tpu.memory_space<vmem>>, vector<1x1x32xf32>
    %354 = vector.shape_cast %353 : vector<1x1x32xf32> to vector<1x32xf32>
    %355 = arith.index_cast %c1_i32 : i32 to index
    %c0_122 = arith.constant 0 : index
    %c0_123 = arith.constant 0 : index
    %356 = vector.load %arg16[%355, %c0_122, %c0_123] : memref<2x1x32xf32, #tpu.memory_space<vmem>>, vector<1x1x32xf32>
    %357 = vector.shape_cast %356 : vector<1x1x32xf32> to vector<1x32xf32>
    %cst_124 = arith.constant dense<0.000000e+00> : vector<16xf32>
    %358 = vector.multi_reduction <add>, %351, %cst_124 [1] : vector<16x32xf32> to vector<16xf32>
    %359 = vector.shape_cast %358 : vector<16xf32> to vector<16x1xf32>
    %cst_125 = arith.constant 3.200000e+01 : f32
    %360 = vector.broadcast %cst_125 : f32 to vector<16x1xf32>
    %361 = arith.divf %359, %360 : vector<16x1xf32>
    %362 = vector.broadcast %361 : vector<16x1xf32> to vector<16x32xf32>
    %363 = arith.subf %351, %362 : vector<16x32xf32>
    %364 = arith.mulf %363, %363 : vector<16x32xf32>
    %cst_126 = arith.constant dense<0.000000e+00> : vector<16xf32>
    %365 = vector.multi_reduction <add>, %364, %cst_126 [1] : vector<16x32xf32> to vector<16xf32>
    %366 = vector.shape_cast %365 : vector<16xf32> to vector<16x1xf32>
    %cst_127 = arith.constant 3.200000e+01 : f32
    %367 = vector.broadcast %cst_127 : f32 to vector<16x1xf32>
    %368 = arith.divf %366, %367 : vector<16x1xf32>
    %369 = vector.broadcast %361 : vector<16x1xf32> to vector<16x32xf32>
    %370 = arith.subf %351, %369 : vector<16x32xf32>
    %cst_128 = arith.constant 9.99999996E-13 : f32
    %371 = vector.broadcast %cst_128 : f32 to vector<16x1xf32>
    %372 = arith.addf %368, %371 : vector<16x1xf32>
    %373 = math.rsqrt %372 : vector<16x1xf32>
    %374 = vector.broadcast %373 : vector<16x1xf32> to vector<16x32xf32>
    %375 = arith.mulf %370, %374 : vector<16x32xf32>
    %376 = vector.broadcast %354 : vector<1x32xf32> to vector<16x32xf32>
    %377 = arith.mulf %375, %376 : vector<16x32xf32>
    %378 = vector.broadcast %357 : vector<1x32xf32> to vector<16x32xf32>
    %379 = arith.addf %377, %378 : vector<16x32xf32>
    %c2_i32 = arith.constant 2 : i32
    %380 = vector.extract_strided_slice %379 {offsets = [0, 0], sizes = [1, 32], strides = [1, 1]} : vector<16x32xf32> to vector<1x32xf32>
    %381 = vector.extract_strided_slice %379 {offsets = [8, 0], sizes = [1, 32], strides = [1, 1]} : vector<16x32xf32> to vector<1x32xf32>
    %382 = tpu.concatenate %380, %381 in 0 : vector<1x32xf32>, vector<1x32xf32> -> vector<2x32xf32>
    %c0_129 = arith.constant 0 : index
    %c0_130 = arith.constant 0 : index
    %383 = vector.load %arg17[%c0_129, %c0_130] : memref<32x32xf32, #tpu.memory_space<vmem>>, vector<32x32xf32>
    %cst_131 = arith.constant dense<0.000000e+00> : vector<2x32xf32>
    %384 = tpu.matmul %382, %383, %cst_131 {dimension_numbers = #tpu.dot_dimension_numbers<[1], [0], [0], [1], [0, 0, 1, 1], [], []>} : vector<2x32xf32>, vector<32x32xf32>, vector<2x32xf32> -> vector<2x32xf32>
    %c0_132 = arith.constant 0 : index
    %c0_133 = arith.constant 0 : index
    %385 = vector.load %arg18[%c0_132, %c0_133] : memref<1x32xf32, #tpu.memory_space<vmem>>, vector<1x32xf32>
    %386 = vector.broadcast %385 : vector<1x32xf32> to vector<2x32xf32>
    %387 = arith.addf %384, %386 : vector<2x32xf32>
    %388 = math.tanh %387 : vector<2x32xf32>
    %c0_134 = arith.constant 0 : index
    %c0_135 = arith.constant 0 : index
    %389 = vector.load %arg19[%c0_134, %c0_135] : memref<32x128xf32, #tpu.memory_space<vmem>>, vector<32x128xf32>
    %cst_136 = arith.constant dense<0.000000e+00> : vector<2x128xf32>
    %390 = tpu.matmul %388, %389, %cst_136 {dimension_numbers = #tpu.dot_dimension_numbers<[1], [0], [0], [1], [0, 0, 1, 1], [], []>} : vector<2x32xf32>, vector<32x128xf32>, vector<2x128xf32> -> vector<2x128xf32>
    %c0_137 = arith.constant 0 : index
    %c0_138 = arith.constant 0 : index
    %391 = vector.load %arg20[%c0_137, %c0_138] : memref<1x128xf32, #tpu.memory_space<vmem>>, vector<1x128xf32>
    %392 = vector.broadcast %391 : vector<1x128xf32> to vector<2x128xf32>
    %393 = arith.addf %390, %392 : vector<2x128xf32>
    %c0_139 = arith.constant 0 : index
    %c0_140 = arith.constant 0 : index
    %c0_141 = arith.constant 0 : index
    %394 = vector.load %arg21[%c0_139, %c0_140, %c0_141] : memref<1x2x128xf32, #tpu.memory_space<vmem>>, vector<1x2x128xf32>
    %395 = vector.shape_cast %394 : vector<1x2x128xf32> to vector<2x128xf32>
    %396 = vector.shape_cast %393 : vector<2x128xf32> to vector<1x2x128xf32>
    tpu.vector_store %arg21[%c0_139, %c0_140, %c0_141], %396 {strides = array<i32>} : memref<1x2x128xf32, #tpu.memory_space<vmem>>, vector<1x2x128xf32>,
    return
  }
  func.func @transform_0(%arg0: i32) -> (i32, i32, i32) {
    %c0_i32 = arith.constant 0 : i32
    %c0_i32_0 = arith.constant 0 : i32
    %c0_i32_1 = arith.constant 0 : i32
    return %arg0, %c0_i32, %c0_i32_0 : i32, i32, i32
  }
  func.func @transform_1(%arg0: i32) -> (i32, i32, i32) {
    %c0_i32 = arith.constant 0 : i32
    %c0_i32_0 = arith.constant 0 : i32
    %c0_i32_1 = arith.constant 0 : i32
    return %arg0, %c0_i32, %c0_i32_0 : i32, i32, i32
  }
  func.func @transform_2(%arg0: i32) -> (i32, i32) {
    %c0_i32 = arith.constant 0 : i32
    %c0_i32_0 = arith.constant 0 : i32
    %c0_i32_1 = arith.constant 0 : i32
    return %c0_i32, %c0_i32_0 : i32, i32
  }
  func.func @transform_3(%arg0: i32) -> (i32, i32) {
    %c0_i32 = arith.constant 0 : i32
    %c0_i32_0 = arith.constant 0 : i32
    %c0_i32_1 = arith.constant 0 : i32
    return %c0_i32, %c0_i32_0 : i32, i32
  }
  func.func @transform_4(%arg0: i32) -> (i32, i32, i32) {
    %c0_i32 = arith.constant 0 : i32
    %c0_i32_0 = arith.constant 0 : i32
    %c0_i32_1 = arith.constant 0 : i32
    %c0_i32_2 = arith.constant 0 : i32
    return %c0_i32, %c0_i32_0, %c0_i32_1 : i32, i32, i32
  }
  func.func @transform_5(%arg0: i32) -> (i32, i32, i32) {
    %c0_i32 = arith.constant 0 : i32
    %c0_i32_0 = arith.constant 0 : i32
    %c0_i32_1 = arith.constant 0 : i32
    %c0_i32_2 = arith.constant 0 : i32
    return %c0_i32, %c0_i32_0, %c0_i32_1 : i32, i32, i32
  }
  func.func @transform_6(%arg0: i32) -> (i32, i32, i32) {
    %c0_i32 = arith.constant 0 : i32
    %c0_i32_0 = arith.constant 0 : i32
    %c0_i32_1 = arith.constant 0 : i32
    %c0_i32_2 = arith.constant 0 : i32
    return %c0_i32, %c0_i32_0, %c0_i32_1 : i32, i32, i32
  }
  func.func @transform_7(%arg0: i32) -> (i32, i32, i32) {
    %c0_i32 = arith.constant 0 : i32
    %c0_i32_0 = arith.constant 0 : i32
    %c0_i32_1 = arith.constant 0 : i32
    %c0_i32_2 = arith.constant 0 : i32
    return %c0_i32, %c0_i32_0, %c0_i32_1 : i32, i32, i32
  }
  func.func @transform_8(%arg0: i32) -> (i32, i32, i32) {
    %c0_i32 = arith.constant 0 : i32
    %c0_i32_0 = arith.constant 0 : i32
    %c0_i32_1 = arith.constant 0 : i32
    %c0_i32_2 = arith.constant 0 : i32
    return %c0_i32, %c0_i32_0, %c0_i32_1 : i32, i32, i32
  }
  func.func @transform_9(%arg0: i32) -> (i32, i32, i32) {
    %c0_i32 = arith.constant 0 : i32
    %c0_i32_0 = arith.constant 0 : i32
    %c0_i32_1 = arith.constant 0 : i32
    %c0_i32_2 = arith.constant 0 : i32
    return %c0_i32, %c0_i32_0, %c0_i32_1 : i32, i32, i32
  }
  func.func @transform_10(%arg0: i32) -> (i32, i32, i32) {
    %c0_i32 = arith.constant 0 : i32
    %c0_i32_0 = arith.constant 0 : i32
    %c0_i32_1 = arith.constant 0 : i32
    %c0_i32_2 = arith.constant 0 : i32
    return %c0_i32, %c0_i32_0, %c0_i32_1 : i32, i32, i32
  }
  func.func @transform_11(%arg0: i32) -> (i32, i32, i32) {
    %c0_i32 = arith.constant 0 : i32
    %c0_i32_0 = arith.constant 0 : i32
    %c0_i32_1 = arith.constant 0 : i32
    %c0_i32_2 = arith.constant 0 : i32
    return %c0_i32, %c0_i32_0, %c0_i32_1 : i32, i32, i32
  }
  func.func @transform_12(%arg0: i32) -> (i32, i32, i32) {
    %c0_i32 = arith.constant 0 : i32
    %c0_i32_0 = arith.constant 0 : i32
    %c0_i32_1 = arith.constant 0 : i32
    %c0_i32_2 = arith.constant 0 : i32
    return %c0_i32, %c0_i32_0, %c0_i32_1 : i32, i32, i32
  }
  func.func @transform_13(%arg0: i32) -> (i32, i32, i32) {
    %c0_i32 = arith.constant 0 : i32
    %c0_i32_0 = arith.constant 0 : i32
    %c0_i32_1 = arith.constant 0 : i32
    %c0_i32_2 = arith.constant 0 : i32
    return %c0_i32, %c0_i32_0, %c0_i32_1 : i32, i32, i32
  }
  func.func @transform_14(%arg0: i32) -> (i32, i32, i32) {
    %c0_i32 = arith.constant 0 : i32
    %c0_i32_0 = arith.constant 0 : i32
    %c0_i32_1 = arith.constant 0 : i32
    %c0_i32_2 = arith.constant 0 : i32
    return %c0_i32, %c0_i32_0, %c0_i32_1 : i32, i32, i32
  }
  func.func @transform_15(%arg0: i32) -> (i32, i32, i32) {
    %c0_i32 = arith.constant 0 : i32
    %c0_i32_0 = arith.constant 0 : i32
    %c0_i32_1 = arith.constant 0 : i32
    %c0_i32_2 = arith.constant 0 : i32
    return %c0_i32, %c0_i32_0, %c0_i32_1 : i32, i32, i32
  }
  func.func @transform_16(%arg0: i32) -> (i32, i32) {
    %c0_i32 = arith.constant 0 : i32
    %c0_i32_0 = arith.constant 0 : i32
    %c0_i32_1 = arith.constant 0 : i32
    return %c0_i32, %c0_i32_0 : i32, i32
  }
  func.func @transform_17(%arg0: i32) -> (i32, i32) {
    %c0_i32 = arith.constant 0 : i32
    %c0_i32_0 = arith.constant 0 : i32
    %c0_i32_1 = arith.constant 0 : i32
    return %c0_i32, %c0_i32_0 : i32, i32
  }
  func.func @transform_18(%arg0: i32) -> (i32, i32) {
    %c0_i32 = arith.constant 0 : i32
    %c0_i32_0 = arith.constant 0 : i32
    %c0_i32_1 = arith.constant 0 : i32
    return %c0_i32, %c0_i32_0 : i32, i32
  }
  func.func @transform_19(%arg0: i32) -> (i32, i32) {
    %c0_i32 = arith.constant 0 : i32
    %c0_i32_0 = arith.constant 0 : i32
    %c0_i32_1 = arith.constant 0 : i32
    return %c0_i32, %c0_i32_0 : i32, i32
  }
  func.func @transform_20(%arg0: i32) -> (i32, i32, i32) {
    %c0_i32 = arith.constant 0 : i32
    %c0_i32_0 = arith.constant 0 : i32
    %c0_i32_1 = arith.constant 0 : i32
    return %arg0, %c0_i32, %c0_i32_0 : i32, i32, i32
  }
}

</mosaic_0001>

<llo_original>
// kernel: tpu_custom_call.1
$region0: #{tpu_custom_call.1}
  #allocation0 [shape = 'u32[]', space=smem, size = 0x4, offset = 0x4, fixed_abs, tag = 'smem constant byte address 0x4 - core index']
  #allocation1 [shape = 'u32[144,128]{1,0:T(1,128)}', space=vmem, size = 0x12000, scoped, tag = 'internal scratch']
  %s0 = inlined_call_operand.hbm [shape: f32[1,16,32], index: 0, kind: input, shape index: {}]
  %s1 = inlined_call_operand.hbm [shape: f32[1,2,8], index: 1, kind: input, shape index: {}]
  %s2 = inlined_call_operand.hbm [shape: f32[1,32], index: 2, kind: input, shape index: {}]
  %s3 = inlined_call_operand.hbm [shape: f32[1,32], index: 3, kind: input, shape index: {}]
  %s4 = inlined_call_operand.vmem [shape: f32[2,32,96], index: 4, kind: input, shape index: {}]
  %s5 = inlined_call_operand.hbm [shape: f32[2,1,96], index: 5, kind: input, shape index: {}]
  %s6 = inlined_call_operand.vmem [shape: f32[2,32,32], index: 6, kind: input, shape index: {}]
  %s7 = inlined_call_operand.hbm [shape: f32[2,1,32], index: 7, kind: input, shape index: {}]
  %s8 = inlined_call_operand.hbm [shape: f32[2,1,32], index: 8, kind: input, shape index: {}]
  %s9 = inlined_call_operand.hbm [shape: f32[2,1,32], index: 9, kind: input, shape index: {}]
  %s10 = inlined_call_operand.vmem [shape: f32[2,32,64], index: 10, kind: input, shape index: {}]
  %s11 = inlined_call_operand.hbm [shape: f32[2,1,64], index: 11, kind: input, shape index: {}]
  %s12 = inlined_call_operand.vmem [shape: f32[2,64,32], index: 12, kind: input, shape index: {}]
  %s13 = inlined_call_operand.hbm [shape: f32[2,1,32], index: 13, kind: input, shape index: {}]
  %s14 = inlined_call_operand.hbm [shape: f32[2,1,32], index: 14, kind: input, shape index: {}]
  %s15 = inlined_call_operand.hbm [shape: f32[2,1,32], index: 15, kind: input, shape index: {}]
  %s16 = inlined_call_operand.hbm [shape: f32[32,32], index: 16, kind: input, shape index: {}]
  %s17 = inlined_call_operand.hbm [shape: f32[1,32], index: 17, kind: input, shape index: {}]
  %s18 = inlined_call_operand.vmem [shape: f32[32,128], index: 18, kind: input, shape index: {}]
  %s19 = inlined_call_operand.hbm [shape: f32[1,128], index: 19, kind: input, shape index: {}]
  %s20 = inlined_call_operand.hbm [shape: f32[1,2,128], index: 20, kind: output, shape index: {}]
  %s21 = sld [smem:[#allocation0]]
  $region150: #{tpu_custom_call.1} parent=0
    _
  %s23 = ssub.s32 1, %s21
  %s24 = scalar_select 0, %s23, %s21
  $region1: #{tpu_custom_call.1} parent=0
    #allocation2 [shape = 'u8[8192]{0}', space=vmem, size = 0x2000, scoped, tag = 'input window, operand 0, single buffered']
    #allocation3 [shape = 's32[1]{0}', space=sflag, size = 0x4, scoped, tag = 'scoped memory for tpu_custom_call.1']
    #allocation4 [shape = 's32[1]{0}', space=sflag, size = 0x4, scoped, tag = 'scoped memory for tpu_custom_call.1']
    #allocation5 [shape = 'u8[1024]{0}', space=vmem, size = 0x400, scoped, tag = 'input window, operand 1, single buffered']
    #allocation6 [shape = 's32[1]{0}', space=sflag, size = 0x4, scoped, tag = 'scoped memory for tpu_custom_call.1']
    #allocation7 [shape = 'u8[512]{0}', space=vmem, size = 0x400, scoped, tag = 'input window, operand 2, single buffered']
    #allocation8 [shape = 'u8[512]{0}', space=vmem, size = 0x400, scoped, tag = 'input window, operand 3, single buffered']
    #allocation9 [shape = 's32[1]{0}', space=sflag, size = 0x4, scoped, tag = 'scoped memory for tpu_custom_call.1']
    #allocation10 [shape = 'u8[1024]{0}', space=vmem, size = 0x400, scoped, tag = 'input window, operand 5, single buffered']
    #allocation11 [shape = 'u8[1024]{0}', space=vmem, size = 0x400, scoped, tag = 'input window, operand 7, single buffered']
    #allocation12 [shape = 's32[1]{0}', space=sflag, size = 0x4, scoped, tag = 'scoped memory for tpu_custom_call.1']
    #allocation13 [shape = 'u8[1024]{0}', space=vmem, size = 0x400, scoped, tag = 'input window, operand 8, single buffered']
    #allocation14 [shape = 'u8[1024]{0}', space=vmem, size = 0x400, scoped, tag = 'input window, operand 9, single buffered']
    #allocation15 [shape = 's32[1]{0}', space=sflag, size = 0x4, scoped, tag = 'scoped memory for tpu_custom_call.1']
    #allocation16 [shape = 'u8[1024]{0}', space=vmem, size = 0x400, scoped, tag = 'input window, operand 11, single buffered']
    #allocation17 [shape = 'u8[1024]{0}', space=vmem, size = 0x400, scoped, tag = 'input window, operand 13, single buffered']
    #allocation18 [shape = 's32[1]{0}', space=sflag, size = 0x4, scoped, tag = 'scoped memory for tpu_custom_call.1']
    #allocation19 [shape = 'u8[1024]{0}', space=vmem, size = 0x400, scoped, tag = 'input window, operand 14, single buffered']
    #allocation20 [shape = 'u8[1024]{0}', space=vmem, size = 0x400, scoped, tag = 'input window, operand 15, single buffered']
    #allocation21 [shape = 's32[1]{0}', space=sflag, size = 0x4, scoped, tag = 'scoped memory for tpu_custom_call.1']
    #allocation22 [shape = 'u8[16384]{0}', space=vmem, size = 0x4000, scoped, tag = 'input window, operand 16, single buffered']
    #allocation23 [shape = 'u8[512]{0}', space=vmem, size = 0x400, scoped, tag = 'input window, operand 17, single buffered']
    #allocation24 [shape = 's32[1]{0}', space=sflag, size = 0x4, scoped, tag = 'scoped memory for tpu_custom_call.1']
    #allocation25 [shape = 'u8[512]{0}', space=vmem, size = 0x400, scoped, tag = 'input window, operand 19, single buffered']
    #allocation26 [shape = 'u8[1024]{0}', space=vmem, size = 0x400, scoped, tag = 'output window, operand 0, single buffered']
    %25 = vsyncpa [#allocation3], 0
    %26 = vsyncpa [#allocation6], 0
    %27 = vsyncpa [#allocation9], 0
    %28 = vsyncpa [#allocation12], 0
    %29 = vsyncpa [#allocation15], 0
    %30 = vsyncpa [#allocation18], 0
    %31 = vsyncpa [#allocation21], 0
    %32 = vsyncpa [#allocation24], 0
    %33 = vsyncpa [#allocation4], 0
    // Predicated region
    $region2: #{tpu_custom_call.1} parent=1 // pred_check
      _
    $region3: #{tpu_custom_call.1} parent=1 // pred_check_branch
      %35 = sbr.rel (0) target = $region5
    $region4: #{tpu_custom_call.1} parent=1 // pred_region
      %s37 = ssub.s32 256, 256
      %38 = vsyncadd [#allocation3], %s37
      %s39 = sshll.u32 [#allocation2], 4
      %s40 = int_to_ptr.vmem [resolvable:$true] %s39
      %45 = dma.hbm_to_vmem [thread:$0]  %s0, 256, %s40, [#allocation3], 128, 128, 8
    $region5: #{tpu_custom_call.1} parent=1 // pred_fallthru
      _
    // Predicated region
    $region6: #{tpu_custom_call.1} parent=1 // pred_check
      _
    $region7: #{tpu_custom_call.1} parent=1 // pred_check_branch
      %47 = sbr.rel (0) target = $region9
    $region8: #{tpu_custom_call.1} parent=1 // pred_region
      %s49 = ssub.s32 32, 32
      %50 = vsyncadd [#allocation6], %s49
      %s52 = sshll.u32 [#allocation5], 4
      %s53 = int_to_ptr.vmem [resolvable:$true] %s52
      %55 = dma.hbm_to_vmem [thread:$0]  %s1, 32, %s53, [#allocation6]
    $region9: #{tpu_custom_call.1} parent=1 // pred_fallthru
      _
    // Predicated region
    $region10: #{tpu_custom_call.1} parent=1 // pred_check
      _
    $region11: #{tpu_custom_call.1} parent=1 // pred_check_branch
      %57 = sbr.rel (0) target = $region13
    $region12: #{tpu_custom_call.1} parent=1 // pred_region
      %s59 = ssub.s32 16, 16
      %60 = vsyncadd [#allocation6], %s59
      %s62 = sshll.u32 [#allocation7], 4
      %s63 = int_to_ptr.vmem [resolvable:$true] %s62
      %65 = dma.hbm_to_vmem [thread:$0]  %s2, 16, %s63, [#allocation6]
    $region13: #{tpu_custom_call.1} parent=1 // pred_fallthru
      _
    // Predicated region
    $region14: #{tpu_custom_call.1} parent=1 // pred_check
      _
    $region15: #{tpu_custom_call.1} parent=1 // pred_check_branch
      %67 = sbr.rel (0) target = $region17
    $region16: #{tpu_custom_call.1} parent=1 // pred_region
      %s69 = ssub.s32 16, 16
      %70 = vsyncadd [#allocation9], %s69
      %s72 = sshll.u32 [#allocation8], 4
      %s73 = int_to_ptr.vmem [resolvable:$true] %s72
      %75 = dma.hbm_to_vmem [thread:$0]  %s3, 16, %s73, [#allocation9]
    $region17: #{tpu_custom_call.1} parent=1 // pred_fallthru
      _
    // Predicated region
    $region18: #{tpu_custom_call.1} parent=1 // pred_check
      _
    $region19: #{tpu_custom_call.1} parent=1 // pred_check_branch
      %77 = sbr.rel (0) target = $region21
    $region20: #{tpu_custom_call.1} parent=1 // pred_region
      _
    $region21: #{tpu_custom_call.1} parent=1 // pred_fallthru
      _
    // Predicated region
    $region22: #{tpu_custom_call.1} parent=1 // pred_check
      _
    $region23: #{tpu_custom_call.1} parent=1 // pred_check_branch
      %79 = sbr.rel (0) target = $region25
    $region24: #{tpu_custom_call.1} parent=1 // pred_region
      %s81 = ssub.s32 32, 32
      %82 = vsyncadd [#allocation9], %s81
      %s83 = sshll.u32 [#allocation10], 4
      %s84 = int_to_ptr.vmem [resolvable:$true] %s83
      %89 = dma.hbm_to_vmem [thread:$0]  %s5, 32, %s84, [#allocation9], 16, 16, 1
    $region25: #{tpu_custom_call.1} parent=1 // pred_fallthru
      _
    // Predicated region
    $region26: #{tpu_custom_call.1} parent=1 // pred_check
      _
    $region27: #{tpu_custom_call.1} parent=1 // pred_check_branch
      %91 = sbr.rel (0) target = $region29
    $region28: #{tpu_custom_call.1} parent=1 // pred_region
      _
    $region29: #{tpu_custom_call.1} parent=1 // pred_fallthru
      _
    // Predicated region
    $region30: #{tpu_custom_call.1} parent=1 // pred_check
      _
    $region31: #{tpu_custom_call.1} parent=1 // pred_check_branch
      %93 = sbr.rel (0) target = $region33
    $region32: #{tpu_custom_call.1} parent=1 // pred_region
      %s95 = ssub.s32 32, 32
      %96 = vsyncadd [#allocation12], %s95
      %s97 = sshll.u32 [#allocation11], 4
      %s98 = int_to_ptr.vmem [resolvable:$true] %s97
      %103 = dma.hbm_to_vmem [thread:$0]  %s7, 32, %s98, [#allocation12], 16, 16, 1
    $region33: #{tpu_custom_call.1} parent=1 // pred_fallthru
      _
    // Predicated region
    $region34: #{tpu_custom_call.1} parent=1 // pred_check
      _
    $region35: #{tpu_custom_call.1} parent=1 // pred_check_branch
      %105 = sbr.rel (0) target = $region37
    $region36: #{tpu_custom_call.1} parent=1 // pred_region
      %s107 = ssub.s32 32, 32
      %108 = vsyncadd [#allocation12], %s107
      %s109 = sshll.u32 [#allocation13], 4
      %s110 = int_to_ptr.vmem [resolvable:$true] %s109
      %115 = dma.hbm_to_vmem [thread:$0]  %s8, 32, %s110, [#allocation12], 16, 16, 1
    $region37: #{tpu_custom_call.1} parent=1 // pred_fallthru
      _
    // Predicated region
    $region38: #{tpu_custom_call.1} parent=1 // pred_check
      _
    $region39: #{tpu_custom_call.1} parent=1 // pred_check_branch
      %117 = sbr.rel (0) target = $region41
    $region40: #{tpu_custom_call.1} parent=1 // pred_region
      %s119 = ssub.s32 32, 32
      %120 = vsyncadd [#allocation15], %s119
      %s121 = sshll.u32 [#allocation14], 4
      %s122 = int_to_ptr.vmem [resolvable:$true] %s121
      %127 = dma.hbm_to_vmem [thread:$0]  %s9, 32, %s122, [#allocation15], 16, 16, 1
    $region41: #{tpu_custom_call.1} parent=1 // pred_fallthru
      _
    // Predicated region
    $region42: #{tpu_custom_call.1} parent=1 // pred_check
      _
    $region43: #{tpu_custom_call.1} parent=1 // pred_check_branch
      %129 = sbr.rel (0) target = $region45
    $region44: #{tpu_custom_call.1} parent=1 // pred_region
      _
    $region45: #{tpu_custom_call.1} parent=1 // pred_fallthru
      _
    // Predicated region
    $region46: #{tpu_custom_call.1} parent=1 // pred_check
      _
    $region47: #{tpu_custom_call.1} parent=1 // pred_check_branch
      %131 = sbr.rel (0) target = $region49
    $region48: #{tpu_custom_call.1} parent=1 // pred_region
      %s133 = ssub.s32 32, 32
      %134 = vsyncadd [#allocation15], %s133
      %s135 = sshll.u32 [#allocation16], 4
      %s136 = int_to_ptr.vmem [resolvable:$true] %s135
      %141 = dma.hbm_to_vmem [thread:$0]  %s11, 32, %s136, [#allocation15], 16, 16, 1
    $region49: #{tpu_custom_call.1} parent=1 // pred_fallthru
      _
    // Predicated region
    $region50: #{tpu_custom_call.1} parent=1 // pred_check
      _
    $region51: #{tpu_custom_call.1} parent=1 // pred_check_branch
      %143 = sbr.rel (0) target = $region53
    $region52: #{tpu_custom_call.1} parent=1 // pred_region
      _
    $region53: #{tpu_custom_call.1} parent=1 // pred_fallthru
      _
    // Predicated region
    $region54: #{tpu_custom_call.1} parent=1 // pred_check
      _
    $region55: #{tpu_custom_call.1} parent=1 // pred_check_branch
      %145 = sbr.rel (0) target = $region57
    $region56: #{tpu_custom_call.1} parent=1 // pred_region
      %s147 = ssub.s32 32, 32
      %148 = vsyncadd [#allocation18], %s147
      %s149 = sshll.u32 [#allocation17], 4
      %s150 = int_to_ptr.vmem [resolvable:$true] %s149
      %155 = dma.hbm_to_vmem [thread:$0]  %s13, 32, %s150, [#allocation18], 16, 16, 1
    $region57: #{tpu_custom_call.1} parent=1 // pred_fallthru
      _
    // Predicated region
    $region58: #{tpu_custom_call.1} parent=1 // pred_check
      _
    $region59: #{tpu_custom_call.1} parent=1 // pred_check_branch
      %157 = sbr.rel (0) target = $region61
    $region60: #{tpu_custom_call.1} parent=1 // pred_region
      %s159 = ssub.s32 32, 32
      %160 = vsyncadd [#allocation18], %s159
      %s161 = sshll.u32 [#allocation19], 4
      %s162 = int_to_ptr.vmem [resolvable:$true] %s161
      %167 = dma.hbm_to_vmem [thread:$0]  %s14, 32, %s162, [#allocation18], 16, 16, 1
    $region61: #{tpu_custom_call.1} parent=1 // pred_fallthru
      _
    // Predicated region
    $region62: #{tpu_custom_call.1} parent=1 // pred_check
      _
    $region63: #{tpu_custom_call.1} parent=1 // pred_check_branch
      %169 = sbr.rel (0) target = $region65
    $region64: #{tpu_custom_call.1} parent=1 // pred_region
      %s171 = ssub.s32 32, 32
      %172 = vsyncadd [#allocation21], %s171
      %s173 = sshll.u32 [#allocation20], 4
      %s174 = int_to_ptr.vmem [resolvable:$true] %s173
      %179 = dma.hbm_to_vmem [thread:$0]  %s15, 32, %s174, [#allocation21], 16, 16, 1
    $region65: #{tpu_custom_call.1} parent=1 // pred_fallthru
      _
    // Predicated region
    $region66: #{tpu_custom_call.1} parent=1 // pred_check
      _
    $region67: #{tpu_custom_call.1} parent=1 // pred_check_branch
      %181 = sbr.rel (0) target = $region69
    $region68: #{tpu_custom_call.1} parent=1 // pred_region
      %s183 = ssub.s32 512, 512
      %184 = vsyncadd [#allocation21], %s183
      %s185 = sshll.u32 [#allocation22], 4
      %s186 = int_to_ptr.vmem [resolvable:$true] %s185
      %191 = dma.hbm_to_vmem [thread:$0]  %s16, 512, %s186, [#allocation21], 128, 128, 8
    $region69: #{tpu_custom_call.1} parent=1 // pred_fallthru
      _
    // Predicated region
    $region70: #{tpu_custom_call.1} parent=1 // pred_check
      _
    $region71: #{tpu_custom_call.1} parent=1 // pred_check_branch
      %193 = sbr.rel (0) target = $region73
    $region72: #{tpu_custom_call.1} parent=1 // pred_region
      %s195 = ssub.s32 16, 16
      %196 = vsyncadd [#allocation24], %s195
      %s198 = sshll.u32 [#allocation23], 4
      %s199 = int_to_ptr.vmem [resolvable:$true] %s198
      %201 = dma.hbm_to_vmem [thread:$0]  %s17, 16, %s199, [#allocation24]
    $region73: #{tpu_custom_call.1} parent=1 // pred_fallthru
      _
    // Predicated region
    $region74: #{tpu_custom_call.1} parent=1 // pred_check
      _
    $region75: #{tpu_custom_call.1} parent=1 // pred_check_branch
      %203 = sbr.rel (0) target = $region77
    $region76: #{tpu_custom_call.1} parent=1 // pred_region
      _
    $region77: #{tpu_custom_call.1} parent=1 // pred_fallthru
      _
    // Predicated region
    $region78: #{tpu_custom_call.1} parent=1 // pred_check
      _
    $region79: #{tpu_custom_call.1} parent=1 // pred_check_branch
      %205 = sbr.rel (0) target = $region81
    $region80: #{tpu_custom_call.1} parent=1 // pred_region
      %s207 = ssub.s32 16, 16
      %208 = vsyncadd [#allocation24], %s207
      %s210 = sshll.u32 [#allocation25], 4
      %s211 = int_to_ptr.vmem [resolvable:$true] %s210
      %213 = dma.hbm_to_vmem [thread:$0]  %s19, 16, %s211, [#allocation24]
    $region81: #{tpu_custom_call.1} parent=1 // pred_fallthru
      _
    // Predicated region
    $region82: #{tpu_custom_call.1} parent=1 // pred_check
      _
    $region83: #{tpu_custom_call.1} parent=1 // pred_check_branch
      %215 = sbr.rel (0) target = $region85
    $region84: #{tpu_custom_call.1} parent=1 // pred_region
      %216 = dma.done [#allocation3], 256
    $region85: #{tpu_custom_call.1} parent=1 // pred_fallthru
      _
    // Predicated region
    $region86: #{tpu_custom_call.1} parent=1 // pred_check
      _
    $region87: #{tpu_custom_call.1} parent=1 // pred_check_branch
      %218 = sbr.rel (0) target = $region89
    $region88: #{tpu_custom_call.1} parent=1 // pred_region
      %219 = dma.done [#allocation6], 32
    $region89: #{tpu_custom_call.1} parent=1 // pred_fallthru
      _
    // Predicated region
    $region90: #{tpu_custom_call.1} parent=1 // pred_check
      _
    $region91: #{tpu_custom_call.1} parent=1 // pred_check_branch
      %221 = sbr.rel (0) target = $region93
    $region92: #{tpu_custom_call.1} parent=1 // pred_region
      %222 = dma.done [#allocation6], 16
    $region93: #{tpu_custom_call.1} parent=1 // pred_fallthru
      _
    // Predicated region
    $region94: #{tpu_custom_call.1} parent=1 // pred_check
      _
    $region95: #{tpu_custom_call.1} parent=1 // pred_check_branch
      %224 = sbr.rel (0) target = $region97
    $region96: #{tpu_custom_call.1} parent=1 // pred_region
      %225 = dma.done [#allocation9], 16
    $region97: #{tpu_custom_call.1} parent=1 // pred_fallthru
      _
    // Predicated region
    $region98: #{tpu_custom_call.1} parent=1 // pred_check
      _
    $region99: #{tpu_custom_call.1} parent=1 // pred_check_branch
      %227 = sbr.rel (0) target = $region101
    $region100: #{tpu_custom_call.1} parent=1 // pred_region
      %228 = dma.done [#allocation9], 32
    $region101: #{tpu_custom_call.1} parent=1 // pred_fallthru
      _
    // Predicated region
    $region102: #{tpu_custom_call.1} parent=1 // pred_check
      _
    $region103: #{tpu_custom_call.1} parent=1 // pred_check_branch
      %230 = sbr.rel (0) target = $region105
    $region104: #{tpu_custom_call.1} parent=1 // pred_region
      %231 = dma.done [#allocation12], 32
    $region105: #{tpu_custom_call.1} parent=1 // pred_fallthru
      _
    // Predicated region
    $region106: #{tpu_custom_call.1} parent=1 // pred_check
      _
    $region107: #{tpu_custom_call.1} parent=1 // pred_check_branch
      %233 = sbr.rel (0) target = $region109
    $region108: #{tpu_custom_call.1} parent=1 // pred_region
      %234 = dma.done [#allocation12], 32
    $region109: #{tpu_custom_call.1} parent=1 // pred_fallthru
      _
    // Predicated region
    $region110: #{tpu_custom_call.1} parent=1 // pred_check
      _
    $region111: #{tpu_custom_call.1} parent=1 // pred_check_branch
      %236 = sbr.rel (0) target = $region113
    $region112: #{tpu_custom_call.1} parent=1 // pred_region
      %237 = dma.done [#allocation15], 32
    $region113: #{tpu_custom_call.1} parent=1 // pred_fallthru
      _
    // Predicated region
    $region114: #{tpu_custom_call.1} parent=1 // pred_check
      _
    $region115: #{tpu_custom_call.1} parent=1 // pred_check_branch
      %239 = sbr.rel (0) target = $region117
    $region116: #{tpu_custom_call.1} parent=1 // pred_region
      %240 = dma.done [#allocation15], 32
    $region117: #{tpu_custom_call.1} parent=1 // pred_fallthru
      _
    // Predicated region
    $region118: #{tpu_custom_call.1} parent=1 // pred_check
      _
    $region119: #{tpu_custom_call.1} parent=1 // pred_check_branch
      %242 = sbr.rel (0) target = $region121
    $region120: #{tpu_custom_call.1} parent=1 // pred_region
      %243 = dma.done [#allocation18], 32
    $region121: #{tpu_custom_call.1} parent=1 // pred_fallthru
      _
    // Predicated region
    $region122: #{tpu_custom_call.1} parent=1 // pred_check
      _
    $region123: #{tpu_custom_call.1} parent=1 // pred_check_branch
      %245 = sbr.rel (0) target = $region125
    $region124: #{tpu_custom_call.1} parent=1 // pred_region
      %246 = dma.done [#allocation18], 32
    $region125: #{tpu_custom_call.1} parent=1 // pred_fallthru
      _
    // Predicated region
    $region126: #{tpu_custom_call.1} parent=1 // pred_check
      _
    $region127: #{tpu_custom_call.1} parent=1 // pred_check_branch
      %248 = sbr.rel (0) target = $region129
    $region128: #{tpu_custom_call.1} parent=1 // pred_region
      %249 = dma.done [#allocation21], 32
    $region129: #{tpu_custom_call.1} parent=1 // pred_fallthru
      _
    // Predicated region
    $region130: #{tpu_custom_call.1} parent=1 // pred_check
      _
    $region131: #{tpu_custom_call.1} parent=1 // pred_check_branch
      %251 = sbr.rel (0) target = $region133
    $region132: #{tpu_custom_call.1} parent=1 // pred_region
      %252 = dma.done [#allocation21], 512
    $region133: #{tpu_custom_call.1} parent=1 // pred_fallthru
      _
    // Predicated region
    $region134: #{tpu_custom_call.1} parent=1 // pred_check
      _
    $region135: #{tpu_custom_call.1} parent=1 // pred_check_branch
      %254 = sbr.rel (0) target = $region137
    $region136: #{tpu_custom_call.1} parent=1 // pred_region
      %255 = dma.done [#allocation24], 16
    $region137: #{tpu_custom_call.1} parent=1 // pred_fallthru
      _
    // Predicated region
    $region138: #{tpu_custom_call.1} parent=1 // pred_check
      _
    $region139: #{tpu_custom_call.1} parent=1 // pred_check_branch
      %257 = sbr.rel (0) target = $region141
    $region140: #{tpu_custom_call.1} parent=1 // pred_region
      %258 = dma.done [#allocation24], 16
    $region141: #{tpu_custom_call.1} parent=1 // pred_fallthru
      _
    %v259 = vld [vmem:[#allocation2] sm:$0xff]
    %v260 = vld [vmem:[#allocation2 + $0x8] sm:$0xff]
    %v261 = vld [vmem:[#allocation7] sm:$0x1]
    %v262 = vld [vmem:[#allocation8] sm:$0x1]
    %vm263 = vcmask 261120
    %v264 = vsel %vm263, %v259, 0.0
    %265 = vadd.xlane.f32.xlu0 %v264
    %v266 = vpop.xlane.xlu0 %265
    %v267 = vsel %vm263, %v260, 0.0
    %268 = vadd.xlane.f32.xlu0 %v267
    %v269 = vpop.xlane.xlu0 %268
    %v270 = vrcp.pop 32.0
    %v271 = vmul.f32 %v266, %v270
    %v272 = vmul.f32 %v269, %v270
    %v273 = vsub.f32 %v259, %v271
    %v274 = vsub.f32 %v260, %v272
    %v275 = vmul.f32 %v273, %v273
    %v276 = vmul.f32 %v274, %v274
    %v277 = vsel %vm263, %v275, 0.0
    %278 = vadd.xlane.f32.xlu0 %v277
    %v279 = vpop.xlane.xlu0 %278
    %v280 = vsel %vm263, %v276, 0.0
    %281 = vadd.xlane.f32.xlu0 %v280
    %v282 = vpop.xlane.xlu0 %281
    %v283 = vmul.f32 %v279, %v270
    %v284 = vmul.f32 %v282, %v270
    %v285 = vadd.f32 %v283, 1e-12
    %v286 = vadd.f32 %v284, 1e-12
    %v287 = vrsqrt.pop %v285
    %v288 = vrsqrt.pop %v286
    %v289 = vmul.f32 %v273, %v287
    %v290 = vmul.f32 %v274, %v288
    %v292 = vlaneseq
    %v293 = vshrl.u32 %v292, 7
    %v294 = vsub.s32 0, %v293
    %v295 = vrot.slane %v261, %v294
    %v297 = vmul.f32 %v289, %v295
    %v298 = vmul.f32 %v290, %v295
    %v300 = vlaneseq
    %v301 = vshrl.u32 %v300, 7
    %v302 = vsub.s32 0, %v301
    %v303 = vrot.slane %v262, %v302
    %v305 = vadd.f32 %v297, %v303
    %v306 = vadd.f32 %v298, %v303
    %v307 = vld [vmem:[#allocation5] sm:$0x3]
    %v308 = vld [vmem:[%s4] sm:$0xff]
    %v309 = vld [vmem:[%s4 + $0x8] sm:$0xff]
    %v310 = vld [vmem:[%s4 + $0x10] sm:$0xff]
    %v311 = vld [vmem:[%s4 + $0x18] sm:$0xff]
    %v312 = vld [vmem:[#allocation10] sm:$0x1]
    %v314 = vlaneseq
    %v315 = vshrl.u32 %v314, 7
    %v316 = vsub.s32 0, %v315
    %v317 = vrot.slane %v312, %v316
    %v320 = vsel %vm263, %v305, 0
    %v323 = vsel %vm263, %v306, 0
    %325 = vmatprep.subr.mxu0 0.0
    %326 = vmatpush1.msra.mxu0 0.0
    %327 = vmatprep.subr.mxu0 0.0
    %328 = vmatpush1.msra.mxu0 0.0
    %329 = vmatprep.subr.mxu0 0.0
    %330 = vmatpush1.msra.mxu0 0.0
    %331 = vmatprep.subr.mxu0 0.0
    %332 = vmatpush1.msra.mxu0 0.0
    %333 = vmatprep.subr.mxu0 0.0
    %334 = vmatpush1.msra.mxu0 0.0
    %335 = vmatprep.subr.mxu0 0.0
    %336 = vmatpush1.msra.mxu0 0.0
    %337 = vmatprep.subr.mxu0 0.0
    %338 = vmatpush1.msra.mxu0 0.0
    %339 = vmatprep.subr.mxu0 0.0
    %340 = vmatpush1.msra.mxu0 0.0
    %341 = vmatprep.subr.mxu0 0.0
    %342 = vmatpush1.msra.mxu0 0.0
    %343 = vmatprep.subr.mxu0 0.0
    %344 = vmatpush1.msra.mxu0 0.0
    %345 = vmatprep.subr.mxu0 0.0
    %346 = vmatpush1.msra.mxu0 0.0
    %347 = vmatprep.subr.mxu0 0.0
    %348 = vmatpush1.msra.mxu0 0.0
    %349 = vmatprep.subr.mxu0 0.0
    %350 = vmatpush1.msra.mxu0 %v311
    %351 = vmatprep.subr.mxu0 0.0
    %352 = vmatpush1.msra.mxu0 %v310
    %353 = vmatprep.subr.mxu0 0.0
    %354 = vmatpush1.msra.mxu0 %v309
    %355 = vmatprep.subr.mxu0 0.0
    %356 = vmatpush1.msra.mxu0 %v308
    %357 = vmatprep.subr.mxu0 0.0
    %358 = vmatpush2.msra.mxu0 0.0
    %359 = vmatprep.subr.mxu0 0.0
    %360 = vmatpush2.msra.mxu0 0.0
    %361 = vmatprep.subr.mxu0 0.0
    %362 = vmatpush2.msra.mxu0 0.0
    %363 = vmatprep.subr.mxu0 0.0
    %364 = vmatpush2.msra.mxu0 0.0
    %365 = vmatprep.subr.mxu0 0.0
    %366 = vmatpush2.msra.mxu0 0.0
    %367 = vmatprep.subr.mxu0 0.0
    %368 = vmatpush2.msra.mxu0 0.0
    %369 = vmatprep.subr.mxu0 0.0
    %370 = vmatpush2.msra.mxu0 0.0
    %371 = vmatprep.subr.mxu0 0.0
    %372 = vmatpush2.msra.mxu0 0.0
    %373 = vmatprep.subr.mxu0 0.0
    %374 = vmatpush2.msra.mxu0 0.0
    %375 = vmatprep.subr.mxu0 0.0
    %376 = vmatpush2.msra.mxu0 0.0
    %377 = vmatprep.subr.mxu0 0.0
    %378 = vmatpush2.msra.mxu0 0.0
    %379 = vmatprep.subr.mxu0 0.0
    %380 = vmatpush2.msra.mxu0 0.0
    %381 = vmatprep.subr.mxu0 0.0
    %382 = vmatpush2.msra.mxu0 0.0
    %383 = vmatprep.subr.mxu0 0.0
    %384 = vmatpush2.msra.mxu0 0.0
    %385 = vmatprep.subr.mxu0 0.0
    %386 = vmatpush2.msra.mxu0 0.0
    %387 = vmatprep.subr.mxu0 0.0
    %388 = vmatpush2.msra.mxu0 0.0
    %389 = vmatprep.mubr.f32.mxu0 0.0
    %390 = vmatmul.mubr.f32.gmra.mxu0 %v320
    %v391 = vpop.f32.mrf.mxu0
    %v392 = vadd.f32 %v317, %v391
    %v393 = vpop.f32.mrf.mxu0
    %394 = vmatprep.mubr.f32.mxu0 0.0
    %395 = vmatmul.mubr.f32.gmra.mxu0 %v323
    %v396 = vpop.f32.mrf.mxu0
    %v397 = vadd.f32 %v317, %v396
    %v398 = vpop.f32.mrf.mxu0
    %399 = vdwg.mxu0
    %v400 = vlaneseq
    %v401 = vshrl.u32 %v400, 7
    %v402 = vsub.s32 0, %v401
    %v403 = vrot.slane %v307, %v402
    %405 = vrot.lane.b32.xlu0 %v392, 96
    %v406 = vpop.permute.xlu0 %405
    %vm407 = vcmask 130048
    %v408 = vsel %vm407, %v392, 0
    %v410 = vsel %vm407, %v406, 0
    %412 = vmatprep.subr.mxu0 0.0
    %413 = vmatpush1.xpose.msra.mxu0 0.0
    %414 = vmatprep.subr.mxu0 0.0
    %415 = vmatpush1.xpose.msra.mxu0 0.0
    %416 = vmatprep.subr.mxu0 0.0
    %417 = vmatpush1.xpose.msra.mxu0 0.0
    %418 = vmatprep.subr.mxu0 0.0
    %419 = vmatpush1.xpose.msra.mxu0 0.0
    %420 = vmatprep.subr.mxu0 0.0
    %421 = vmatpush1.xpose.msra.mxu0 0.0
    %422 = vmatprep.subr.mxu0 0.0
    %423 = vmatpush1.xpose.msra.mxu0 0.0
    %424 = vmatprep.subr.mxu0 0.0
    %425 = vmatpush1.xpose.msra.mxu0 0.0
    %426 = vmatprep.subr.mxu0 0.0
    %427 = vmatpush1.xpose.msra.mxu0 0.0
    %428 = vmatprep.subr.mxu0 0.0
    %429 = vmatpush1.xpose.msra.mxu0 0.0
    %430 = vmatprep.subr.mxu0 0.0
    %431 = vmatpush1.xpose.msra.mxu0 0.0
    %432 = vmatprep.subr.mxu0 0.0
    %433 = vmatpush1.xpose.msra.mxu0 0.0
    %434 = vmatprep.subr.mxu0 0.0
    %435 = vmatpush1.xpose.msra.mxu0 0.0
    %436 = vmatprep.subr.mxu0 0.0
    %437 = vmatpush1.xpose.msra.mxu0 0.0
    %438 = vmatprep.subr.mxu0 0.0
    %439 = vmatpush1.xpose.msra.mxu0 0.0
    %440 = vmatprep.subr.mxu0 0.0
    %441 = vmatpush1.xpose.msra.mxu0 0.0
    %442 = vmatprep.subr.mxu0 0.0
    %443 = vmatpush1.xpose.msra.mxu0 %v410
    %444 = vmatprep.subr.mxu0 0.0
    %445 = vmatpush2.xpose.msra.mxu0 0.0
    %446 = vmatprep.subr.mxu0 0.0
    %447 = vmatpush2.xpose.msra.mxu0 0.0
    %448 = vmatprep.subr.mxu0 0.0
    %449 = vmatpush2.xpose.msra.mxu0 0.0
    %450 = vmatprep.subr.mxu0 0.0
    %451 = vmatpush2.xpose.msra.mxu0 0.0
    %452 = vmatprep.subr.mxu0 0.0
    %453 = vmatpush2.xpose.msra.mxu0 0.0
    %454 = vmatprep.subr.mxu0 0.0
    %455 = vmatpush2.xpose.msra.mxu0 0.0
    %456 = vmatprep.subr.mxu0 0.0
    %457 = vmatpush2.xpose.msra.mxu0 0.0
    %458 = vmatprep.subr.mxu0 0.0
    %459 = vmatpush2.xpose.msra.mxu0 0.0
    %460 = vmatprep.subr.mxu0 0.0
    %461 = vmatpush2.xpose.msra.mxu0 0.0
    %462 = vmatprep.subr.mxu0 0.0
    %463 = vmatpush2.xpose.msra.mxu0 0.0
    %464 = vmatprep.subr.mxu0 0.0
    %465 = vmatpush2.xpose.msra.mxu0 0.0
    %466 = vmatprep.subr.mxu0 0.0
    %467 = vmatpush2.xpose.msra.mxu0 0.0
    %468 = vmatprep.subr.mxu0 0.0
    %469 = vmatpush2.xpose.msra.mxu0 0.0
    %470 = vmatprep.subr.mxu0 0.0
    %471 = vmatpush2.xpose.msra.mxu0 0.0
    %472 = vmatprep.subr.mxu0 0.0
    %473 = vmatpush2.xpose.msra.mxu0 0.0
    %474 = vmatprep.subr.mxu0 0.0
    %475 = vmatpush2.xpose.msra.mxu0 0.0
    %476 = vmatprep.mubr.f32.mxu0 0.0
    %477 = vmatmul.mubr.f32.gmra.mxu0 %v408
    %v478 = vpop.f32.mrf.mxu0
    %v479 = vadd.f32 %v403, %v478
    %v480 = vpop.f32.mrf.mxu0
    %481 = vdwg.mxu0
    %vm482 = vcmask 64512
    %v483 = vsel %vm482, %v479, -inf
    %484 = vmax.xlane.f32.xlu0 %v483
    %v485 = vpop.xlane.xlu0 %484
    %v486 = vsub.f32 %v479, %v485
    %v487 = vmul.f32 %v486, 1.442695
    %v488 = vpow.pop %v487
    %v489 = vsel %vm482, %v488, 0.0
    %490 = vadd.xlane.f32.xlu0 %v489
    %v491 = vpop.xlane.xlu0 %490
    %v492 = vrcp.pop %v491
    %v493 = vmul.f32 %v488, %v492
    %494 = vrot.lane.b32.xlu0 %v392, 64
    %v495 = vpop.permute.xlu0 %494
    %v498 = vsel %vm482, %v493, 0
    %500 = vmatprep.subr.mxu0 0.0
    %501 = vmatpush1.msra.mxu0 0.0
    %502 = vmatprep.subr.mxu0 0.0
    %503 = vmatpush1.msra.mxu0 0.0
    %504 = vmatprep.subr.mxu0 0.0
    %505 = vmatpush1.msra.mxu0 0.0
    %506 = vmatprep.subr.mxu0 0.0
    %507 = vmatpush1.msra.mxu0 0.0
    %508 = vmatprep.subr.mxu0 0.0
    %509 = vmatpush1.msra.mxu0 0.0
    %510 = vmatprep.subr.mxu0 0.0
    %511 = vmatpush1.msra.mxu0 0.0
    %512 = vmatprep.subr.mxu0 0.0
    %513 = vmatpush1.msra.mxu0 0.0
    %514 = vmatprep.subr.mxu0 0.0
    %515 = vmatpush1.msra.mxu0 0.0
    %516 = vmatprep.subr.mxu0 0.0
    %517 = vmatpush1.msra.mxu0 0.0
    %518 = vmatprep.subr.mxu0 0.0
    %519 = vmatpush1.msra.mxu0 0.0
    %520 = vmatprep.subr.mxu0 0.0
    %521 = vmatpush1.msra.mxu0 0.0
    %522 = vmatprep.subr.mxu0 0.0
    %523 = vmatpush1.msra.mxu0 0.0
    %524 = vmatprep.subr.mxu0 0.0
    %525 = vmatpush1.msra.mxu0 0.0
    %526 = vmatprep.subr.mxu0 0.0
    %527 = vmatpush1.msra.mxu0 0.0
    %528 = vmatprep.subr.mxu0 0.0
    %529 = vmatpush1.msra.mxu0 0.0
    %530 = vmatprep.subr.mxu0 0.0
    %531 = vmatpush1.msra.mxu0 %v495
    %532 = vmatprep.subr.mxu0 0.0
    %533 = vmatpush2.msra.mxu0 0.0
    %534 = vmatprep.subr.mxu0 0.0
    %535 = vmatpush2.msra.mxu0 0.0
    %536 = vmatprep.subr.mxu0 0.0
    %537 = vmatpush2.msra.mxu0 0.0
    %538 = vmatprep.subr.mxu0 0.0
    %539 = vmatpush2.msra.mxu0 0.0
    %540 = vmatprep.subr.mxu0 0.0
    %541 = vmatpush2.msra.mxu0 0.0
    %542 = vmatprep.subr.mxu0 0.0
    %543 = vmatpush2.msra.mxu0 0.0
    %544 = vmatprep.subr.mxu0 0.0
    %545 = vmatpush2.msra.mxu0 0.0
    %546 = vmatprep.subr.mxu0 0.0
    %547 = vmatpush2.msra.mxu0 0.0
    %548 = vmatprep.subr.mxu0 0.0
    %549 = vmatpush2.msra.mxu0 0.0
    %550 = vmatprep.subr.mxu0 0.0
    %551 = vmatpush2.msra.mxu0 0.0
    %552 = vmatprep.subr.mxu0 0.0
    %553 = vmatpush2.msra.mxu0 0.0
    %554 = vmatprep.subr.mxu0 0.0
    %555 = vmatpush2.msra.mxu0 0.0
    %556 = vmatprep.subr.mxu0 0.0
    %557 = vmatpush2.msra.mxu0 0.0
    %558 = vmatprep.subr.mxu0 0.0
    %559 = vmatpush2.msra.mxu0 0.0
    %560 = vmatprep.subr.mxu0 0.0
    %561 = vmatpush2.msra.mxu0 0.0
    %562 = vmatprep.subr.mxu0 0.0
    %563 = vmatpush2.msra.mxu0 0.0
    %564 = vmatprep.mubr.f32.mxu0 0.0
    %565 = vmatmul.mubr.f32.gmra.mxu0 %v498
    %v566 = vpop.f32.mrf.mxu0
    %v567 = vadd.f32 0.0, %v566
    %v568 = vpop.f32.mrf.mxu0
    %569 = vdwg.mxu0
    %570 = vrot.lane.b32.xlu0 %v392, 112
    %v571 = vpop.permute.xlu0 %570
    %572 = vrot.lane.b32.xlu0 %v392, 80
    %v573 = vpop.permute.xlu0 %572
    %v574 = vsel %vm407, %v571, 0
    %v576 = vsel %vm407, %v573, 0
    %578 = vmatprep.subr.mxu0 0.0
    %579 = vmatpush1.xpose.msra.mxu0 0.0
    %580 = vmatprep.subr.mxu0 0.0
    %581 = vmatpush1.xpose.msra.mxu0 0.0
    %582 = vmatprep.subr.mxu0 0.0
    %583 = vmatpush1.xpose.msra.mxu0 0.0
    %584 = vmatprep.subr.mxu0 0.0
    %585 = vmatpush1.xpose.msra.mxu0 0.0
    %586 = vmatprep.subr.mxu0 0.0
    %587 = vmatpush1.xpose.msra.mxu0 0.0
    %588 = vmatprep.subr.mxu0 0.0
    %589 = vmatpush1.xpose.msra.mxu0 0.0
    %590 = vmatprep.subr.mxu0 0.0
    %591 = vmatpush1.xpose.msra.mxu0 0.0
    %592 = vmatprep.subr.mxu0 0.0
    %593 = vmatpush1.xpose.msra.mxu0 0.0
    %594 = vmatprep.subr.mxu0 0.0
    %595 = vmatpush1.xpose.msra.mxu0 0.0
    %596 = vmatprep.subr.mxu0 0.0
    %597 = vmatpush1.xpose.msra.mxu0 0.0
    %598 = vmatprep.subr.mxu0 0.0
    %599 = vmatpush1.xpose.msra.mxu0 0.0
    %600 = vmatprep.subr.mxu0 0.0
    %601 = vmatpush1.xpose.msra.mxu0 0.0
    %602 = vmatprep.subr.mxu0 0.0
    %603 = vmatpush1.xpose.msra.mxu0 0.0
    %604 = vmatprep.subr.mxu0 0.0
    %605 = vmatpush1.xpose.msra.mxu0 0.0
    %606 = vmatprep.subr.mxu0 0.0
    %607 = vmatpush1.xpose.msra.mxu0 0.0
    %608 = vmatprep.subr.mxu0 0.0
    %609 = vmatpush1.xpose.msra.mxu0 %v576
    %610 = vmatprep.subr.mxu0 0.0
    %611 = vmatpush2.xpose.msra.mxu0 0.0
    %612 = vmatprep.subr.mxu0 0.0
    %613 = vmatpush2.xpose.msra.mxu0 0.0
    %614 = vmatprep.subr.mxu0 0.0
    %615 = vmatpush2.xpose.msra.mxu0 0.0
    %616 = vmatprep.subr.mxu0 0.0
    %617 = vmatpush2.xpose.msra.mxu0 0.0
    %618 = vmatprep.subr.mxu0 0.0
    %619 = vmatpush2.xpose.msra.mxu0 0.0
    %620 = vmatprep.subr.mxu0 0.0
    %621 = vmatpush2.xpose.msra.mxu0 0.0
    %622 = vmatprep.subr.mxu0 0.0
    %623 = vmatpush2.xpose.msra.mxu0 0.0
    %624 = vmatprep.subr.mxu0 0.0
    %625 = vmatpush2.xpose.msra.mxu0 0.0
    %626 = vmatprep.subr.mxu0 0.0
    %627 = vmatpush2.xpose.msra.mxu0 0.0
    %628 = vmatprep.subr.mxu0 0.0
    %629 = vmatpush2.xpose.msra.mxu0 0.0
    %630 = vmatprep.subr.mxu0 0.0
    %631 = vmatpush2.xpose.msra.mxu0 0.0
    %632 = vmatprep.subr.mxu0 0.0
    %633 = vmatpush2.xpose.msra.mxu0 0.0
    %634 = vmatprep.subr.mxu0 0.0
    %635 = vmatpush2.xpose.msra.mxu0 0.0
    %636 = vmatprep.subr.mxu0 0.0
    %637 = vmatpush2.xpose.msra.mxu0 0.0
    %638 = vmatprep.subr.mxu0 0.0
    %639 = vmatpush2.xpose.msra.mxu0 0.0
    %640 = vmatprep.subr.mxu0 0.0
    %641 = vmatpush2.xpose.msra.mxu0 0.0
    %642 = vmatprep.mubr.f32.mxu0 0.0
    %643 = vmatmul.mubr.f32.gmra.mxu0 %v574
    %v644 = vpop.f32.mrf.mxu0
    %v645 = vadd.f32 %v403, %v644
    %v646 = vpop.f32.mrf.mxu0
    %647 = vdwg.mxu0
    %v648 = vsel %vm482, %v645, -inf
    %649 = vmax.xlane.f32.xlu0 %v648
    %v650 = vpop.xlane.xlu0 %649
    %v651 = vsub.f32 %v645, %v650
    %v652 = vmul.f32 %v651, 1.442695
    %v653 = vpow.pop %v652
    %v654 = vsel %vm482, %v653, 0.0
    %655 = vadd.xlane.f32.xlu0 %v654
    %v656 = vpop.xlane.xlu0 %655
    %v657 = vrcp.pop %v656
    %v658 = vmul.f32 %v653, %v657
    %659 = vrot.lane.b32.xlu0 %v392, 48
    %v660 = vpop.permute.xlu0 %659
    %v663 = vsel %vm482, %v658, 0
    %665 = vmatprep.subr.mxu0 0.0
    %666 = vmatpush1.msra.mxu0 0.0
    %667 = vmatprep.subr.mxu0 0.0
    %668 = vmatpush1.msra.mxu0 0.0
    %669 = vmatprep.subr.mxu0 0.0
    %670 = vmatpush1.msra.mxu0 0.0
    %671 = vmatprep.subr.mxu0 0.0
    %672 = vmatpush1.msra.mxu0 0.0
    %673 = vmatprep.subr.mxu0 0.0
    %674 = vmatpush1.msra.mxu0 0.0
    %675 = vmatprep.subr.mxu0 0.0
    %676 = vmatpush1.msra.mxu0 0.0
    %677 = vmatprep.subr.mxu0 0.0
    %678 = vmatpush1.msra.mxu0 0.0
    %679 = vmatprep.subr.mxu0 0.0
    %680 = vmatpush1.msra.mxu0 0.0
    %681 = vmatprep.subr.mxu0 0.0
    %682 = vmatpush1.msra.mxu0 0.0
    %683 = vmatprep.subr.mxu0 0.0
    %684 = vmatpush1.msra.mxu0 0.0
    %685 = vmatprep.subr.mxu0 0.0
    %686 = vmatpush1.msra.mxu0 0.0
    %687 = vmatprep.subr.mxu0 0.0
    %688 = vmatpush1.msra.mxu0 0.0
    %689 = vmatprep.subr.mxu0 0.0
    %690 = vmatpush1.msra.mxu0 0.0
    %691 = vmatprep.subr.mxu0 0.0
    %692 = vmatpush1.msra.mxu0 0.0
    %693 = vmatprep.subr.mxu0 0.0
    %694 = vmatpush1.msra.mxu0 0.0
    %695 = vmatprep.subr.mxu0 0.0
    %696 = vmatpush1.msra.mxu0 %v660
    %697 = vmatprep.subr.mxu0 0.0
    %698 = vmatpush2.msra.mxu0 0.0
    %699 = vmatprep.subr.mxu0 0.0
    %700 = vmatpush2.msra.mxu0 0.0
    %701 = vmatprep.subr.mxu0 0.0
    %702 = vmatpush2.msra.mxu0 0.0
    %703 = vmatprep.subr.mxu0 0.0
    %704 = vmatpush2.msra.mxu0 0.0
    %705 = vmatprep.subr.mxu0 0.0
    %706 = vmatpush2.msra.mxu0 0.0
    %707 = vmatprep.subr.mxu0 0.0
    %708 = vmatpush2.msra.mxu0 0.0
    %709 = vmatprep.subr.mxu0 0.0
    %710 = vmatpush2.msra.mxu0 0.0
    %711 = vmatprep.subr.mxu0 0.0
    %712 = vmatpush2.msra.mxu0 0.0
    %713 = vmatprep.subr.mxu0 0.0
    %714 = vmatpush2.msra.mxu0 0.0
    %715 = vmatprep.subr.mxu0 0.0
    %716 = vmatpush2.msra.mxu0 0.0
    %717 = vmatprep.subr.mxu0 0.0
    %718 = vmatpush2.msra.mxu0 0.0
    %719 = vmatprep.subr.mxu0 0.0
    %720 = vmatpush2.msra.mxu0 0.0
    %721 = vmatprep.subr.mxu0 0.0
    %722 = vmatpush2.msra.mxu0 0.0
    %723 = vmatprep.subr.mxu0 0.0
    %724 = vmatpush2.msra.mxu0 0.0
    %725 = vmatprep.subr.mxu0 0.0
    %726 = vmatpush2.msra.mxu0 0.0
    %727 = vmatprep.subr.mxu0 0.0
    %728 = vmatpush2.msra.mxu0 0.0
    %729 = vmatprep.mubr.f32.mxu0 0.0
    %730 = vmatmul.mubr.f32.gmra.mxu0 %v663
    %v731 = vpop.f32.mrf.mxu0
    %v732 = vadd.f32 0.0, %v731
    %v733 = vpop.f32.mrf.mxu0
    %734 = vdwg.mxu0
    %736 = vrot.lane.b32.xlu0 %v732, 16
    %v737 = vpop.permute.xlu0 %736
    %v739 = vsel %vm407, %v567, %v737
    %v740 = vlaneseq
    %v741 = vshrl.u32 %v740, 7
    %v742 = vsub.s32 1, %v741
    %v743 = vrot.slane %v307, %v742
    %745 = vrot.lane.b32.xlu0 %v397, 96
    %v746 = vpop.permute.xlu0 %745
    %v747 = vsel %vm407, %v397, 0
    %v749 = vsel %vm407, %v746, 0
    %751 = vmatprep.subr.mxu0 0.0
    %752 = vmatpush1.xpose.msra.mxu0 0.0
    %753 = vmatprep.subr.mxu0 0.0
    %754 = vmatpush1.xpose.msra.mxu0 0.0
    %755 = vmatprep.subr.mxu0 0.0
    %756 = vmatpush1.xpose.msra.mxu0 0.0
    %757 = vmatprep.subr.mxu0 0.0
    %758 = vmatpush1.xpose.msra.mxu0 0.0
    %759 = vmatprep.subr.mxu0 0.0
    %760 = vmatpush1.xpose.msra.mxu0 0.0
    %761 = vmatprep.subr.mxu0 0.0
    %762 = vmatpush1.xpose.msra.mxu0 0.0
    %763 = vmatprep.subr.mxu0 0.0
    %764 = vmatpush1.xpose.msra.mxu0 0.0
    %765 = vmatprep.subr.mxu0 0.0
    %766 = vmatpush1.xpose.msra.mxu0 0.0
    %767 = vmatprep.subr.mxu0 0.0
    %768 = vmatpush1.xpose.msra.mxu0 0.0
    %769 = vmatprep.subr.mxu0 0.0
    %770 = vmatpush1.xpose.msra.mxu0 0.0
    %771 = vmatprep.subr.mxu0 0.0
    %772 = vmatpush1.xpose.msra.mxu0 0.0
    %773 = vmatprep.subr.mxu0 0.0
    %774 = vmatpush1.xpose.msra.mxu0 0.0
    %775 = vmatprep.subr.mxu0 0.0
    %776 = vmatpush1.xpose.msra.mxu0 0.0
    %777 = vmatprep.subr.mxu0 0.0
    %778 = vmatpush1.xpose.msra.mxu0 0.0
    %779 = vmatprep.subr.mxu0 0.0
    %780 = vmatpush1.xpose.msra.mxu0 0.0
    %781 = vmatprep.subr.mxu0 0.0
    %782 = vmatpush1.xpose.msra.mxu0 %v749
    %783 = vmatprep.subr.mxu0 0.0
    %784 = vmatpush2.xpose.msra.mxu0 0.0
    %785 = vmatprep.subr.mxu0 0.0
    %786 = vmatpush2.xpose.msra.mxu0 0.0
    %787 = vmatprep.subr.mxu0 0.0
    %788 = vmatpush2.xpose.msra.mxu0 0.0
    %789 = vmatprep.subr.mxu0 0.0
    %790 = vmatpush2.xpose.msra.mxu0 0.0
    %791 = vmatprep.subr.mxu0 0.0
    %792 = vmatpush2.xpose.msra.mxu0 0.0
    %793 = vmatprep.subr.mxu0 0.0
    %794 = vmatpush2.xpose.msra.mxu0 0.0
    %795 = vmatprep.subr.mxu0 0.0
    %796 = vmatpush2.xpose.msra.mxu0 0.0
    %797 = vmatprep.subr.mxu0 0.0
    %798 = vmatpush2.xpose.msra.mxu0 0.0
    %799 = vmatprep.subr.mxu0 0.0
    %800 = vmatpush2.xpose.msra.mxu0 0.0
    %801 = vmatprep.subr.mxu0 0.0
    %802 = vmatpush2.xpose.msra.mxu0 0.0
    %803 = vmatprep.subr.mxu0 0.0
    %804 = vmatpush2.xpose.msra.mxu0 0.0
    %805 = vmatprep.subr.mxu0 0.0
    %806 = vmatpush2.xpose.msra.mxu0 0.0
    %807 = vmatprep.subr.mxu0 0.0
    %808 = vmatpush2.xpose.msra.mxu0 0.0
    %809 = vmatprep.subr.mxu0 0.0
    %810 = vmatpush2.xpose.msra.mxu0 0.0
    %811 = vmatprep.subr.mxu0 0.0
    %812 = vmatpush2.xpose.msra.mxu0 0.0
    %813 = vmatprep.subr.mxu0 0.0
    %814 = vmatpush2.xpose.msra.mxu0 0.0
    %815 = vmatprep.mubr.f32.mxu0 0.0
    %816 = vmatmul.mubr.f32.gmra.mxu0 %v747
    %v817 = vpop.f32.mrf.mxu0
    %v818 = vadd.f32 %v743, %v817
    %v819 = vpop.f32.mrf.mxu0
    %820 = vdwg.mxu0
    %v821 = vsel %vm482, %v818, -inf
    %822 = vmax.xlane.f32.xlu0 %v821
    %v823 = vpop.xlane.xlu0 %822
    %v824 = vsub.f32 %v818, %v823
    %v825 = vmul.f32 %v824, 1.442695
    %v826 = vpow.pop %v825
    %v827 = vsel %vm482, %v826, 0.0
    %828 = vadd.xlane.f32.xlu0 %v827
    %v829 = vpop.xlane.xlu0 %828
    %v830 = vrcp.pop %v829
    %v831 = vmul.f32 %v826, %v830
    %832 = vrot.lane.b32.xlu0 %v397, 64
    %v833 = vpop.permute.xlu0 %832
    %v836 = vsel %vm482, %v831, 0
    %838 = vmatprep.subr.mxu0 0.0
    %839 = vmatpush1.msra.mxu0 0.0
    %840 = vmatprep.subr.mxu0 0.0
    %841 = vmatpush1.msra.mxu0 0.0
    %842 = vmatprep.subr.mxu0 0.0
    %843 = vmatpush1.msra.mxu0 0.0
    %844 = vmatprep.subr.mxu0 0.0
    %845 = vmatpush1.msra.mxu0 0.0
    %846 = vmatprep.subr.mxu0 0.0
    %847 = vmatpush1.msra.mxu0 0.0
    %848 = vmatprep.subr.mxu0 0.0
    %849 = vmatpush1.msra.mxu0 0.0
    %850 = vmatprep.subr.mxu0 0.0
    %851 = vmatpush1.msra.mxu0 0.0
    %852 = vmatprep.subr.mxu0 0.0
    %853 = vmatpush1.msra.mxu0 0.0
    %854 = vmatprep.subr.mxu0 0.0
    %855 = vmatpush1.msra.mxu0 0.0
    %856 = vmatprep.subr.mxu0 0.0
    %857 = vmatpush1.msra.mxu0 0.0
    %858 = vmatprep.subr.mxu0 0.0
    %859 = vmatpush1.msra.mxu0 0.0
    %860 = vmatprep.subr.mxu0 0.0
    %861 = vmatpush1.msra.mxu0 0.0
    %862 = vmatprep.subr.mxu0 0.0
    %863 = vmatpush1.msra.mxu0 0.0
    %864 = vmatprep.subr.mxu0 0.0
    %865 = vmatpush1.msra.mxu0 0.0
    %866 = vmatprep.subr.mxu0 0.0
    %867 = vmatpush1.msra.mxu0 0.0
    %868 = vmatprep.subr.mxu0 0.0
    %869 = vmatpush1.msra.mxu0 %v833
    %870 = vmatprep.subr.mxu0 0.0
    %871 = vmatpush2.msra.mxu0 0.0
    %872 = vmatprep.subr.mxu0 0.0
    %873 = vmatpush2.msra.mxu0 0.0
    %874 = vmatprep.subr.mxu0 0.0
    %875 = vmatpush2.msra.mxu0 0.0
    %876 = vmatprep.subr.mxu0 0.0
    %877 = vmatpush2.msra.mxu0 0.0
    %878 = vmatprep.subr.mxu0 0.0
    %879 = vmatpush2.msra.mxu0 0.0
    %880 = vmatprep.subr.mxu0 0.0
    %881 = vmatpush2.msra.mxu0 0.0
    %882 = vmatprep.subr.mxu0 0.0
    %883 = vmatpush2.msra.mxu0 0.0
    %884 = vmatprep.subr.mxu0 0.0
    %885 = vmatpush2.msra.mxu0 0.0
    %886 = vmatprep.subr.mxu0 0.0
    %887 = vmatpush2.msra.mxu0 0.0
    %888 = vmatprep.subr.mxu0 0.0
    %889 = vmatpush2.msra.mxu0 0.0
    %890 = vmatprep.subr.mxu0 0.0
    %891 = vmatpush2.msra.mxu0 0.0
    %892 = vmatprep.subr.mxu0 0.0
    %893 = vmatpush2.msra.mxu0 0.0
    %894 = vmatprep.subr.mxu0 0.0
    %895 = vmatpush2.msra.mxu0 0.0
    %896 = vmatprep.subr.mxu0 0.0
    %897 = vmatpush2.msra.mxu0 0.0
    %898 = vmatprep.subr.mxu0 0.0
    %899 = vmatpush2.msra.mxu0 0.0
    %900 = vmatprep.subr.mxu0 0.0
    %901 = vmatpush2.msra.mxu0 0.0
    %902 = vmatprep.mubr.f32.mxu0 0.0
    %903 = vmatmul.mubr.f32.gmra.mxu0 %v836
    %v904 = vpop.f32.mrf.mxu0
    %v905 = vadd.f32 0.0, %v904
    %v906 = vpop.f32.mrf.mxu0
    %907 = vdwg.mxu0
    %908 = vrot.lane.b32.xlu0 %v397, 112
    %v909 = vpop.permute.xlu0 %908
    %910 = vrot.lane.b32.xlu0 %v397, 80
    %v911 = vpop.permute.xlu0 %910
    %v912 = vsel %vm407, %v909, 0
    %v914 = vsel %vm407, %v911, 0
    %916 = vmatprep.subr.mxu0 0.0
    %917 = vmatpush1.xpose.msra.mxu0 0.0
    %918 = vmatprep.subr.mxu0 0.0
    %919 = vmatpush1.xpose.msra.mxu0 0.0
    %920 = vmatprep.subr.mxu0 0.0
    %921 = vmatpush1.xpose.msra.mxu0 0.0
    %922 = vmatprep.subr.mxu0 0.0
    %923 = vmatpush1.xpose.msra.mxu0 0.0
    %924 = vmatprep.subr.mxu0 0.0
    %925 = vmatpush1.xpose.msra.mxu0 0.0
    %926 = vmatprep.subr.mxu0 0.0
    %927 = vmatpush1.xpose.msra.mxu0 0.0
    %928 = vmatprep.subr.mxu0 0.0
    %929 = vmatpush1.xpose.msra.mxu0 0.0
    %930 = vmatprep.subr.mxu0 0.0
    %931 = vmatpush1.xpose.msra.mxu0 0.0
    %932 = vmatprep.subr.mxu0 0.0
    %933 = vmatpush1.xpose.msra.mxu0 0.0
    %934 = vmatprep.subr.mxu0 0.0
    %935 = vmatpush1.xpose.msra.mxu0 0.0
    %936 = vmatprep.subr.mxu0 0.0
    %937 = vmatpush1.xpose.msra.mxu0 0.0
    %938 = vmatprep.subr.mxu0 0.0
    %939 = vmatpush1.xpose.msra.mxu0 0.0
    %940 = vmatprep.subr.mxu0 0.0
    %941 = vmatpush1.xpose.msra.mxu0 0.0
    %942 = vmatprep.subr.mxu0 0.0
    %943 = vmatpush1.xpose.msra.mxu0 0.0
    %944 = vmatprep.subr.mxu0 0.0
    %945 = vmatpush1.xpose.msra.mxu0 0.0
    %946 = vmatprep.subr.mxu0 0.0
    %947 = vmatpush1.xpose.msra.mxu0 %v914
    %948 = vmatprep.subr.mxu0 0.0
    %949 = vmatpush2.xpose.msra.mxu0 0.0
    %950 = vmatprep.subr.mxu0 0.0
    %951 = vmatpush2.xpose.msra.mxu0 0.0
    %952 = vmatprep.subr.mxu0 0.0
    %953 = vmatpush2.xpose.msra.mxu0 0.0
    %954 = vmatprep.subr.mxu0 0.0
    %955 = vmatpush2.xpose.msra.mxu0 0.0
    %956 = vmatprep.subr.mxu0 0.0
    %957 = vmatpush2.xpose.msra.mxu0 0.0
    %958 = vmatprep.subr.mxu0 0.0
    %959 = vmatpush2.xpose.msra.mxu0 0.0
    %960 = vmatprep.subr.mxu0 0.0
    %961 = vmatpush2.xpose.msra.mxu0 0.0
    %962 = vmatprep.subr.mxu0 0.0
    %963 = vmatpush2.xpose.msra.mxu0 0.0
    %964 = vmatprep.subr.mxu0 0.0
    %965 = vmatpush2.xpose.msra.mxu0 0.0
    %966 = vmatprep.subr.mxu0 0.0
    %967 = vmatpush2.xpose.msra.mxu0 0.0
    %968 = vmatprep.subr.mxu0 0.0
    %969 = vmatpush2.xpose.msra.mxu0 0.0
    %970 = vmatprep.subr.mxu0 0.0
    %971 = vmatpush2.xpose.msra.mxu0 0.0
    %972 = vmatprep.subr.mxu0 0.0
    %973 = vmatpush2.xpose.msra.mxu0 0.0
    %974 = vmatprep.subr.mxu0 0.0
    %975 = vmatpush2.xpose.msra.mxu0 0.0
    %976 = vmatprep.subr.mxu0 0.0
    %977 = vmatpush2.xpose.msra.mxu0 0.0
    %978 = vmatprep.subr.mxu0 0.0
    %979 = vmatpush2.xpose.msra.mxu0 0.0
    %980 = vmatprep.mubr.f32.mxu0 0.0
    %981 = vmatmul.mubr.f32.gmra.mxu0 %v912
    %v982 = vpop.f32.mrf.mxu0
    %v983 = vadd.f32 %v743, %v982
    %v984 = vpop.f32.mrf.mxu0
    %985 = vdwg.mxu0
    %v986 = vsel %vm482, %v983, -inf
    %987 = vmax.xlane.f32.xlu0 %v986
    %v988 = vpop.xlane.xlu0 %987
    %v989 = vsub.f32 %v983, %v988
    %v990 = vmul.f32 %v989, 1.442695
    %v991 = vpow.pop %v990
    %v992 = vsel %vm482, %v991, 0.0
    %993 = vadd.xlane.f32.xlu0 %v992
    %v994 = vpop.xlane.xlu0 %993
    %v995 = vrcp.pop %v994
    %v996 = vmul.f32 %v991, %v995
    %997 = vrot.lane.b32.xlu0 %v397, 48
    %v998 = vpop.permute.xlu0 %997
    %v1001 = vsel %vm482, %v996, 0
    %1003 = vmatprep.subr.mxu0 0.0
    %1004 = vmatpush1.msra.mxu0 0.0
    %1005 = vmatprep.subr.mxu0 0.0
    %1006 = vmatpush1.msra.mxu0 0.0
    %1007 = vmatprep.subr.mxu0 0.0
    %1008 = vmatpush1.msra.mxu0 0.0
    %1009 = vmatprep.subr.mxu0 0.0
    %1010 = vmatpush1.msra.mxu0 0.0
    %1011 = vmatprep.subr.mxu0 0.0
    %1012 = vmatpush1.msra.mxu0 0.0
    %1013 = vmatprep.subr.mxu0 0.0
    %1014 = vmatpush1.msra.mxu0 0.0
    %1015 = vmatprep.subr.mxu0 0.0
    %1016 = vmatpush1.msra.mxu0 0.0
    %1017 = vmatprep.subr.mxu0 0.0
    %1018 = vmatpush1.msra.mxu0 0.0
    %1019 = vmatprep.subr.mxu0 0.0
    %1020 = vmatpush1.msra.mxu0 0.0
    %1021 = vmatprep.subr.mxu0 0.0
    %1022 = vmatpush1.msra.mxu0 0.0
    %1023 = vmatprep.subr.mxu0 0.0
    %1024 = vmatpush1.msra.mxu0 0.0
    %1025 = vmatprep.subr.mxu0 0.0
    %1026 = vmatpush1.msra.mxu0 0.0
    %1027 = vmatprep.subr.mxu0 0.0
    %1028 = vmatpush1.msra.mxu0 0.0
    %1029 = vmatprep.subr.mxu0 0.0
    %1030 = vmatpush1.msra.mxu0 0.0
    %1031 = vmatprep.subr.mxu0 0.0
    %1032 = vmatpush1.msra.mxu0 0.0
    %1033 = vmatprep.subr.mxu0 0.0
    %1034 = vmatpush1.msra.mxu0 %v998
    %1035 = vmatprep.subr.mxu0 0.0
    %1036 = vmatpush2.msra.mxu0 0.0
    %1037 = vmatprep.subr.mxu0 0.0
    %1038 = vmatpush2.msra.mxu0 0.0
    %1039 = vmatprep.subr.mxu0 0.0
    %1040 = vmatpush2.msra.mxu0 0.0
    %1041 = vmatprep.subr.mxu0 0.0
    %1042 = vmatpush2.msra.mxu0 0.0
    %1043 = vmatprep.subr.mxu0 0.0
    %1044 = vmatpush2.msra.mxu0 0.0
    %1045 = vmatprep.subr.mxu0 0.0
    %1046 = vmatpush2.msra.mxu0 0.0
    %1047 = vmatprep.subr.mxu0 0.0
    %1048 = vmatpush2.msra.mxu0 0.0
    %1049 = vmatprep.subr.mxu0 0.0
    %1050 = vmatpush2.msra.mxu0 0.0
    %1051 = vmatprep.subr.mxu0 0.0
    %1052 = vmatpush2.msra.mxu0 0.0
    %1053 = vmatprep.subr.mxu0 0.0
    %1054 = vmatpush2.msra.mxu0 0.0
    %1055 = vmatprep.subr.mxu0 0.0
    %1056 = vmatpush2.msra.mxu0 0.0
    %1057 = vmatprep.subr.mxu0 0.0
    %1058 = vmatpush2.msra.mxu0 0.0
    %1059 = vmatprep.subr.mxu0 0.0
    %1060 = vmatpush2.msra.mxu0 0.0
    %1061 = vmatprep.subr.mxu0 0.0
    %1062 = vmatpush2.msra.mxu0 0.0
    %1063 = vmatprep.subr.mxu0 0.0
    %1064 = vmatpush2.msra.mxu0 0.0
    %1065 = vmatprep.subr.mxu0 0.0
    %1066 = vmatpush2.msra.mxu0 0.0
    %1067 = vmatprep.mubr.f32.mxu0 0.0
    %1068 = vmatmul.mubr.f32.gmra.mxu0 %v1001
    %v1069 = vpop.f32.mrf.mxu0
    %v1070 = vadd.f32 0.0, %v1069
    %v1071 = vpop.f32.mrf.mxu0
    %1072 = vdwg.mxu0
    %1074 = vrot.lane.b32.xlu0 %v1070, 16
    %v1075 = vpop.permute.xlu0 %1074
    %v1077 = vsel %vm407, %v905, %v1075
    %v1078 = vld [vmem:[%s6] sm:$0xff]
    %v1079 = vld [vmem:[%s6 + $0x8] sm:$0xff]
    %v1080 = vld [vmem:[%s6 + $0x10] sm:$0xff]
    %v1081 = vld [vmem:[%s6 + $0x18] sm:$0xff]
    %v1082 = vld [vmem:[#allocation11] sm:$0x1]
    %v1084 = vlaneseq
    %v1085 = vshrl.u32 %v1084, 7
    %v1086 = vsub.s32 0, %v1085
    %v1087 = vrot.slane %v1082, %v1086
    %v1090 = vsel %vm263, %v739, 0
    %v1093 = vsel %vm263, %v1077, 0
    %1095 = vmatprep.subr.mxu0 0.0
    %1096 = vmatpush1.msra.mxu0 0.0
    %1097 = vmatprep.subr.mxu0 0.0
    %1098 = vmatpush1.msra.mxu0 0.0
    %1099 = vmatprep.subr.mxu0 0.0
    %1100 = vmatpush1.msra.mxu0 0.0
    %1101 = vmatprep.subr.mxu0 0.0
    %1102 = vmatpush1.msra.mxu0 0.0
    %1103 = vmatprep.subr.mxu0 0.0
    %1104 = vmatpush1.msra.mxu0 0.0
    %1105 = vmatprep.subr.mxu0 0.0
    %1106 = vmatpush1.msra.mxu0 0.0
    %1107 = vmatprep.subr.mxu0 0.0
    %1108 = vmatpush1.msra.mxu0 0.0
    %1109 = vmatprep.subr.mxu0 0.0
    %1110 = vmatpush1.msra.mxu0 0.0
    %1111 = vmatprep.subr.mxu0 0.0
    %1112 = vmatpush1.msra.mxu0 0.0
    %1113 = vmatprep.subr.mxu0 0.0
    %1114 = vmatpush1.msra.mxu0 0.0
    %1115 = vmatprep.subr.mxu0 0.0
    %1116 = vmatpush1.msra.mxu0 0.0
    %1117 = vmatprep.subr.mxu0 0.0
    %1118 = vmatpush1.msra.mxu0 0.0
    %1119 = vmatprep.subr.mxu0 0.0
    %1120 = vmatpush1.msra.mxu0 %v1081
    %1121 = vmatprep.subr.mxu0 0.0
    %1122 = vmatpush1.msra.mxu0 %v1080
    %1123 = vmatprep.subr.mxu0 0.0
    %1124 = vmatpush1.msra.mxu0 %v1079
    %1125 = vmatprep.subr.mxu0 0.0
    %1126 = vmatpush1.msra.mxu0 %v1078
    %1127 = vmatprep.subr.mxu0 0.0
    %1128 = vmatpush2.msra.mxu0 0.0
    %1129 = vmatprep.subr.mxu0 0.0
    %1130 = vmatpush2.msra.mxu0 0.0
    %1131 = vmatprep.subr.mxu0 0.0
    %1132 = vmatpush2.msra.mxu0 0.0
    %1133 = vmatprep.subr.mxu0 0.0
    %1134 = vmatpush2.msra.mxu0 0.0
    %1135 = vmatprep.subr.mxu0 0.0
    %1136 = vmatpush2.msra.mxu0 0.0
    %1137 = vmatprep.subr.mxu0 0.0
    %1138 = vmatpush2.msra.mxu0 0.0
    %1139 = vmatprep.subr.mxu0 0.0
    %1140 = vmatpush2.msra.mxu0 0.0
    %1141 = vmatprep.subr.mxu0 0.0
    %1142 = vmatpush2.msra.mxu0 0.0
    %1143 = vmatprep.subr.mxu0 0.0
    %1144 = vmatpush2.msra.mxu0 0.0
    %1145 = vmatprep.subr.mxu0 0.0
    %1146 = vmatpush2.msra.mxu0 0.0
    %1147 = vmatprep.subr.mxu0 0.0
    %1148 = vmatpush2.msra.mxu0 0.0
    %1149 = vmatprep.subr.mxu0 0.0
    %1150 = vmatpush2.msra.mxu0 0.0
    %1151 = vmatprep.subr.mxu0 0.0
    %1152 = vmatpush2.msra.mxu0 0.0
    %1153 = vmatprep.subr.mxu0 0.0
    %1154 = vmatpush2.msra.mxu0 0.0
    %1155 = vmatprep.subr.mxu0 0.0
    %1156 = vmatpush2.msra.mxu0 0.0
    %1157 = vmatprep.subr.mxu0 0.0
    %1158 = vmatpush2.msra.mxu0 0.0
    %1159 = vmatprep.mubr.f32.mxu0 0.0
    %1160 = vmatmul.mubr.f32.gmra.mxu0 %v1090
    %v1161 = vpop.f32.mrf.mxu0
    %v1162 = vadd.f32 %v1087, %v1161
    %v1163 = vpop.f32.mrf.mxu0
    %1164 = vmatprep.mubr.f32.mxu0 0.0
    %1165 = vmatmul.mubr.f32.gmra.mxu0 %v1093
    %v1166 = vpop.f32.mrf.mxu0
    %v1167 = vadd.f32 %v1087, %v1166
    %v1168 = vpop.f32.mrf.mxu0
    %1169 = vdwg.mxu0
    %v1170 = vadd.f32 %v1162, %v305
    %v1171 = vadd.f32 %v1167, %v306
    %v1172 = vld [vmem:[#allocation13] sm:$0x1]
    %v1173 = vld [vmem:[#allocation14] sm:$0x1]
    %v1174 = vsel %vm263, %v1170, 0.0
    %1175 = vadd.xlane.f32.xlu0 %v1174
    %v1176 = vpop.xlane.xlu0 %1175
    %v1177 = vsel %vm263, %v1171, 0.0
    %1178 = vadd.xlane.f32.xlu0 %v1177
    %v1179 = vpop.xlane.xlu0 %1178
    %v1180 = vmul.f32 %v1176, %v270
    %v1181 = vmul.f32 %v1179, %v270
    %v1182 = vsub.f32 %v1170, %v1180
    %v1183 = vsub.f32 %v1171, %v1181
    %v1184 = vmul.f32 %v1182, %v1182
    %v1185 = vmul.f32 %v1183, %v1183
    %v1186 = vsel %vm263, %v1184, 0.0
    %1187 = vadd.xlane.f32.xlu0 %v1186
    %v1188 = vpop.xlane.xlu0 %1187
    %v1189 = vsel %vm263, %v1185, 0.0
    %1190 = vadd.xlane.f32.xlu0 %v1189
    %v1191 = vpop.xlane.xlu0 %1190
    %v1192 = vmul.f32 %v1188, %v270
    %v1193 = vmul.f32 %v1191, %v270
    %v1194 = vadd.f32 %v1192, 1e-12
    %v1195 = vadd.f32 %v1193, 1e-12
    %v1196 = vrsqrt.pop %v1194
    %v1197 = vrsqrt.pop %v1195
    %v1198 = vmul.f32 %v1182, %v1196
    %v1199 = vmul.f32 %v1183, %v1197
    %v1201 = vlaneseq
    %v1202 = vshrl.u32 %v1201, 7
    %v1203 = vsub.s32 0, %v1202
    %v1204 = vrot.slane %v1172, %v1203
    %v1206 = vmul.f32 %v1198, %v1204
    %v1207 = vmul.f32 %v1199, %v1204
    %v1209 = vlaneseq
    %v1210 = vshrl.u32 %v1209, 7
    %v1211 = vsub.s32 0, %v1210
    %v1212 = vrot.slane %v1173, %v1211
    %v1214 = vadd.f32 %v1206, %v1212
    %v1215 = vadd.f32 %v1207, %v1212
    %v1216 = vld [vmem:[%s10] sm:$0xff]
    %v1217 = vld [vmem:[%s10 + $0x8] sm:$0xff]
    %v1218 = vld [vmem:[%s10 + $0x10] sm:$0xff]
    %v1219 = vld [vmem:[%s10 + $0x18] sm:$0xff]
    %v1220 = vld [vmem:[#allocation16] sm:$0x1]
    %v1222 = vlaneseq
    %v1223 = vshrl.u32 %v1222, 7
    %v1224 = vsub.s32 0, %v1223
    %v1225 = vrot.slane %v1220, %v1224
    %v1228 = vsel %vm263, %v1214, 0
    %v1231 = vsel %vm263, %v1215, 0
    %1233 = vmatprep.subr.mxu0 0.0
    %1234 = vmatpush1.msra.mxu0 0.0
    %1235 = vmatprep.subr.mxu0 0.0
    %1236 = vmatpush1.msra.mxu0 0.0
    %1237 = vmatprep.subr.mxu0 0.0
    %1238 = vmatpush1.msra.mxu0 0.0
    %1239 = vmatprep.subr.mxu0 0.0
    %1240 = vmatpush1.msra.mxu0 0.0
    %1241 = vmatprep.subr.mxu0 0.0
    %1242 = vmatpush1.msra.mxu0 0.0
    %1243 = vmatprep.subr.mxu0 0.0
    %1244 = vmatpush1.msra.mxu0 0.0
    %1245 = vmatprep.subr.mxu0 0.0
    %1246 = vmatpush1.msra.mxu0 0.0
    %1247 = vmatprep.subr.mxu0 0.0
    %1248 = vmatpush1.msra.mxu0 0.0
    %1249 = vmatprep.subr.mxu0 0.0
    %1250 = vmatpush1.msra.mxu0 0.0
    %1251 = vmatprep.subr.mxu0 0.0
    %1252 = vmatpush1.msra.mxu0 0.0
    %1253 = vmatprep.subr.mxu0 0.0
    %1254 = vmatpush1.msra.mxu0 0.0
    %1255 = vmatprep.subr.mxu0 0.0
    %1256 = vmatpush1.msra.mxu0 0.0
    %1257 = vmatprep.subr.mxu0 0.0
    %1258 = vmatpush1.msra.mxu0 %v1219
    %1259 = vmatprep.subr.mxu0 0.0
    %1260 = vmatpush1.msra.mxu0 %v1218
    %1261 = vmatprep.subr.mxu0 0.0
    %1262 = vmatpush1.msra.mxu0 %v1217
    %1263 = vmatprep.subr.mxu0 0.0
    %1264 = vmatpush1.msra.mxu0 %v1216
    %1265 = vmatprep.subr.mxu0 0.0
    %1266 = vmatpush2.msra.mxu0 0.0
    %1267 = vmatprep.subr.mxu0 0.0
    %1268 = vmatpush2.msra.mxu0 0.0
    %1269 = vmatprep.subr.mxu0 0.0
    %1270 = vmatpush2.msra.mxu0 0.0
    %1271 = vmatprep.subr.mxu0 0.0
    %1272 = vmatpush2.msra.mxu0 0.0
    %1273 = vmatprep.subr.mxu0 0.0
    %1274 = vmatpush2.msra.mxu0 0.0
    %1275 = vmatprep.subr.mxu0 0.0
    %1276 = vmatpush2.msra.mxu0 0.0
    %1277 = vmatprep.subr.mxu0 0.0
    %1278 = vmatpush2.msra.mxu0 0.0
    %1279 = vmatprep.subr.mxu0 0.0
    %1280 = vmatpush2.msra.mxu0 0.0
    %1281 = vmatprep.subr.mxu0 0.0
    %1282 = vmatpush2.msra.mxu0 0.0
    %1283 = vmatprep.subr.mxu0 0.0
    %1284 = vmatpush2.msra.mxu0 0.0
    %1285 = vmatprep.subr.mxu0 0.0
    %1286 = vmatpush2.msra.mxu0 0.0
    %1287 = vmatprep.subr.mxu0 0.0
    %1288 = vmatpush2.msra.mxu0 0.0
    %1289 = vmatprep.subr.mxu0 0.0
    %1290 = vmatpush2.msra.mxu0 0.0
    %1291 = vmatprep.subr.mxu0 0.0
    %1292 = vmatpush2.msra.mxu0 0.0
    %1293 = vmatprep.subr.mxu0 0.0
    %1294 = vmatpush2.msra.mxu0 0.0
    %1295 = vmatprep.subr.mxu0 0.0
    %1296 = vmatpush2.msra.mxu0 0.0
    %1297 = vmatprep.mubr.f32.mxu0 0.0
    %1298 = vmatmul.mubr.f32.gmra.mxu0 %v1228
    %v1299 = vpop.f32.mrf.mxu0
    %v1300 = vadd.f32 %v1225, %v1299
    %v1301 = vpop.f32.mrf.mxu0
    %1302 = vmatprep.mubr.f32.mxu0 0.0
    %1303 = vmatmul.mubr.f32.gmra.mxu0 %v1231
    %v1304 = vpop.f32.mrf.mxu0
    %v1305 = vadd.f32 %v1225, %v1304
    %v1306 = vpop.f32.mrf.mxu0
    %1307 = vdwg.mxu0
    %v1308 = vmul.f32 %v1300, 0.5
    %v1309 = vmul.f32 %v1305, 0.5
    %v1310 = vmul.f32 %v1300, 0.044715
    %v1311 = vmul.f32 %v1305, 0.044715
    %v1312 = vmul.f32 %v1310, %v1300
    %v1313 = vmul.f32 %v1311, %v1305
    %v1314 = vmul.f32 %v1312, %v1300
    %v1315 = vmul.f32 %v1313, %v1305
    %v1316 = vadd.f32 %v1300, %v1314
    %v1317 = vadd.f32 %v1305, %v1315
    %v1318 = vmul.f32 %v1316, 0.7978846
    %v1319 = vmul.f32 %v1317, 0.7978846
    %v1320 = vtanh.pop %v1318
    %v1321 = vtanh.pop %v1319
    %v1322 = vadd.f32 %v1320, 1.0
    %v1323 = vadd.f32 %v1321, 1.0
    %v1324 = vmul.f32 %v1308, %v1322
    %v1325 = vmul.f32 %v1309, %v1323
    %v1326 = vld [vmem:[%s12] sm:$0xff]
    %v1327 = vld [vmem:[%s12 + $0x8] sm:$0xff]
    %v1328 = vld [vmem:[%s12 + $0x10] sm:$0xff]
    %v1329 = vld [vmem:[%s12 + $0x18] sm:$0xff]
    %v1330 = vld [vmem:[%s12 + $0x20] sm:$0xff]
    %v1331 = vld [vmem:[%s12 + $0x28] sm:$0xff]
    %v1332 = vld [vmem:[%s12 + $0x30] sm:$0xff]
    %v1333 = vld [vmem:[%s12 + $0x38] sm:$0xff]
    %v1334 = vld [vmem:[#allocation17] sm:$0x1]
    %v1336 = vlaneseq
    %v1337 = vshrl.u32 %v1336, 7
    %v1338 = vsub.s32 0, %v1337
    %v1339 = vrot.slane %v1334, %v1338
    %vm1341 = vcmask 523264
    %v1343 = vsel %vm1341, %v1324, 0
    %v1346 = vsel %vm1341, %v1325, 0
    %1348 = vmatprep.subr.mxu0 0.0
    %1349 = vmatpush1.msra.mxu0 0.0
    %1350 = vmatprep.subr.mxu0 0.0
    %1351 = vmatpush1.msra.mxu0 0.0
    %1352 = vmatprep.subr.mxu0 0.0
    %1353 = vmatpush1.msra.mxu0 0.0
    %1354 = vmatprep.subr.mxu0 0.0
    %1355 = vmatpush1.msra.mxu0 0.0
    %1356 = vmatprep.subr.mxu0 0.0
    %1357 = vmatpush1.msra.mxu0 0.0
    %1358 = vmatprep.subr.mxu0 0.0
    %1359 = vmatpush1.msra.mxu0 0.0
    %1360 = vmatprep.subr.mxu0 0.0
    %1361 = vmatpush1.msra.mxu0 0.0
    %1362 = vmatprep.subr.mxu0 0.0
    %1363 = vmatpush1.msra.mxu0 0.0
    %1364 = vmatprep.subr.mxu0 0.0
    %1365 = vmatpush1.msra.mxu0 %v1333
    %1366 = vmatprep.subr.mxu0 0.0
    %1367 = vmatpush1.msra.mxu0 %v1332
    %1368 = vmatprep.subr.mxu0 0.0
    %1369 = vmatpush1.msra.mxu0 %v1331
    %1370 = vmatprep.subr.mxu0 0.0
    %1371 = vmatpush1.msra.mxu0 %v1330
    %1372 = vmatprep.subr.mxu0 0.0
    %1373 = vmatpush1.msra.mxu0 %v1329
    %1374 = vmatprep.subr.mxu0 0.0
    %1375 = vmatpush1.msra.mxu0 %v1328
    %1376 = vmatprep.subr.mxu0 0.0
    %1377 = vmatpush1.msra.mxu0 %v1327
    %1378 = vmatprep.subr.mxu0 0.0
    %1379 = vmatpush1.msra.mxu0 %v1326
    %1380 = vmatprep.subr.mxu0 0.0
    %1381 = vmatpush2.msra.mxu0 0.0
    %1382 = vmatprep.subr.mxu0 0.0
    %1383 = vmatpush2.msra.mxu0 0.0
    %1384 = vmatprep.subr.mxu0 0.0
    %1385 = vmatpush2.msra.mxu0 0.0
    %1386 = vmatprep.subr.mxu0 0.0
    %1387 = vmatpush2.msra.mxu0 0.0
    %1388 = vmatprep.subr.mxu0 0.0
    %1389 = vmatpush2.msra.mxu0 0.0
    %1390 = vmatprep.subr.mxu0 0.0
    %1391 = vmatpush2.msra.mxu0 0.0
    %1392 = vmatprep.subr.mxu0 0.0
    %1393 = vmatpush2.msra.mxu0 0.0
    %1394 = vmatprep.subr.mxu0 0.0
    %1395 = vmatpush2.msra.mxu0 0.0
    %1396 = vmatprep.subr.mxu0 0.0
    %1397 = vmatpush2.msra.mxu0 0.0
    %1398 = vmatprep.subr.mxu0 0.0
    %1399 = vmatpush2.msra.mxu0 0.0
    %1400 = vmatprep.subr.mxu0 0.0
    %1401 = vmatpush2.msra.mxu0 0.0
    %1402 = vmatprep.subr.mxu0 0.0
    %1403 = vmatpush2.msra.mxu0 0.0
    %1404 = vmatprep.subr.mxu0 0.0
    %1405 = vmatpush2.msra.mxu0 0.0
    %1406 = vmatprep.subr.mxu0 0.0
    %1407 = vmatpush2.msra.mxu0 0.0
    %1408 = vmatprep.subr.mxu0 0.0
    %1409 = vmatpush2.msra.mxu0 0.0
    %1410 = vmatprep.subr.mxu0 0.0
    %1411 = vmatpush2.msra.mxu0 0.0
    %1412 = vmatprep.mubr.f32.mxu0 0.0
    %1413 = vmatmul.mubr.f32.gmra.mxu0 %v1343
    %v1414 = vpop.f32.mrf.mxu0
    %v1415 = vadd.f32 %v1339, %v1414
    %v1416 = vpop.f32.mrf.mxu0
    %1417 = vmatprep.mubr.f32.mxu0 0.0
    %1418 = vmatmul.mubr.f32.gmra.mxu0 %v1346
    %v1419 = vpop.f32.mrf.mxu0
    %v1420 = vadd.f32 %v1339, %v1419
    %v1421 = vpop.f32.mrf.mxu0
    %1422 = vdwg.mxu0
    %v1423 = vadd.f32 %v1415, %v1214
    %v1424 = vadd.f32 %v1420, %v1215
    %v1425 = vld [vmem:[#allocation19] sm:$0x1]
    %v1426 = vld [vmem:[#allocation20] sm:$0x1]
    %v1427 = vsel %vm263, %v1423, 0.0
    %1428 = vadd.xlane.f32.xlu0 %v1427
    %v1429 = vpop.xlane.xlu0 %1428
    %v1430 = vsel %vm263, %v1424, 0.0
    %1431 = vadd.xlane.f32.xlu0 %v1430
    %v1432 = vpop.xlane.xlu0 %1431
    %v1433 = vmul.f32 %v1429, %v270
    %v1434 = vmul.f32 %v1432, %v270
    %v1435 = vsub.f32 %v1423, %v1433
    %v1436 = vsub.f32 %v1424, %v1434
    %v1437 = vmul.f32 %v1435, %v1435
    %v1438 = vmul.f32 %v1436, %v1436
    %v1439 = vsel %vm263, %v1437, 0.0
    %1440 = vadd.xlane.f32.xlu0 %v1439
    %v1441 = vpop.xlane.xlu0 %1440
    %v1442 = vsel %vm263, %v1438, 0.0
    %1443 = vadd.xlane.f32.xlu0 %v1442
    %v1444 = vpop.xlane.xlu0 %1443
    %v1445 = vmul.f32 %v1441, %v270
    %v1446 = vmul.f32 %v1444, %v270
    %v1447 = vadd.f32 %v1445, 1e-12
    %v1448 = vadd.f32 %v1446, 1e-12
    %v1449 = vrsqrt.pop %v1447
    %v1450 = vrsqrt.pop %v1448
    %v1451 = vmul.f32 %v1435, %v1449
    %v1452 = vmul.f32 %v1436, %v1450
    %v1454 = vlaneseq
    %v1455 = vshrl.u32 %v1454, 7
    %v1456 = vsub.s32 0, %v1455
    %v1457 = vrot.slane %v1425, %v1456
    %v1459 = vmul.f32 %v1451, %v1457
    %v1460 = vmul.f32 %v1452, %v1457
    %v1462 = vlaneseq
    %v1463 = vshrl.u32 %v1462, 7
    %v1464 = vsub.s32 0, %v1463
    %v1465 = vrot.slane %v1426, %v1464
    %v1467 = vadd.f32 %v1459, %v1465
    %v1468 = vadd.f32 %v1460, %v1465
    %s1469 = scalar_lea.vmem %s4, 32
    %v1470 = vld [vmem:[%s1469] sm:$0xff]
    %v1471 = vld [vmem:[%s1469 + $0x8] sm:$0xff]
    %v1472 = vld [vmem:[%s1469 + $0x10] sm:$0xff]
    %v1473 = vld [vmem:[%s1469 + $0x18] sm:$0xff]
    %s1474 = scalar_lea.vmem [#allocation10], 1
    %v1475 = vld [vmem:[%s1474] sm:$0x1]
    %v1477 = vlaneseq
    %v1478 = vshrl.u32 %v1477, 7
    %v1479 = vsub.s32 0, %v1478
    %v1480 = vrot.slane %v1475, %v1479
    %v1483 = vsel %vm263, %v1467, 0
    %v1486 = vsel %vm263, %v1468, 0
    %1488 = vmatprep.subr.mxu0 0.0
    %1489 = vmatpush1.msra.mxu0 0.0
    %1490 = vmatprep.subr.mxu0 0.0
    %1491 = vmatpush1.msra.mxu0 0.0
    %1492 = vmatprep.subr.mxu0 0.0
    %1493 = vmatpush1.msra.mxu0 0.0
    %1494 = vmatprep.subr.mxu0 0.0
    %1495 = vmatpush1.msra.mxu0 0.0
    %1496 = vmatprep.subr.mxu0 0.0
    %1497 = vmatpush1.msra.mxu0 0.0
    %1498 = vmatprep.subr.mxu0 0.0
    %1499 = vmatpush1.msra.mxu0 0.0
    %1500 = vmatprep.subr.mxu0 0.0
    %1501 = vmatpush1.msra.mxu0 0.0
    %1502 = vmatprep.subr.mxu0 0.0
    %1503 = vmatpush1.msra.mxu0 0.0
    %1504 = vmatprep.subr.mxu0 0.0
    %1505 = vmatpush1.msra.mxu0 0.0
    %1506 = vmatprep.subr.mxu0 0.0
    %1507 = vmatpush1.msra.mxu0 0.0
    %1508 = vmatprep.subr.mxu0 0.0
    %1509 = vmatpush1.msra.mxu0 0.0
    %1510 = vmatprep.subr.mxu0 0.0
    %1511 = vmatpush1.msra.mxu0 0.0
    %1512 = vmatprep.subr.mxu0 0.0
    %1513 = vmatpush1.msra.mxu0 %v1473
    %1514 = vmatprep.subr.mxu0 0.0
    %1515 = vmatpush1.msra.mxu0 %v1472
    %1516 = vmatprep.subr.mxu0 0.0
    %1517 = vmatpush1.msra.mxu0 %v1471
    %1518 = vmatprep.subr.mxu0 0.0
    %1519 = vmatpush1.msra.mxu0 %v1470
    %1520 = vmatprep.subr.mxu0 0.0
    %1521 = vmatpush2.msra.mxu0 0.0
    %1522 = vmatprep.subr.mxu0 0.0
    %1523 = vmatpush2.msra.mxu0 0.0
    %1524 = vmatprep.subr.mxu0 0.0
    %1525 = vmatpush2.msra.mxu0 0.0
    %1526 = vmatprep.subr.mxu0 0.0
    %1527 = vmatpush2.msra.mxu0 0.0
    %1528 = vmatprep.subr.mxu0 0.0
    %1529 = vmatpush2.msra.mxu0 0.0
    %1530 = vmatprep.subr.mxu0 0.0
    %1531 = vmatpush2.msra.mxu0 0.0
    %1532 = vmatprep.subr.mxu0 0.0
    %1533 = vmatpush2.msra.mxu0 0.0
    %1534 = vmatprep.subr.mxu0 0.0
    %1535 = vmatpush2.msra.mxu0 0.0
    %1536 = vmatprep.subr.mxu0 0.0
    %1537 = vmatpush2.msra.mxu0 0.0
    %1538 = vmatprep.subr.mxu0 0.0
    %1539 = vmatpush2.msra.mxu0 0.0
    %1540 = vmatprep.subr.mxu0 0.0
    %1541 = vmatpush2.msra.mxu0 0.0
    %1542 = vmatprep.subr.mxu0 0.0
    %1543 = vmatpush2.msra.mxu0 0.0
    %1544 = vmatprep.subr.mxu0 0.0
    %1545 = vmatpush2.msra.mxu0 0.0
    %1546 = vmatprep.subr.mxu0 0.0
    %1547 = vmatpush2.msra.mxu0 0.0
    %1548 = vmatprep.subr.mxu0 0.0
    %1549 = vmatpush2.msra.mxu0 0.0
    %1550 = vmatprep.subr.mxu0 0.0
    %1551 = vmatpush2.msra.mxu0 0.0
    %1552 = vmatprep.mubr.f32.mxu0 0.0
    %1553 = vmatmul.mubr.f32.gmra.mxu0 %v1483
    %v1554 = vpop.f32.mrf.mxu0
    %v1555 = vadd.f32 %v1480, %v1554
    %v1556 = vpop.f32.mrf.mxu0
    %1557 = vmatprep.mubr.f32.mxu0 0.0
    %1558 = vmatmul.mubr.f32.gmra.mxu0 %v1486
    %v1559 = vpop.f32.mrf.mxu0
    %v1560 = vadd.f32 %v1480, %v1559
    %v1561 = vpop.f32.mrf.mxu0
    %1562 = vdwg.mxu0
    %1564 = vrot.lane.b32.xlu0 %v1555, 96
    %v1565 = vpop.permute.xlu0 %1564
    %v1566 = vsel %vm407, %v1555, 0
    %v1568 = vsel %vm407, %v1565, 0
    %1570 = vmatprep.subr.mxu0 0.0
    %1571 = vmatpush1.xpose.msra.mxu0 0.0
    %1572 = vmatprep.subr.mxu0 0.0
    %1573 = vmatpush1.xpose.msra.mxu0 0.0
    %1574 = vmatprep.subr.mxu0 0.0
    %1575 = vmatpush1.xpose.msra.mxu0 0.0
    %1576 = vmatprep.subr.mxu0 0.0
    %1577 = vmatpush1.xpose.msra.mxu0 0.0
    %1578 = vmatprep.subr.mxu0 0.0
    %1579 = vmatpush1.xpose.msra.mxu0 0.0
    %1580 = vmatprep.subr.mxu0 0.0
    %1581 = vmatpush1.xpose.msra.mxu0 0.0
    %1582 = vmatprep.subr.mxu0 0.0
    %1583 = vmatpush1.xpose.msra.mxu0 0.0
    %1584 = vmatprep.subr.mxu0 0.0
    %1585 = vmatpush1.xpose.msra.mxu0 0.0
    %1586 = vmatprep.subr.mxu0 0.0
    %1587 = vmatpush1.xpose.msra.mxu0 0.0
    %1588 = vmatprep.subr.mxu0 0.0
    %1589 = vmatpush1.xpose.msra.mxu0 0.0
    %1590 = vmatprep.subr.mxu0 0.0
    %1591 = vmatpush1.xpose.msra.mxu0 0.0
    %1592 = vmatprep.subr.mxu0 0.0
    %1593 = vmatpush1.xpose.msra.mxu0 0.0
    %1594 = vmatprep.subr.mxu0 0.0
    %1595 = vmatpush1.xpose.msra.mxu0 0.0
    %1596 = vmatprep.subr.mxu0 0.0
    %1597 = vmatpush1.xpose.msra.mxu0 0.0
    %1598 = vmatprep.subr.mxu0 0.0
    %1599 = vmatpush1.xpose.msra.mxu0 0.0
    %1600 = vmatprep.subr.mxu0 0.0
    %1601 = vmatpush1.xpose.msra.mxu0 %v1568
    %1602 = vmatprep.subr.mxu0 0.0
    %1603 = vmatpush2.xpose.msra.mxu0 0.0
    %1604 = vmatprep.subr.mxu0 0.0
    %1605 = vmatpush2.xpose.msra.mxu0 0.0
    %1606 = vmatprep.subr.mxu0 0.0
    %1607 = vmatpush2.xpose.msra.mxu0 0.0
    %1608 = vmatprep.subr.mxu0 0.0
    %1609 = vmatpush2.xpose.msra.mxu0 0.0
    %1610 = vmatprep.subr.mxu0 0.0
    %1611 = vmatpush2.xpose.msra.mxu0 0.0
    %1612 = vmatprep.subr.mxu0 0.0
    %1613 = vmatpush2.xpose.msra.mxu0 0.0
    %1614 = vmatprep.subr.mxu0 0.0
    %1615 = vmatpush2.xpose.msra.mxu0 0.0
    %1616 = vmatprep.subr.mxu0 0.0
    %1617 = vmatpush2.xpose.msra.mxu0 0.0
    %1618 = vmatprep.subr.mxu0 0.0
    %1619 = vmatpush2.xpose.msra.mxu0 0.0
    %1620 = vmatprep.subr.mxu0 0.0
    %1621 = vmatpush2.xpose.msra.mxu0 0.0
    %1622 = vmatprep.subr.mxu0 0.0
    %1623 = vmatpush2.xpose.msra.mxu0 0.0
    %1624 = vmatprep.subr.mxu0 0.0
    %1625 = vmatpush2.xpose.msra.mxu0 0.0
    %1626 = vmatprep.subr.mxu0 0.0
    %1627 = vmatpush2.xpose.msra.mxu0 0.0
    %1628 = vmatprep.subr.mxu0 0.0
    %1629 = vmatpush2.xpose.msra.mxu0 0.0
    %1630 = vmatprep.subr.mxu0 0.0
    %1631 = vmatpush2.xpose.msra.mxu0 0.0
    %1632 = vmatprep.subr.mxu0 0.0
    %1633 = vmatpush2.xpose.msra.mxu0 0.0
    %1634 = vmatprep.mubr.f32.mxu0 0.0
    %1635 = vmatmul.mubr.f32.gmra.mxu0 %v1566
    %v1636 = vpop.f32.mrf.mxu0
    %v1637 = vadd.f32 %v403, %v1636
    %v1638 = vpop.f32.mrf.mxu0
    %1639 = vdwg.mxu0
    %v1640 = vsel %vm482, %v1637, -inf
    %1641 = vmax.xlane.f32.xlu0 %v1640
    %v1642 = vpop.xlane.xlu0 %1641
    %v1643 = vsub.f32 %v1637, %v1642
    %v1644 = vmul.f32 %v1643, 1.442695
    %v1645 = vpow.pop %v1644
    %v1646 = vsel %vm482, %v1645, 0.0
    %1647 = vadd.xlane.f32.xlu0 %v1646
    %v1648 = vpop.xlane.xlu0 %1647
    %v1649 = vrcp.pop %v1648
    %v1650 = vmul.f32 %v1645, %v1649
    %1651 = vrot.lane.b32.xlu0 %v1555, 64
    %v1652 = vpop.permute.xlu0 %1651
    %v1655 = vsel %vm482, %v1650, 0
    %1657 = vmatprep.subr.mxu0 0.0
    %1658 = vmatpush1.msra.mxu0 0.0
    %1659 = vmatprep.subr.mxu0 0.0
    %1660 = vmatpush1.msra.mxu0 0.0
    %1661 = vmatprep.subr.mxu0 0.0
    %1662 = vmatpush1.msra.mxu0 0.0
    %1663 = vmatprep.subr.mxu0 0.0
    %1664 = vmatpush1.msra.mxu0 0.0
    %1665 = vmatprep.subr.mxu0 0.0
    %1666 = vmatpush1.msra.mxu0 0.0
    %1667 = vmatprep.subr.mxu0 0.0
    %1668 = vmatpush1.msra.mxu0 0.0
    %1669 = vmatprep.subr.mxu0 0.0
    %1670 = vmatpush1.msra.mxu0 0.0
    %1671 = vmatprep.subr.mxu0 0.0
    %1672 = vmatpush1.msra.mxu0 0.0
    %1673 = vmatprep.subr.mxu0 0.0
    %1674 = vmatpush1.msra.mxu0 0.0
    %1675 = vmatprep.subr.mxu0 0.0
    %1676 = vmatpush1.msra.mxu0 0.0
    %1677 = vmatprep.subr.mxu0 0.0
    %1678 = vmatpush1.msra.mxu0 0.0
    %1679 = vmatprep.subr.mxu0 0.0
    %1680 = vmatpush1.msra.mxu0 0.0
    %1681 = vmatprep.subr.mxu0 0.0
    %1682 = vmatpush1.msra.mxu0 0.0
    %1683 = vmatprep.subr.mxu0 0.0
    %1684 = vmatpush1.msra.mxu0 0.0
    %1685 = vmatprep.subr.mxu0 0.0
    %1686 = vmatpush1.msra.mxu0 0.0
    %1687 = vmatprep.subr.mxu0 0.0
    %1688 = vmatpush1.msra.mxu0 %v1652
    %1689 = vmatprep.subr.mxu0 0.0
    %1690 = vmatpush2.msra.mxu0 0.0
    %1691 = vmatprep.subr.mxu0 0.0
    %1692 = vmatpush2.msra.mxu0 0.0
    %1693 = vmatprep.subr.mxu0 0.0
    %1694 = vmatpush2.msra.mxu0 0.0
    %1695 = vmatprep.subr.mxu0 0.0
    %1696 = vmatpush2.msra.mxu0 0.0
    %1697 = vmatprep.subr.mxu0 0.0
    %1698 = vmatpush2.msra.mxu0 0.0
    %1699 = vmatprep.subr.mxu0 0.0
    %1700 = vmatpush2.msra.mxu0 0.0
    %1701 = vmatprep.subr.mxu0 0.0
    %1702 = vmatpush2.msra.mxu0 0.0
    %1703 = vmatprep.subr.mxu0 0.0
    %1704 = vmatpush2.msra.mxu0 0.0
    %1705 = vmatprep.subr.mxu0 0.0
    %1706 = vmatpush2.msra.mxu0 0.0
    %1707 = vmatprep.subr.mxu0 0.0
    %1708 = vmatpush2.msra.mxu0 0.0
    %1709 = vmatprep.subr.mxu0 0.0
    %1710 = vmatpush2.msra.mxu0 0.0
    %1711 = vmatprep.subr.mxu0 0.0
    %1712 = vmatpush2.msra.mxu0 0.0
    %1713 = vmatprep.subr.mxu0 0.0
    %1714 = vmatpush2.msra.mxu0 0.0
    %1715 = vmatprep.subr.mxu0 0.0
    %1716 = vmatpush2.msra.mxu0 0.0
    %1717 = vmatprep.subr.mxu0 0.0
    %1718 = vmatpush2.msra.mxu0 0.0
    %1719 = vmatprep.subr.mxu0 0.0
    %1720 = vmatpush2.msra.mxu0 0.0
    %1721 = vmatprep.mubr.f32.mxu0 0.0
    %1722 = vmatmul.mubr.f32.gmra.mxu0 %v1655
    %v1723 = vpop.f32.mrf.mxu0
    %v1724 = vadd.f32 0.0, %v1723
    %v1725 = vpop.f32.mrf.mxu0
    %1726 = vdwg.mxu0
    %1727 = vrot.lane.b32.xlu0 %v1555, 112
    %v1728 = vpop.permute.xlu0 %1727
    %1729 = vrot.lane.b32.xlu0 %v1555, 80
    %v1730 = vpop.permute.xlu0 %1729
    %v1731 = vsel %vm407, %v1728, 0
    %v1733 = vsel %vm407, %v1730, 0
    %1735 = vmatprep.subr.mxu0 0.0
    %1736 = vmatpush1.xpose.msra.mxu0 0.0
    %1737 = vmatprep.subr.mxu0 0.0
    %1738 = vmatpush1.xpose.msra.mxu0 0.0
    %1739 = vmatprep.subr.mxu0 0.0
    %1740 = vmatpush1.xpose.msra.mxu0 0.0
    %1741 = vmatprep.subr.mxu0 0.0
    %1742 = vmatpush1.xpose.msra.mxu0 0.0
    %1743 = vmatprep.subr.mxu0 0.0
    %1744 = vmatpush1.xpose.msra.mxu0 0.0
    %1745 = vmatprep.subr.mxu0 0.0
    %1746 = vmatpush1.xpose.msra.mxu0 0.0
    %1747 = vmatprep.subr.mxu0 0.0
    %1748 = vmatpush1.xpose.msra.mxu0 0.0
    %1749 = vmatprep.subr.mxu0 0.0
    %1750 = vmatpush1.xpose.msra.mxu0 0.0
    %1751 = vmatprep.subr.mxu0 0.0
    %1752 = vmatpush1.xpose.msra.mxu0 0.0
    %1753 = vmatprep.subr.mxu0 0.0
    %1754 = vmatpush1.xpose.msra.mxu0 0.0
    %1755 = vmatprep.subr.mxu0 0.0
    %1756 = vmatpush1.xpose.msra.mxu0 0.0
    %1757 = vmatprep.subr.mxu0 0.0
    %1758 = vmatpush1.xpose.msra.mxu0 0.0
    %1759 = vmatprep.subr.mxu0 0.0
    %1760 = vmatpush1.xpose.msra.mxu0 0.0
    %1761 = vmatprep.subr.mxu0 0.0
    %1762 = vmatpush1.xpose.msra.mxu0 0.0
    %1763 = vmatprep.subr.mxu0 0.0
    %1764 = vmatpush1.xpose.msra.mxu0 0.0
    %1765 = vmatprep.subr.mxu0 0.0
    %1766 = vmatpush1.xpose.msra.mxu0 %v1733
    %1767 = vmatprep.subr.mxu0 0.0
    %1768 = vmatpush2.xpose.msra.mxu0 0.0
    %1769 = vmatprep.subr.mxu0 0.0
    %1770 = vmatpush2.xpose.msra.mxu0 0.0
    %1771 = vmatprep.subr.mxu0 0.0
    %1772 = vmatpush2.xpose.msra.mxu0 0.0
    %1773 = vmatprep.subr.mxu0 0.0
    %1774 = vmatpush2.xpose.msra.mxu0 0.0
    %1775 = vmatprep.subr.mxu0 0.0
    %1776 = vmatpush2.xpose.msra.mxu0 0.0
    %1777 = vmatprep.subr.mxu0 0.0
    %1778 = vmatpush2.xpose.msra.mxu0 0.0
    %1779 = vmatprep.subr.mxu0 0.0
    %1780 = vmatpush2.xpose.msra.mxu0 0.0
    %1781 = vmatprep.subr.mxu0 0.0
    %1782 = vmatpush2.xpose.msra.mxu0 0.0
    %1783 = vmatprep.subr.mxu0 0.0
    %1784 = vmatpush2.xpose.msra.mxu0 0.0
    %1785 = vmatprep.subr.mxu0 0.0
    %1786 = vmatpush2.xpose.msra.mxu0 0.0
    %1787 = vmatprep.subr.mxu0 0.0
    %1788 = vmatpush2.xpose.msra.mxu0 0.0
    %1789 = vmatprep.subr.mxu0 0.0
    %1790 = vmatpush2.xpose.msra.mxu0 0.0
    %1791 = vmatprep.subr.mxu0 0.0
    %1792 = vmatpush2.xpose.msra.mxu0 0.0
    %1793 = vmatprep.subr.mxu0 0.0
    %1794 = vmatpush2.xpose.msra.mxu0 0.0
    %1795 = vmatprep.subr.mxu0 0.0
    %1796 = vmatpush2.xpose.msra.mxu0 0.0
    %1797 = vmatprep.subr.mxu0 0.0
    %1798 = vmatpush2.xpose.msra.mxu0 0.0
    %1799 = vmatprep.mubr.f32.mxu0 0.0
    %1800 = vmatmul.mubr.f32.gmra.mxu0 %v1731
    %v1801 = vpop.f32.mrf.mxu0
    %v1802 = vadd.f32 %v403, %v1801
    %v1803 = vpop.f32.mrf.mxu0
    %1804 = vdwg.mxu0
    %v1805 = vsel %vm482, %v1802, -inf
    %1806 = vmax.xlane.f32.xlu0 %v1805
    %v1807 = vpop.xlane.xlu0 %1806
    %v1808 = vsub.f32 %v1802, %v1807
    %v1809 = vmul.f32 %v1808, 1.442695
    %v1810 = vpow.pop %v1809
    %v1811 = vsel %vm482, %v1810, 0.0
    %1812 = vadd.xlane.f32.xlu0 %v1811
    %v1813 = vpop.xlane.xlu0 %1812
    %v1814 = vrcp.pop %v1813
    %v1815 = vmul.f32 %v1810, %v1814
    %1816 = vrot.lane.b32.xlu0 %v1555, 48
    %v1817 = vpop.permute.xlu0 %1816
    %v1820 = vsel %vm482, %v1815, 0
    %1822 = vmatprep.subr.mxu0 0.0
    %1823 = vmatpush1.msra.mxu0 0.0
    %1824 = vmatprep.subr.mxu0 0.0
    %1825 = vmatpush1.msra.mxu0 0.0
    %1826 = vmatprep.subr.mxu0 0.0
    %1827 = vmatpush1.msra.mxu0 0.0
    %1828 = vmatprep.subr.mxu0 0.0
    %1829 = vmatpush1.msra.mxu0 0.0
    %1830 = vmatprep.subr.mxu0 0.0
    %1831 = vmatpush1.msra.mxu0 0.0
    %1832 = vmatprep.subr.mxu0 0.0
    %1833 = vmatpush1.msra.mxu0 0.0
    %1834 = vmatprep.subr.mxu0 0.0
    %1835 = vmatpush1.msra.mxu0 0.0
    %1836 = vmatprep.subr.mxu0 0.0
    %1837 = vmatpush1.msra.mxu0 0.0
    %1838 = vmatprep.subr.mxu0 0.0
    %1839 = vmatpush1.msra.mxu0 0.0
    %1840 = vmatprep.subr.mxu0 0.0
    %1841 = vmatpush1.msra.mxu0 0.0
    %1842 = vmatprep.subr.mxu0 0.0
    %1843 = vmatpush1.msra.mxu0 0.0
    %1844 = vmatprep.subr.mxu0 0.0
    %1845 = vmatpush1.msra.mxu0 0.0
    %1846 = vmatprep.subr.mxu0 0.0
    %1847 = vmatpush1.msra.mxu0 0.0
    %1848 = vmatprep.subr.mxu0 0.0
    %1849 = vmatpush1.msra.mxu0 0.0
    %1850 = vmatprep.subr.mxu0 0.0
    %1851 = vmatpush1.msra.mxu0 0.0
    %1852 = vmatprep.subr.mxu0 0.0
    %1853 = vmatpush1.msra.mxu0 %v1817
    %1854 = vmatprep.subr.mxu0 0.0
    %1855 = vmatpush2.msra.mxu0 0.0
    %1856 = vmatprep.subr.mxu0 0.0
    %1857 = vmatpush2.msra.mxu0 0.0
    %1858 = vmatprep.subr.mxu0 0.0
    %1859 = vmatpush2.msra.mxu0 0.0
    %1860 = vmatprep.subr.mxu0 0.0
    %1861 = vmatpush2.msra.mxu0 0.0
    %1862 = vmatprep.subr.mxu0 0.0
    %1863 = vmatpush2.msra.mxu0 0.0
    %1864 = vmatprep.subr.mxu0 0.0
    %1865 = vmatpush2.msra.mxu0 0.0
    %1866 = vmatprep.subr.mxu0 0.0
    %1867 = vmatpush2.msra.mxu0 0.0
    %1868 = vmatprep.subr.mxu0 0.0
    %1869 = vmatpush2.msra.mxu0 0.0
    %1870 = vmatprep.subr.mxu0 0.0
    %1871 = vmatpush2.msra.mxu0 0.0
    %1872 = vmatprep.subr.mxu0 0.0
    %1873 = vmatpush2.msra.mxu0 0.0
    %1874 = vmatprep.subr.mxu0 0.0
    %1875 = vmatpush2.msra.mxu0 0.0
    %1876 = vmatprep.subr.mxu0 0.0
    %1877 = vmatpush2.msra.mxu0 0.0
    %1878 = vmatprep.subr.mxu0 0.0
    %1879 = vmatpush2.msra.mxu0 0.0
    %1880 = vmatprep.subr.mxu0 0.0
    %1881 = vmatpush2.msra.mxu0 0.0
    %1882 = vmatprep.subr.mxu0 0.0
    %1883 = vmatpush2.msra.mxu0 0.0
    %1884 = vmatprep.subr.mxu0 0.0
    %1885 = vmatpush2.msra.mxu0 0.0
    %1886 = vmatprep.mubr.f32.mxu0 0.0
    %1887 = vmatmul.mubr.f32.gmra.mxu0 %v1820
    %v1888 = vpop.f32.mrf.mxu0
    %v1889 = vadd.f32 0.0, %v1888
    %v1890 = vpop.f32.mrf.mxu0
    %1891 = vdwg.mxu0
    %1893 = vrot.lane.b32.xlu0 %v1889, 16
    %v1894 = vpop.permute.xlu0 %1893
    %v1896 = vsel %vm407, %v1724, %v1894
    %1898 = vrot.lane.b32.xlu0 %v1560, 96
    %v1899 = vpop.permute.xlu0 %1898
    %v1900 = vsel %vm407, %v1560, 0
    %v1902 = vsel %vm407, %v1899, 0
    %1904 = vmatprep.subr.mxu0 0.0
    %1905 = vmatpush1.xpose.msra.mxu0 0.0
    %1906 = vmatprep.subr.mxu0 0.0
    %1907 = vmatpush1.xpose.msra.mxu0 0.0
    %1908 = vmatprep.subr.mxu0 0.0
    %1909 = vmatpush1.xpose.msra.mxu0 0.0
    %1910 = vmatprep.subr.mxu0 0.0
    %1911 = vmatpush1.xpose.msra.mxu0 0.0
    %1912 = vmatprep.subr.mxu0 0.0
    %1913 = vmatpush1.xpose.msra.mxu0 0.0
    %1914 = vmatprep.subr.mxu0 0.0
    %1915 = vmatpush1.xpose.msra.mxu0 0.0
    %1916 = vmatprep.subr.mxu0 0.0
    %1917 = vmatpush1.xpose.msra.mxu0 0.0
    %1918 = vmatprep.subr.mxu0 0.0
    %1919 = vmatpush1.xpose.msra.mxu0 0.0
    %1920 = vmatprep.subr.mxu0 0.0
    %1921 = vmatpush1.xpose.msra.mxu0 0.0
    %1922 = vmatprep.subr.mxu0 0.0
    %1923 = vmatpush1.xpose.msra.mxu0 0.0
    %1924 = vmatprep.subr.mxu0 0.0
    %1925 = vmatpush1.xpose.msra.mxu0 0.0
    %1926 = vmatprep.subr.mxu0 0.0
    %1927 = vmatpush1.xpose.msra.mxu0 0.0
    %1928 = vmatprep.subr.mxu0 0.0
    %1929 = vmatpush1.xpose.msra.mxu0 0.0
    %1930 = vmatprep.subr.mxu0 0.0
    %1931 = vmatpush1.xpose.msra.mxu0 0.0
    %1932 = vmatprep.subr.mxu0 0.0
    %1933 = vmatpush1.xpose.msra.mxu0 0.0
    %1934 = vmatprep.subr.mxu0 0.0
    %1935 = vmatpush1.xpose.msra.mxu0 %v1902
    %1936 = vmatprep.subr.mxu0 0.0
    %1937 = vmatpush2.xpose.msra.mxu0 0.0
    %1938 = vmatprep.subr.mxu0 0.0
    %1939 = vmatpush2.xpose.msra.mxu0 0.0
    %1940 = vmatprep.subr.mxu0 0.0
    %1941 = vmatpush2.xpose.msra.mxu0 0.0
    %1942 = vmatprep.subr.mxu0 0.0
    %1943 = vmatpush2.xpose.msra.mxu0 0.0
    %1944 = vmatprep.subr.mxu0 0.0
    %1945 = vmatpush2.xpose.msra.mxu0 0.0
    %1946 = vmatprep.subr.mxu0 0.0
    %1947 = vmatpush2.xpose.msra.mxu0 0.0
    %1948 = vmatprep.subr.mxu0 0.0
    %1949 = vmatpush2.xpose.msra.mxu0 0.0
    %1950 = vmatprep.subr.mxu0 0.0
    %1951 = vmatpush2.xpose.msra.mxu0 0.0
    %1952 = vmatprep.subr.mxu0 0.0
    %1953 = vmatpush2.xpose.msra.mxu0 0.0
    %1954 = vmatprep.subr.mxu0 0.0
    %1955 = vmatpush2.xpose.msra.mxu0 0.0
    %1956 = vmatprep.subr.mxu0 0.0
    %1957 = vmatpush2.xpose.msra.mxu0 0.0
    %1958 = vmatprep.subr.mxu0 0.0
    %1959 = vmatpush2.xpose.msra.mxu0 0.0
    %1960 = vmatprep.subr.mxu0 0.0
    %1961 = vmatpush2.xpose.msra.mxu0 0.0
    %1962 = vmatprep.subr.mxu0 0.0
    %1963 = vmatpush2.xpose.msra.mxu0 0.0
    %1964 = vmatprep.subr.mxu0 0.0
    %1965 = vmatpush2.xpose.msra.mxu0 0.0
    %1966 = vmatprep.subr.mxu0 0.0
    %1967 = vmatpush2.xpose.msra.mxu0 0.0
    %1968 = vmatprep.mubr.f32.mxu0 0.0
    %1969 = vmatmul.mubr.f32.gmra.mxu0 %v1900
    %v1970 = vpop.f32.mrf.mxu0
    %v1971 = vadd.f32 %v743, %v1970
    %v1972 = vpop.f32.mrf.mxu0
    %1973 = vdwg.mxu0
    %v1974 = vsel %vm482, %v1971, -inf
    %1975 = vmax.xlane.f32.xlu0 %v1974
    %v1976 = vpop.xlane.xlu0 %1975
    %v1977 = vsub.f32 %v1971, %v1976
    %v1978 = vmul.f32 %v1977, 1.442695
    %v1979 = vpow.pop %v1978
    %v1980 = vsel %vm482, %v1979, 0.0
    %1981 = vadd.xlane.f32.xlu0 %v1980
    %v1982 = vpop.xlane.xlu0 %1981
    %v1983 = vrcp.pop %v1982
    %v1984 = vmul.f32 %v1979, %v1983
    %1985 = vrot.lane.b32.xlu0 %v1560, 64
    %v1986 = vpop.permute.xlu0 %1985
    %v1989 = vsel %vm482, %v1984, 0
    %1991 = vmatprep.subr.mxu0 0.0
    %1992 = vmatpush1.msra.mxu0 0.0
    %1993 = vmatprep.subr.mxu0 0.0
    %1994 = vmatpush1.msra.mxu0 0.0
    %1995 = vmatprep.subr.mxu0 0.0
    %1996 = vmatpush1.msra.mxu0 0.0
    %1997 = vmatprep.subr.mxu0 0.0
    %1998 = vmatpush1.msra.mxu0 0.0
    %1999 = vmatprep.subr.mxu0 0.0
    %2000 = vmatpush1.msra.mxu0 0.0
    %2001 = vmatprep.subr.mxu0 0.0
    %2002 = vmatpush1.msra.mxu0 0.0
    %2003 = vmatprep.subr.mxu0 0.0
    %2004 = vmatpush1.msra.mxu0 0.0
    %2005 = vmatprep.subr.mxu0 0.0
    %2006 = vmatpush1.msra.mxu0 0.0
    %2007 = vmatprep.subr.mxu0 0.0
    %2008 = vmatpush1.msra.mxu0 0.0
    %2009 = vmatprep.subr.mxu0 0.0
    %2010 = vmatpush1.msra.mxu0 0.0
    %2011 = vmatprep.subr.mxu0 0.0
    %2012 = vmatpush1.msra.mxu0 0.0
    %2013 = vmatprep.subr.mxu0 0.0
    %2014 = vmatpush1.msra.mxu0 0.0
    %2015 = vmatprep.subr.mxu0 0.0
    %2016 = vmatpush1.msra.mxu0 0.0
    %2017 = vmatprep.subr.mxu0 0.0
    %2018 = vmatpush1.msra.mxu0 0.0
    %2019 = vmatprep.subr.mxu0 0.0
    %2020 = vmatpush1.msra.mxu0 0.0
    %2021 = vmatprep.subr.mxu0 0.0
    %2022 = vmatpush1.msra.mxu0 %v1986
    %2023 = vmatprep.subr.mxu0 0.0
    %2024 = vmatpush2.msra.mxu0 0.0
    %2025 = vmatprep.subr.mxu0 0.0
    %2026 = vmatpush2.msra.mxu0 0.0
    %2027 = vmatprep.subr.mxu0 0.0
    %2028 = vmatpush2.msra.mxu0 0.0
    %2029 = vmatprep.subr.mxu0 0.0
    %2030 = vmatpush2.msra.mxu0 0.0
    %2031 = vmatprep.subr.mxu0 0.0
    %2032 = vmatpush2.msra.mxu0 0.0
    %2033 = vmatprep.subr.mxu0 0.0
    %2034 = vmatpush2.msra.mxu0 0.0
    %2035 = vmatprep.subr.mxu0 0.0
    %2036 = vmatpush2.msra.mxu0 0.0
    %2037 = vmatprep.subr.mxu0 0.0
    %2038 = vmatpush2.msra.mxu0 0.0
    %2039 = vmatprep.subr.mxu0 0.0
    %2040 = vmatpush2.msra.mxu0 0.0
    %2041 = vmatprep.subr.mxu0 0.0
    %2042 = vmatpush2.msra.mxu0 0.0
    %2043 = vmatprep.subr.mxu0 0.0
    %2044 = vmatpush2.msra.mxu0 0.0
    %2045 = vmatprep.subr.mxu0 0.0
    %2046 = vmatpush2.msra.mxu0 0.0
    %2047 = vmatprep.subr.mxu0 0.0
    %2048 = vmatpush2.msra.mxu0 0.0
    %2049 = vmatprep.subr.mxu0 0.0
    %2050 = vmatpush2.msra.mxu0 0.0
    %2051 = vmatprep.subr.mxu0 0.0
    %2052 = vmatpush2.msra.mxu0 0.0
    %2053 = vmatprep.subr.mxu0 0.0
    %2054 = vmatpush2.msra.mxu0 0.0
    %2055 = vmatprep.mubr.f32.mxu0 0.0
    %2056 = vmatmul.mubr.f32.gmra.mxu0 %v1989
    %v2057 = vpop.f32.mrf.mxu0
    %v2058 = vadd.f32 0.0, %v2057
    %v2059 = vpop.f32.mrf.mxu0
    %2060 = vdwg.mxu0
    %2061 = vrot.lane.b32.xlu0 %v1560, 112
    %v2062 = vpop.permute.xlu0 %2061
    %2063 = vrot.lane.b32.xlu0 %v1560, 80
    %v2064 = vpop.permute.xlu0 %2063
    %v2065 = vsel %vm407, %v2062, 0
    %v2067 = vsel %vm407, %v2064, 0
    %2069 = vmatprep.subr.mxu0 0.0
    %2070 = vmatpush1.xpose.msra.mxu0 0.0
    %2071 = vmatprep.subr.mxu0 0.0
    %2072 = vmatpush1.xpose.msra.mxu0 0.0
    %2073 = vmatprep.subr.mxu0 0.0
    %2074 = vmatpush1.xpose.msra.mxu0 0.0
    %2075 = vmatprep.subr.mxu0 0.0
    %2076 = vmatpush1.xpose.msra.mxu0 0.0
    %2077 = vmatprep.subr.mxu0 0.0
    %2078 = vmatpush1.xpose.msra.mxu0 0.0
    %2079 = vmatprep.subr.mxu0 0.0
    %2080 = vmatpush1.xpose.msra.mxu0 0.0
    %2081 = vmatprep.subr.mxu0 0.0
    %2082 = vmatpush1.xpose.msra.mxu0 0.0
    %2083 = vmatprep.subr.mxu0 0.0
    %2084 = vmatpush1.xpose.msra.mxu0 0.0
    %2085 = vmatprep.subr.mxu0 0.0
    %2086 = vmatpush1.xpose.msra.mxu0 0.0
    %2087 = vmatprep.subr.mxu0 0.0
    %2088 = vmatpush1.xpose.msra.mxu0 0.0
    %2089 = vmatprep.subr.mxu0 0.0
    %2090 = vmatpush1.xpose.msra.mxu0 0.0
    %2091 = vmatprep.subr.mxu0 0.0
    %2092 = vmatpush1.xpose.msra.mxu0 0.0
    %2093 = vmatprep.subr.mxu0 0.0
    %2094 = vmatpush1.xpose.msra.mxu0 0.0
    %2095 = vmatprep.subr.mxu0 0.0
    %2096 = vmatpush1.xpose.msra.mxu0 0.0
    %2097 = vmatprep.subr.mxu0 0.0
    %2098 = vmatpush1.xpose.msra.mxu0 0.0
    %2099 = vmatprep.subr.mxu0 0.0
    %2100 = vmatpush1.xpose.msra.mxu0 %v2067
    %2101 = vmatprep.subr.mxu0 0.0
    %2102 = vmatpush2.xpose.msra.mxu0 0.0
    %2103 = vmatprep.subr.mxu0 0.0
    %2104 = vmatpush2.xpose.msra.mxu0 0.0
    %2105 = vmatprep.subr.mxu0 0.0
    %2106 = vmatpush2.xpose.msra.mxu0 0.0
    %2107 = vmatprep.subr.mxu0 0.0
    %2108 = vmatpush2.xpose.msra.mxu0 0.0
    %2109 = vmatprep.subr.mxu0 0.0
    %2110 = vmatpush2.xpose.msra.mxu0 0.0
    %2111 = vmatprep.subr.mxu0 0.0
    %2112 = vmatpush2.xpose.msra.mxu0 0.0
    %2113 = vmatprep.subr.mxu0 0.0
    %2114 = vmatpush2.xpose.msra.mxu0 0.0
    %2115 = vmatprep.subr.mxu0 0.0
    %2116 = vmatpush2.xpose.msra.mxu0 0.0
    %2117 = vmatprep.subr.mxu0 0.0
    %2118 = vmatpush2.xpose.msra.mxu0 0.0
    %2119 = vmatprep.subr.mxu0 0.0
    %2120 = vmatpush2.xpose.msra.mxu0 0.0
    %2121 = vmatprep.subr.mxu0 0.0
    %2122 = vmatpush2.xpose.msra.mxu0 0.0
    %2123 = vmatprep.subr.mxu0 0.0
    %2124 = vmatpush2.xpose.msra.mxu0 0.0
    %2125 = vmatprep.subr.mxu0 0.0
    %2126 = vmatpush2.xpose.msra.mxu0 0.0
    %2127 = vmatprep.subr.mxu0 0.0
    %2128 = vmatpush2.xpose.msra.mxu0 0.0
    %2129 = vmatprep.subr.mxu0 0.0
    %2130 = vmatpush2.xpose.msra.mxu0 0.0
    %2131 = vmatprep.subr.mxu0 0.0
    %2132 = vmatpush2.xpose.msra.mxu0 0.0
    %2133 = vmatprep.mubr.f32.mxu0 0.0
    %2134 = vmatmul.mubr.f32.gmra.mxu0 %v2065
    %v2135 = vpop.f32.mrf.mxu0
    %v2136 = vadd.f32 %v743, %v2135
    %v2137 = vpop.f32.mrf.mxu0
    %2138 = vdwg.mxu0
    %v2139 = vsel %vm482, %v2136, -inf
    %2140 = vmax.xlane.f32.xlu0 %v2139
    %v2141 = vpop.xlane.xlu0 %2140
    %v2142 = vsub.f32 %v2136, %v2141
    %v2143 = vmul.f32 %v2142, 1.442695
    %v2144 = vpow.pop %v2143
    %v2145 = vsel %vm482, %v2144, 0.0
    %2146 = vadd.xlane.f32.xlu0 %v2145
    %v2147 = vpop.xlane.xlu0 %2146
    %v2148 = vrcp.pop %v2147
    %v2149 = vmul.f32 %v2144, %v2148
    %2150 = vrot.lane.b32.xlu0 %v1560, 48
    %v2151 = vpop.permute.xlu0 %2150
    %v2154 = vsel %vm482, %v2149, 0
    %2156 = vmatprep.subr.mxu0 0.0
    %2157 = vmatpush1.msra.mxu0 0.0
    %2158 = vmatprep.subr.mxu0 0.0
    %2159 = vmatpush1.msra.mxu0 0.0
    %2160 = vmatprep.subr.mxu0 0.0
    %2161 = vmatpush1.msra.mxu0 0.0
    %2162 = vmatprep.subr.mxu0 0.0
    %2163 = vmatpush1.msra.mxu0 0.0
    %2164 = vmatprep.subr.mxu0 0.0
    %2165 = vmatpush1.msra.mxu0 0.0
    %2166 = vmatprep.subr.mxu0 0.0
    %2167 = vmatpush1.msra.mxu0 0.0
    %2168 = vmatprep.subr.mxu0 0.0
    %2169 = vmatpush1.msra.mxu0 0.0
    %2170 = vmatprep.subr.mxu0 0.0
    %2171 = vmatpush1.msra.mxu0 0.0
    %2172 = vmatprep.subr.mxu0 0.0
    %2173 = vmatpush1.msra.mxu0 0.0
    %2174 = vmatprep.subr.mxu0 0.0
    %2175 = vmatpush1.msra.mxu0 0.0
    %2176 = vmatprep.subr.mxu0 0.0
    %2177 = vmatpush1.msra.mxu0 0.0
    %2178 = vmatprep.subr.mxu0 0.0
    %2179 = vmatpush1.msra.mxu0 0.0
    %2180 = vmatprep.subr.mxu0 0.0
    %2181 = vmatpush1.msra.mxu0 0.0
    %2182 = vmatprep.subr.mxu0 0.0
    %2183 = vmatpush1.msra.mxu0 0.0
    %2184 = vmatprep.subr.mxu0 0.0
    %2185 = vmatpush1.msra.mxu0 0.0
    %2186 = vmatprep.subr.mxu0 0.0
    %2187 = vmatpush1.msra.mxu0 %v2151
    %2188 = vmatprep.subr.mxu0 0.0
    %2189 = vmatpush2.msra.mxu0 0.0
    %2190 = vmatprep.subr.mxu0 0.0
    %2191 = vmatpush2.msra.mxu0 0.0
    %2192 = vmatprep.subr.mxu0 0.0
    %2193 = vmatpush2.msra.mxu0 0.0
    %2194 = vmatprep.subr.mxu0 0.0
    %2195 = vmatpush2.msra.mxu0 0.0
    %2196 = vmatprep.subr.mxu0 0.0
    %2197 = vmatpush2.msra.mxu0 0.0
    %2198 = vmatprep.subr.mxu0 0.0
    %2199 = vmatpush2.msra.mxu0 0.0
    %2200 = vmatprep.subr.mxu0 0.0
    %2201 = vmatpush2.msra.mxu0 0.0
    %2202 = vmatprep.subr.mxu0 0.0
    %2203 = vmatpush2.msra.mxu0 0.0
    %2204 = vmatprep.subr.mxu0 0.0
    %2205 = vmatpush2.msra.mxu0 0.0
    %2206 = vmatprep.subr.mxu0 0.0
    %2207 = vmatpush2.msra.mxu0 0.0
    %2208 = vmatprep.subr.mxu0 0.0
    %2209 = vmatpush2.msra.mxu0 0.0
    %2210 = vmatprep.subr.mxu0 0.0
    %2211 = vmatpush2.msra.mxu0 0.0
    %2212 = vmatprep.subr.mxu0 0.0
    %2213 = vmatpush2.msra.mxu0 0.0
    %2214 = vmatprep.subr.mxu0 0.0
    %2215 = vmatpush2.msra.mxu0 0.0
    %2216 = vmatprep.subr.mxu0 0.0
    %2217 = vmatpush2.msra.mxu0 0.0
    %2218 = vmatprep.subr.mxu0 0.0
    %2219 = vmatpush2.msra.mxu0 0.0
    %2220 = vmatprep.mubr.f32.mxu0 0.0
    %2221 = vmatmul.mubr.f32.gmra.mxu0 %v2154
    %v2222 = vpop.f32.mrf.mxu0
    %v2223 = vadd.f32 0.0, %v2222
    %v2224 = vpop.f32.mrf.mxu0
    %2225 = vdwg.mxu0
    %2227 = vrot.lane.b32.xlu0 %v2223, 16
    %v2228 = vpop.permute.xlu0 %2227
    %v2230 = vsel %vm407, %v2058, %v2228
    %s2231 = scalar_lea.vmem %s6, 32
    %v2232 = vld [vmem:[%s2231] sm:$0xff]
    %v2233 = vld [vmem:[%s2231 + $0x8] sm:$0xff]
    %v2234 = vld [vmem:[%s2231 + $0x10] sm:$0xff]
    %v2235 = vld [vmem:[%s2231 + $0x18] sm:$0xff]
    %s2236 = scalar_lea.vmem [#allocation11], 1
    %v2237 = vld [vmem:[%s2236] sm:$0x1]
    %v2239 = vlaneseq
    %v2240 = vshrl.u32 %v2239, 7
    %v2241 = vsub.s32 0, %v2240
    %v2242 = vrot.slane %v2237, %v2241
    %v2245 = vsel %vm263, %v1896, 0
    %v2248 = vsel %vm263, %v2230, 0
    %2250 = vmatprep.subr.mxu0 0.0
    %2251 = vmatpush1.msra.mxu0 0.0
    %2252 = vmatprep.subr.mxu0 0.0
    %2253 = vmatpush1.msra.mxu0 0.0
    %2254 = vmatprep.subr.mxu0 0.0
    %2255 = vmatpush1.msra.mxu0 0.0
    %2256 = vmatprep.subr.mxu0 0.0
    %2257 = vmatpush1.msra.mxu0 0.0
    %2258 = vmatprep.subr.mxu0 0.0
    %2259 = vmatpush1.msra.mxu0 0.0
    %2260 = vmatprep.subr.mxu0 0.0
    %2261 = vmatpush1.msra.mxu0 0.0
    %2262 = vmatprep.subr.mxu0 0.0
    %2263 = vmatpush1.msra.mxu0 0.0
    %2264 = vmatprep.subr.mxu0 0.0
    %2265 = vmatpush1.msra.mxu0 0.0
    %2266 = vmatprep.subr.mxu0 0.0
    %2267 = vmatpush1.msra.mxu0 0.0
    %2268 = vmatprep.subr.mxu0 0.0
    %2269 = vmatpush1.msra.mxu0 0.0
    %2270 = vmatprep.subr.mxu0 0.0
    %2271 = vmatpush1.msra.mxu0 0.0
    %2272 = vmatprep.subr.mxu0 0.0
    %2273 = vmatpush1.msra.mxu0 0.0
    %2274 = vmatprep.subr.mxu0 0.0
    %2275 = vmatpush1.msra.mxu0 %v2235
    %2276 = vmatprep.subr.mxu0 0.0
    %2277 = vmatpush1.msra.mxu0 %v2234
    %2278 = vmatprep.subr.mxu0 0.0
    %2279 = vmatpush1.msra.mxu0 %v2233
    %2280 = vmatprep.subr.mxu0 0.0
    %2281 = vmatpush1.msra.mxu0 %v2232
    %2282 = vmatprep.subr.mxu0 0.0
    %2283 = vmatpush2.msra.mxu0 0.0
    %2284 = vmatprep.subr.mxu0 0.0
    %2285 = vmatpush2.msra.mxu0 0.0
    %2286 = vmatprep.subr.mxu0 0.0
    %2287 = vmatpush2.msra.mxu0 0.0
    %2288 = vmatprep.subr.mxu0 0.0
    %2289 = vmatpush2.msra.mxu0 0.0
    %2290 = vmatprep.subr.mxu0 0.0
    %2291 = vmatpush2.msra.mxu0 0.0
    %2292 = vmatprep.subr.mxu0 0.0
    %2293 = vmatpush2.msra.mxu0 0.0
    %2294 = vmatprep.subr.mxu0 0.0
    %2295 = vmatpush2.msra.mxu0 0.0
    %2296 = vmatprep.subr.mxu0 0.0
    %2297 = vmatpush2.msra.mxu0 0.0
    %2298 = vmatprep.subr.mxu0 0.0
    %2299 = vmatpush2.msra.mxu0 0.0
    %2300 = vmatprep.subr.mxu0 0.0
    %2301 = vmatpush2.msra.mxu0 0.0
    %2302 = vmatprep.subr.mxu0 0.0
    %2303 = vmatpush2.msra.mxu0 0.0
    %2304 = vmatprep.subr.mxu0 0.0
    %2305 = vmatpush2.msra.mxu0 0.0
    %2306 = vmatprep.subr.mxu0 0.0
    %2307 = vmatpush2.msra.mxu0 0.0
    %2308 = vmatprep.subr.mxu0 0.0
    %2309 = vmatpush2.msra.mxu0 0.0
    %2310 = vmatprep.subr.mxu0 0.0
    %2311 = vmatpush2.msra.mxu0 0.0
    %2312 = vmatprep.subr.mxu0 0.0
    %2313 = vmatpush2.msra.mxu0 0.0
    %2314 = vmatprep.mubr.f32.mxu0 0.0
    %2315 = vmatmul.mubr.f32.gmra.mxu0 %v2245
    %v2316 = vpop.f32.mrf.mxu0
    %v2317 = vadd.f32 %v2242, %v2316
    %v2318 = vpop.f32.mrf.mxu0
    %2319 = vmatprep.mubr.f32.mxu0 0.0
    %2320 = vmatmul.mubr.f32.gmra.mxu0 %v2248
    %v2321 = vpop.f32.mrf.mxu0
    %v2322 = vadd.f32 %v2242, %v2321
    %v2323 = vpop.f32.mrf.mxu0
    %2324 = vdwg.mxu0
    %v2325 = vadd.f32 %v2317, %v1467
    %v2326 = vadd.f32 %v2322, %v1468
    %s2327 = scalar_lea.vmem [#allocation13], 1
    %v2328 = vld [vmem:[%s2327] sm:$0x1]
    %s2329 = scalar_lea.vmem [#allocation14], 1
    %v2330 = vld [vmem:[%s2329] sm:$0x1]
    %v2331 = vsel %vm263, %v2325, 0.0
    %2332 = vadd.xlane.f32.xlu0 %v2331
    %v2333 = vpop.xlane.xlu0 %2332
    %v2334 = vsel %vm263, %v2326, 0.0
    %2335 = vadd.xlane.f32.xlu0 %v2334
    %v2336 = vpop.xlane.xlu0 %2335
    %v2337 = vmul.f32 %v2333, %v270
    %v2338 = vmul.f32 %v2336, %v270
    %v2339 = vsub.f32 %v2325, %v2337
    %v2340 = vsub.f32 %v2326, %v2338
    %v2341 = vmul.f32 %v2339, %v2339
    %v2342 = vmul.f32 %v2340, %v2340
    %v2343 = vsel %vm263, %v2341, 0.0
    %2344 = vadd.xlane.f32.xlu0 %v2343
    %v2345 = vpop.xlane.xlu0 %2344
    %v2346 = vsel %vm263, %v2342, 0.0
    %2347 = vadd.xlane.f32.xlu0 %v2346
    %v2348 = vpop.xlane.xlu0 %2347
    %v2349 = vmul.f32 %v2345, %v270
    %v2350 = vmul.f32 %v2348, %v270
    %v2351 = vadd.f32 %v2349, 1e-12
    %v2352 = vadd.f32 %v2350, 1e-12
    %v2353 = vrsqrt.pop %v2351
    %v2354 = vrsqrt.pop %v2352
    %v2355 = vmul.f32 %v2339, %v2353
    %v2356 = vmul.f32 %v2340, %v2354
    %v2358 = vlaneseq
    %v2359 = vshrl.u32 %v2358, 7
    %v2360 = vsub.s32 0, %v2359
    %v2361 = vrot.slane %v2328, %v2360
    %v2363 = vmul.f32 %v2355, %v2361
    %v2364 = vmul.f32 %v2356, %v2361
    %v2366 = vlaneseq
    %v2367 = vshrl.u32 %v2366, 7
    %v2368 = vsub.s32 0, %v2367
    %v2369 = vrot.slane %v2330, %v2368
    %v2371 = vadd.f32 %v2363, %v2369
    %v2372 = vadd.f32 %v2364, %v2369
    %s2373 = scalar_lea.vmem %s10, 32
    %v2374 = vld [vmem:[%s2373] sm:$0xff]
    %v2375 = vld [vmem:[%s2373 + $0x8] sm:$0xff]
    %v2376 = vld [vmem:[%s2373 + $0x10] sm:$0xff]
    %v2377 = vld [vmem:[%s2373 + $0x18] sm:$0xff]
    %s2378 = scalar_lea.vmem [#allocation16], 1
    %v2379 = vld [vmem:[%s2378] sm:$0x1]
    %v2381 = vlaneseq
    %v2382 = vshrl.u32 %v2381, 7
    %v2383 = vsub.s32 0, %v2382
    %v2384 = vrot.slane %v2379, %v2383
    %v2387 = vsel %vm263, %v2371, 0
    %v2390 = vsel %vm263, %v2372, 0
    %2392 = vmatprep.subr.mxu0 0.0
    %2393 = vmatpush1.msra.mxu0 0.0
    %2394 = vmatprep.subr.mxu0 0.0
    %2395 = vmatpush1.msra.mxu0 0.0
    %2396 = vmatprep.subr.mxu0 0.0
    %2397 = vmatpush1.msra.mxu0 0.0
    %2398 = vmatprep.subr.mxu0 0.0
    %2399 = vmatpush1.msra.mxu0 0.0
    %2400 = vmatprep.subr.mxu0 0.0
    %2401 = vmatpush1.msra.mxu0 0.0
    %2402 = vmatprep.subr.mxu0 0.0
    %2403 = vmatpush1.msra.mxu0 0.0
    %2404 = vmatprep.subr.mxu0 0.0
    %2405 = vmatpush1.msra.mxu0 0.0
    %2406 = vmatprep.subr.mxu0 0.0
    %2407 = vmatpush1.msra.mxu0 0.0
    %2408 = vmatprep.subr.mxu0 0.0
    %2409 = vmatpush1.msra.mxu0 0.0
    %2410 = vmatprep.subr.mxu0 0.0
    %2411 = vmatpush1.msra.mxu0 0.0
    %2412 = vmatprep.subr.mxu0 0.0
    %2413 = vmatpush1.msra.mxu0 0.0
    %2414 = vmatprep.subr.mxu0 0.0
    %2415 = vmatpush1.msra.mxu0 0.0
    %2416 = vmatprep.subr.mxu0 0.0
    %2417 = vmatpush1.msra.mxu0 %v2377
    %2418 = vmatprep.subr.mxu0 0.0
    %2419 = vmatpush1.msra.mxu0 %v2376
    %2420 = vmatprep.subr.mxu0 0.0
    %2421 = vmatpush1.msra.mxu0 %v2375
    %2422 = vmatprep.subr.mxu0 0.0
    %2423 = vmatpush1.msra.mxu0 %v2374
    %2424 = vmatprep.subr.mxu0 0.0
    %2425 = vmatpush2.msra.mxu0 0.0
    %2426 = vmatprep.subr.mxu0 0.0
    %2427 = vmatpush2.msra.mxu0 0.0
    %2428 = vmatprep.subr.mxu0 0.0
    %2429 = vmatpush2.msra.mxu0 0.0
    %2430 = vmatprep.subr.mxu0 0.0
    %2431 = vmatpush2.msra.mxu0 0.0
    %2432 = vmatprep.subr.mxu0 0.0
    %2433 = vmatpush2.msra.mxu0 0.0
    %2434 = vmatprep.subr.mxu0 0.0
    %2435 = vmatpush2.msra.mxu0 0.0
    %2436 = vmatprep.subr.mxu0 0.0
    %2437 = vmatpush2.msra.mxu0 0.0
    %2438 = vmatprep.subr.mxu0 0.0
    %2439 = vmatpush2.msra.mxu0 0.0
    %2440 = vmatprep.subr.mxu0 0.0
    %2441 = vmatpush2.msra.mxu0 0.0
    %2442 = vmatprep.subr.mxu0 0.0
    %2443 = vmatpush2.msra.mxu0 0.0
    %2444 = vmatprep.subr.mxu0 0.0
    %2445 = vmatpush2.msra.mxu0 0.0
    %2446 = vmatprep.subr.mxu0 0.0
    %2447 = vmatpush2.msra.mxu0 0.0
    %2448 = vmatprep.subr.mxu0 0.0
    %2449 = vmatpush2.msra.mxu0 0.0
    %2450 = vmatprep.subr.mxu0 0.0
    %2451 = vmatpush2.msra.mxu0 0.0
    %2452 = vmatprep.subr.mxu0 0.0
    %2453 = vmatpush2.msra.mxu0 0.0
    %2454 = vmatprep.subr.mxu0 0.0
    %2455 = vmatpush2.msra.mxu0 0.0
    %2456 = vmatprep.mubr.f32.mxu0 0.0
    %2457 = vmatmul.mubr.f32.gmra.mxu0 %v2387
    %v2458 = vpop.f32.mrf.mxu0
    %v2459 = vadd.f32 %v2384, %v2458
    %v2460 = vpop.f32.mrf.mxu0
    %2461 = vmatprep.mubr.f32.mxu0 0.0
    %2462 = vmatmul.mubr.f32.gmra.mxu0 %v2390
    %v2463 = vpop.f32.mrf.mxu0
    %v2464 = vadd.f32 %v2384, %v2463
    %v2465 = vpop.f32.mrf.mxu0
    %2466 = vdwg.mxu0
    %v2467 = vmul.f32 %v2459, 0.5
    %v2468 = vmul.f32 %v2464, 0.5
    %v2469 = vmul.f32 %v2459, 0.044715
    %v2470 = vmul.f32 %v2464, 0.044715
    %v2471 = vmul.f32 %v2469, %v2459
    %v2472 = vmul.f32 %v2470, %v2464
    %v2473 = vmul.f32 %v2471, %v2459
    %v2474 = vmul.f32 %v2472, %v2464
    %v2475 = vadd.f32 %v2459, %v2473
    %v2476 = vadd.f32 %v2464, %v2474
    %v2477 = vmul.f32 %v2475, 0.7978846
    %v2478 = vmul.f32 %v2476, 0.7978846
    %v2479 = vtanh.pop %v2477
    %v2480 = vtanh.pop %v2478
    %v2481 = vadd.f32 %v2479, 1.0
    %v2482 = vadd.f32 %v2480, 1.0
    %v2483 = vmul.f32 %v2467, %v2481
    %v2484 = vmul.f32 %v2468, %v2482
    %s2485 = scalar_lea.vmem %s12, 64
    %v2486 = vld [vmem:[%s2485] sm:$0xff]
    %v2487 = vld [vmem:[%s2485 + $0x8] sm:$0xff]
    %v2488 = vld [vmem:[%s2485 + $0x10] sm:$0xff]
    %v2489 = vld [vmem:[%s2485 + $0x18] sm:$0xff]
    %v2490 = vld [vmem:[%s2485 + $0x20] sm:$0xff]
    %v2491 = vld [vmem:[%s2485 + $0x28] sm:$0xff]
    %v2492 = vld [vmem:[%s2485 + $0x30] sm:$0xff]
    %v2493 = vld [vmem:[%s2485 + $0x38] sm:$0xff]
    %s2494 = scalar_lea.vmem [#allocation17], 1
    %v2495 = vld [vmem:[%s2494] sm:$0x1]
    %v2497 = vlaneseq
    %v2498 = vshrl.u32 %v2497, 7
    %v2499 = vsub.s32 0, %v2498
    %v2500 = vrot.slane %v2495, %v2499
    %v2503 = vsel %vm1341, %v2483, 0
    %v2506 = vsel %vm1341, %v2484, 0
    %2508 = vmatprep.subr.mxu0 0.0
    %2509 = vmatpush1.msra.mxu0 0.0
    %2510 = vmatprep.subr.mxu0 0.0
    %2511 = vmatpush1.msra.mxu0 0.0
    %2512 = vmatprep.subr.mxu0 0.0
    %2513 = vmatpush1.msra.mxu0 0.0
    %2514 = vmatprep.subr.mxu0 0.0
    %2515 = vmatpush1.msra.mxu0 0.0
    %2516 = vmatprep.subr.mxu0 0.0
    %2517 = vmatpush1.msra.mxu0 0.0
    %2518 = vmatprep.subr.mxu0 0.0
    %2519 = vmatpush1.msra.mxu0 0.0
    %2520 = vmatprep.subr.mxu0 0.0
    %2521 = vmatpush1.msra.mxu0 0.0
    %2522 = vmatprep.subr.mxu0 0.0
    %2523 = vmatpush1.msra.mxu0 0.0
    %2524 = vmatprep.subr.mxu0 0.0
    %2525 = vmatpush1.msra.mxu0 %v2493
    %2526 = vmatprep.subr.mxu0 0.0
    %2527 = vmatpush1.msra.mxu0 %v2492
    %2528 = vmatprep.subr.mxu0 0.0
    %2529 = vmatpush1.msra.mxu0 %v2491
    %2530 = vmatprep.subr.mxu0 0.0
    %2531 = vmatpush1.msra.mxu0 %v2490
    %2532 = vmatprep.subr.mxu0 0.0
    %2533 = vmatpush1.msra.mxu0 %v2489
    %2534 = vmatprep.subr.mxu0 0.0
    %2535 = vmatpush1.msra.mxu0 %v2488
    %2536 = vmatprep.subr.mxu0 0.0
    %2537 = vmatpush1.msra.mxu0 %v2487
    %2538 = vmatprep.subr.mxu0 0.0
    %2539 = vmatpush1.msra.mxu0 %v2486
    %2540 = vmatprep.subr.mxu0 0.0
    %2541 = vmatpush2.msra.mxu0 0.0
    %2542 = vmatprep.subr.mxu0 0.0
    %2543 = vmatpush2.msra.mxu0 0.0
    %2544 = vmatprep.subr.mxu0 0.0
    %2545 = vmatpush2.msra.mxu0 0.0
    %2546 = vmatprep.subr.mxu0 0.0
    %2547 = vmatpush2.msra.mxu0 0.0
    %2548 = vmatprep.subr.mxu0 0.0
    %2549 = vmatpush2.msra.mxu0 0.0
    %2550 = vmatprep.subr.mxu0 0.0
    %2551 = vmatpush2.msra.mxu0 0.0
    %2552 = vmatprep.subr.mxu0 0.0
    %2553 = vmatpush2.msra.mxu0 0.0
    %2554 = vmatprep.subr.mxu0 0.0
    %2555 = vmatpush2.msra.mxu0 0.0
    %2556 = vmatprep.subr.mxu0 0.0
    %2557 = vmatpush2.msra.mxu0 0.0
    %2558 = vmatprep.subr.mxu0 0.0
    %2559 = vmatpush2.msra.mxu0 0.0
    %2560 = vmatprep.subr.mxu0 0.0
    %2561 = vmatpush2.msra.mxu0 0.0
    %2562 = vmatprep.subr.mxu0 0.0
    %2563 = vmatpush2.msra.mxu0 0.0
    %2564 = vmatprep.subr.mxu0 0.0
    %2565 = vmatpush2.msra.mxu0 0.0
    %2566 = vmatprep.subr.mxu0 0.0
    %2567 = vmatpush2.msra.mxu0 0.0
    %2568 = vmatprep.subr.mxu0 0.0
    %2569 = vmatpush2.msra.mxu0 0.0
    %2570 = vmatprep.subr.mxu0 0.0
    %2571 = vmatpush2.msra.mxu0 0.0
    %2572 = vmatprep.mubr.f32.mxu0 0.0
    %2573 = vmatmul.mubr.f32.gmra.mxu0 %v2503
    %v2574 = vpop.f32.mrf.mxu0
    %v2575 = vadd.f32 %v2500, %v2574
    %v2576 = vpop.f32.mrf.mxu0
    %2577 = vmatprep.mubr.f32.mxu0 0.0
    %2578 = vmatmul.mubr.f32.gmra.mxu0 %v2506
    %v2579 = vpop.f32.mrf.mxu0
    %v2580 = vadd.f32 %v2500, %v2579
    %v2581 = vpop.f32.mrf.mxu0
    %2582 = vdwg.mxu0
    %v2583 = vadd.f32 %v2575, %v2371
    %v2584 = vadd.f32 %v2580, %v2372
    %s2585 = scalar_lea.vmem [#allocation19], 1
    %v2586 = vld [vmem:[%s2585] sm:$0x1]
    %s2587 = scalar_lea.vmem [#allocation20], 1
    %v2588 = vld [vmem:[%s2587] sm:$0x1]
    %v2589 = vsel %vm263, %v2583, 0.0
    %2590 = vadd.xlane.f32.xlu0 %v2589
    %v2591 = vpop.xlane.xlu0 %2590
    %v2592 = vsel %vm263, %v2584, 0.0
    %2593 = vadd.xlane.f32.xlu0 %v2592
    %v2594 = vpop.xlane.xlu0 %2593
    %v2595 = vmul.f32 %v2591, %v270
    %v2596 = vmul.f32 %v2594, %v270
    %v2597 = vsub.f32 %v2583, %v2595
    %v2598 = vsub.f32 %v2584, %v2596
    %v2599 = vmul.f32 %v2597, %v2597
    %v2600 = vmul.f32 %v2598, %v2598
    %v2601 = vsel %vm263, %v2599, 0.0
    %2602 = vadd.xlane.f32.xlu0 %v2601
    %v2603 = vpop.xlane.xlu0 %2602
    %v2604 = vsel %vm263, %v2600, 0.0
    %2605 = vadd.xlane.f32.xlu0 %v2604
    %v2606 = vpop.xlane.xlu0 %2605
    %v2607 = vmul.f32 %v2603, %v270
    %v2608 = vmul.f32 %v2606, %v270
    %v2609 = vadd.f32 %v2607, 1e-12
    %v2610 = vadd.f32 %v2608, 1e-12
    %v2611 = vrsqrt.pop %v2609
    %v2612 = vrsqrt.pop %v2610
    %v2613 = vmul.f32 %v2597, %v2611
    %v2614 = vmul.f32 %v2598, %v2612
    %v2616 = vlaneseq
    %v2617 = vshrl.u32 %v2616, 7
    %v2618 = vsub.s32 0, %v2617
    %v2619 = vrot.slane %v2586, %v2618
    %v2621 = vmul.f32 %v2613, %v2619
    %v2622 = vmul.f32 %v2614, %v2619
    %v2624 = vlaneseq
    %v2625 = vshrl.u32 %v2624, 7
    %v2626 = vsub.s32 0, %v2625
    %v2627 = vrot.slane %v2588, %v2626
    %v2629 = vadd.f32 %v2621, %v2627
    %v2630 = vadd.f32 %v2622, %v2627
    %v2632 = vrot.slane %v2630, 7
    %vm2634 = vcmask 1040384
    %v2635 = vsel %vm2634, %v2629, %v2632
    %v2636 = vld [vmem:[#allocation22] sm:$0xff]
    %v2637 = vld [vmem:[#allocation22 + $0x8] sm:$0xff]
    %v2638 = vld [vmem:[#allocation22 + $0x10] sm:$0xff]
    %v2639 = vld [vmem:[#allocation22 + $0x18] sm:$0xff]
    %v2640 = vld [vmem:[#allocation23] sm:$0x1]
    %v2642 = vlaneseq
    %v2643 = vshrl.u32 %v2642, 7
    %v2644 = vsub.s32 0, %v2643
    %v2645 = vrot.slane %v2640, %v2644
    %v2648 = vsel %vm263, %v2635, 0
    %2650 = vmatprep.subr.mxu0 0.0
    %2651 = vmatpush1.msra.mxu0 0.0
    %2652 = vmatprep.subr.mxu0 0.0
    %2653 = vmatpush1.msra.mxu0 0.0
    %2654 = vmatprep.subr.mxu0 0.0
    %2655 = vmatpush1.msra.mxu0 0.0
    %2656 = vmatprep.subr.mxu0 0.0
    %2657 = vmatpush1.msra.mxu0 0.0
    %2658 = vmatprep.subr.mxu0 0.0
    %2659 = vmatpush1.msra.mxu0 0.0
    %2660 = vmatprep.subr.mxu0 0.0
    %2661 = vmatpush1.msra.mxu0 0.0
    %2662 = vmatprep.subr.mxu0 0.0
    %2663 = vmatpush1.msra.mxu0 0.0
    %2664 = vmatprep.subr.mxu0 0.0
    %2665 = vmatpush1.msra.mxu0 0.0
    %2666 = vmatprep.subr.mxu0 0.0
    %2667 = vmatpush1.msra.mxu0 0.0
    %2668 = vmatprep.subr.mxu0 0.0
    %2669 = vmatpush1.msra.mxu0 0.0
    %2670 = vmatprep.subr.mxu0 0.0
    %2671 = vmatpush1.msra.mxu0 0.0
    %2672 = vmatprep.subr.mxu0 0.0
    %2673 = vmatpush1.msra.mxu0 0.0
    %2674 = vmatprep.subr.mxu0 0.0
    %2675 = vmatpush1.msra.mxu0 %v2639
    %2676 = vmatprep.subr.mxu0 0.0
    %2677 = vmatpush1.msra.mxu0 %v2638
    %2678 = vmatprep.subr.mxu0 0.0
    %2679 = vmatpush1.msra.mxu0 %v2637
    %2680 = vmatprep.subr.mxu0 0.0
    %2681 = vmatpush1.msra.mxu0 %v2636
    %2682 = vmatprep.subr.mxu0 0.0
    %2683 = vmatpush2.msra.mxu0 0.0
    %2684 = vmatprep.subr.mxu0 0.0
    %2685 = vmatpush2.msra.mxu0 0.0
    %2686 = vmatprep.subr.mxu0 0.0
    %2687 = vmatpush2.msra.mxu0 0.0
    %2688 = vmatprep.subr.mxu0 0.0
    %2689 = vmatpush2.msra.mxu0 0.0
    %2690 = vmatprep.subr.mxu0 0.0
    %2691 = vmatpush2.msra.mxu0 0.0
    %2692 = vmatprep.subr.mxu0 0.0
    %2693 = vmatpush2.msra.mxu0 0.0
    %2694 = vmatprep.subr.mxu0 0.0
    %2695 = vmatpush2.msra.mxu0 0.0
    %2696 = vmatprep.subr.mxu0 0.0
    %2697 = vmatpush2.msra.mxu0 0.0
    %2698 = vmatprep.subr.mxu0 0.0
    %2699 = vmatpush2.msra.mxu0 0.0
    %2700 = vmatprep.subr.mxu0 0.0
    %2701 = vmatpush2.msra.mxu0 0.0
    %2702 = vmatprep.subr.mxu0 0.0
    %2703 = vmatpush2.msra.mxu0 0.0
    %2704 = vmatprep.subr.mxu0 0.0
    %2705 = vmatpush2.msra.mxu0 0.0
    %2706 = vmatprep.subr.mxu0 0.0
    %2707 = vmatpush2.msra.mxu0 0.0
    %2708 = vmatprep.subr.mxu0 0.0
    %2709 = vmatpush2.msra.mxu0 0.0
    %2710 = vmatprep.subr.mxu0 0.0
    %2711 = vmatpush2.msra.mxu0 0.0
    %2712 = vmatprep.subr.mxu0 0.0
    %2713 = vmatpush2.msra.mxu0 0.0
    %2714 = vmatprep.mubr.f32.mxu0 0.0
    %2715 = vmatmul.mubr.f32.gmra.mxu0 %v2648
    %v2716 = vpop.f32.mrf.mxu0
    %v2717 = vadd.f32 %v2645, %v2716
    %v2718 = vpop.f32.mrf.mxu0
    %2719 = vdwg.mxu0
    %v2720 = vtanh.pop %v2717
    %v2721 = vld [vmem:[%s18] sm:$0xff]
    %v2722 = vld [vmem:[%s18 + $0x8] sm:$0xff]
    %v2723 = vld [vmem:[%s18 + $0x10] sm:$0xff]
    %v2724 = vld [vmem:[%s18 + $0x18] sm:$0xff]
    %v2725 = vld [vmem:[#allocation25] sm:$0x1]
    %v2727 = vlaneseq
    %v2728 = vshrl.u32 %v2727, 7
    %v2729 = vsub.s32 0, %v2728
    %v2730 = vrot.slane %v2725, %v2729
    %v2733 = vsel %vm263, %v2720, 0
    %2735 = vmatprep.subr.mxu0 0.0
    %2736 = vmatpush1.msra.mxu0 0.0
    %2737 = vmatprep.subr.mxu0 0.0
    %2738 = vmatpush1.msra.mxu0 0.0
    %2739 = vmatprep.subr.mxu0 0.0
    %2740 = vmatpush1.msra.mxu0 0.0
    %2741 = vmatprep.subr.mxu0 0.0
    %2742 = vmatpush1.msra.mxu0 0.0
    %2743 = vmatprep.subr.mxu0 0.0
    %2744 = vmatpush1.msra.mxu0 0.0
    %2745 = vmatprep.subr.mxu0 0.0
    %2746 = vmatpush1.msra.mxu0 0.0
    %2747 = vmatprep.subr.mxu0 0.0
    %2748 = vmatpush1.msra.mxu0 0.0
    %2749 = vmatprep.subr.mxu0 0.0
    %2750 = vmatpush1.msra.mxu0 0.0
    %2751 = vmatprep.subr.mxu0 0.0
    %2752 = vmatpush1.msra.mxu0 0.0
    %2753 = vmatprep.subr.mxu0 0.0
    %2754 = vmatpush1.msra.mxu0 0.0
    %2755 = vmatprep.subr.mxu0 0.0
    %2756 = vmatpush1.msra.mxu0 0.0
    %2757 = vmatprep.subr.mxu0 0.0
    %2758 = vmatpush1.msra.mxu0 0.0
    %2759 = vmatprep.subr.mxu0 0.0
    %2760 = vmatpush1.msra.mxu0 %v2724
    %2761 = vmatprep.subr.mxu0 0.0
    %2762 = vmatpush1.msra.mxu0 %v2723
    %2763 = vmatprep.subr.mxu0 0.0
    %2764 = vmatpush1.msra.mxu0 %v2722
    %2765 = vmatprep.subr.mxu0 0.0
    %2766 = vmatpush1.msra.mxu0 %v2721
    %2767 = vmatprep.subr.mxu0 0.0
    %2768 = vmatpush2.msra.mxu0 0.0
    %2769 = vmatprep.subr.mxu0 0.0
    %2770 = vmatpush2.msra.mxu0 0.0
    %2771 = vmatprep.subr.mxu0 0.0
    %2772 = vmatpush2.msra.mxu0 0.0
    %2773 = vmatprep.subr.mxu0 0.0
    %2774 = vmatpush2.msra.mxu0 0.0
    %2775 = vmatprep.subr.mxu0 0.0
    %2776 = vmatpush2.msra.mxu0 0.0
    %2777 = vmatprep.subr.mxu0 0.0
    %2778 = vmatpush2.msra.mxu0 0.0
    %2779 = vmatprep.subr.mxu0 0.0
    %2780 = vmatpush2.msra.mxu0 0.0
    %2781 = vmatprep.subr.mxu0 0.0
    %2782 = vmatpush2.msra.mxu0 0.0
    %2783 = vmatprep.subr.mxu0 0.0
    %2784 = vmatpush2.msra.mxu0 0.0
    %2785 = vmatprep.subr.mxu0 0.0
    %2786 = vmatpush2.msra.mxu0 0.0
    %2787 = vmatprep.subr.mxu0 0.0
    %2788 = vmatpush2.msra.mxu0 0.0
    %2789 = vmatprep.subr.mxu0 0.0
    %2790 = vmatpush2.msra.mxu0 0.0
    %2791 = vmatprep.subr.mxu0 0.0
    %2792 = vmatpush2.msra.mxu0 0.0
    %2793 = vmatprep.subr.mxu0 0.0
    %2794 = vmatpush2.msra.mxu0 0.0
    %2795 = vmatprep.subr.mxu0 0.0
    %2796 = vmatpush2.msra.mxu0 0.0
    %2797 = vmatprep.subr.mxu0 0.0
    %2798 = vmatpush2.msra.mxu0 0.0
    %2799 = vmatprep.mubr.f32.mxu0 0.0
    %2800 = vmatmul.mubr.f32.gmra.mxu0 %v2733
    %v2801 = vpop.f32.mrf.mxu0
    %v2802 = vadd.f32 %v2730, %v2801
    %v2803 = vpop.f32.mrf.mxu0
    %2804 = vdwg.mxu0
    %2805 = vst [vmem:[#allocation26] sm:$0x3] %v2802
    // Predicated region
    $region142: #{tpu_custom_call.1} parent=1 // pred_check
      _
    $region143: #{tpu_custom_call.1} parent=1 // pred_check_branch
      %2807 = sbr.rel (0) target = $region145
    $region144: #{tpu_custom_call.1} parent=1 // pred_region
      %s2809 = ssub.s32 32, 32
      %2810 = vsyncadd [#allocation4], %s2809
      %s2812 = sshll.u32 [#allocation26], 4
      %s2813 = int_to_ptr.vmem [resolvable:$true] %s2812
      %2815 = dma.vmem_to_hbm [thread:$0]  %s2813, 32, %s20, [#allocation4]
    $region145: #{tpu_custom_call.1} parent=1 // pred_fallthru
      _
    // Predicated region
    $region146: #{tpu_custom_call.1} parent=1 // pred_check
      _
    $region147: #{tpu_custom_call.1} parent=1 // pred_check_branch
      %2817 = sbr.rel (0) target = $region149
    $region148: #{tpu_custom_call.1} parent=1 // pred_region
      %2818 = dma.done [#allocation4], 32
    $region149: #{tpu_custom_call.1} parent=1 // pred_fallthru
      _
    %2819 = vsyncpa [#allocation3], 1
    %2820 = vsyncpa [#allocation6], 1
    %2821 = vsyncpa [#allocation9], 1
    %2822 = vsyncpa [#allocation12], 1
    %2823 = vsyncpa [#allocation15], 1
    %2824 = vsyncpa [#allocation18], 1
    %2825 = vsyncpa [#allocation21], 1
    %2826 = vsyncpa [#allocation24], 1
    %2827 = vsyncpa [#allocation4], 1

</llo_original>
